<compile_context>
chip_gen: v7x
topology: tpu7x:2x2x1
jax: 0.10.0
libtpu: 0.0.40
codegen_flags: <defaults>
</compile_context>

<pallas_src>
import math

import jax
import jax.numpy as jnp
from jax.experimental import pallas as pl
from jax.experimental.pallas import tpu as pltpu


def _semantic_kernel(x_ref, w_ref, b_ref, o_ref):
    """One node-tile grid step.

    x_ref: (tile_m, R*C*F)  packed node features (R nodes per row, per-class blocks)
    w_ref: (R*C*F, R*C)     R-way block-diagonal per-class weights (VMEM-resident)
    b_ref: (1, R*C)         per-class biases, tiled R times
    o_ref: (tile_m, R*C)    packed per-class node scores
    """
    acc = jnp.dot(
        x_ref[...],
        w_ref[...],
        preferred_element_type=jnp.float32,
        precision=jax.lax.Precision.HIGHEST,
    )
    o_ref[...] = (acc + b_ref[...]).astype(o_ref.dtype)


def _choose_tile_m(m, tile_m_max):
    """Pick the packed-row tile (second-minor block dim)."""
    if m <= 16:
        return m  # single full-extent block; nothing worth splitting
    # Keep at least 2 node blocks so a v7x megacore "parallel" split has work for
    # both TensorCores, and keep the tile 8-aligned ((8, 128) block rule).
    tile = min(tile_m_max, pl.cdiv(m, 2))
    return max(8, (tile // 8) * 8)


def class_linear_packed(x_packed, w_pack, b_pack, *, tile_m=256):
    """Packed ClassLinear: (M, R*C*F) @ block_diag_R(W) + b -> (M, R*C)."""
    m, k = x_packed.shape
    rc = w_pack.shape[-1]
    tile = _choose_tile_m(m, tile_m)
    # Ragged edge block is handled by Pallas edge masking: matmul rows are
    # independent, so garbage edge rows never contaminate valid outputs and
    # their stores are dropped.
    grid = (pl.cdiv(m, tile),)
    return pl.pallas_call(
        _semantic_kernel,
        out_shape=jax.ShapeDtypeStruct((m, rc), x_packed.dtype),
        grid=grid,
        in_specs=[
            pl.BlockSpec((tile, k), lambda i: (i, 0)),
            pl.BlockSpec((k, rc), lambda i: (0, 0)),  # same block every step -> resident
            pl.BlockSpec((1, rc), lambda i: (0, 0)),
        ],
        out_specs=pl.BlockSpec((tile, rc), lambda i: (i, 0)),
        compiler_params=pltpu.CompilerParams(
            dimension_semantics=("parallel",),
        ),
    )(x_packed, w_pack, b_pack)


class SemanticDecoder:
    """JAX/Pallas port of the nugraph2 SemanticDecoder (forward pass only)."""

    def __init__(self, node_features, planes, semantic_classes, key, *, pack_rows=8):
        self.planes = list(planes)
        self.classes = list(semantic_classes)
        C, F, R = len(self.classes), node_features, pack_rows
        self.C, self.F, self.R = C, F, R
        bound = 1.0 / math.sqrt(F)  # nn.Linear default init range
        eye_c = jnp.eye(C, dtype=jnp.float32)
        eye_r = jnp.eye(R, dtype=jnp.float32)
        self.params = {}
        self.w_pack = {}
        self.b_pack = {}
        for p in self.planes:
            key, kw, kb = jax.random.split(key, 3)
            w = jax.random.uniform(kw, (C, F), jnp.float32, -bound, bound)
            b = jax.random.uniform(kb, (C,), jnp.float32, -bound, bound)
            self.params[p] = (w, b)  # PyTorch-equivalent layout, for reference checks
            # Single-node block diagonal: w1[c*F + f, c] = W_c[f]
            w1 = (w[:, :, None] * eye_c[:, None, :]).reshape(C * F, C)
            # R-node block diagonal: w_pack[r*C*F + c*F + f, r*C + c] = W_c[f]
            self.w_pack[p] = jnp.kron(eye_r, w1)               # (R*C*F, R*C)
            self.b_pack[p] = jnp.tile(b, R).reshape(1, R * C)  # (1, R*C)
        # TODO(synk): loss/metrics machinery (RecallLoss, torchmetrics Recall/Precision,
        # confusion matrices, learned temperature) is training-side and not implemented.

    def _forward_plane(self, p, xp, tile_nodes):
        C, F, R = self.C, self.F, self.R
        n = xp.shape[0]
        if n == 0:  # empty plane: avoid a zero-sized grid / block
            return jnp.zeros((0, C), xp.dtype)
        m = pl.cdiv(n, R)
        pad = m * R - n
        # TODO(synk): the upstream plane-net should emit this packed (M, R*C*F) layout
        # directly; doing it here is one XLA relayout pass over x.
        xf = xp.reshape(n, C * F)
        if pad:
            xf = jnp.concatenate([xf, jnp.zeros((pad, C * F), xf.dtype)], axis=0)
        x_packed = xf.reshape(m, R * C * F)
        out_packed = class_linear_packed(
            x_packed, self.w_pack[p], self.b_pack[p],
            tile_m=max(1, tile_nodes // R),
        )
        # Unpack to the module's (N, C) output contract.  Downstream (loss / argmax)
        # should ideally consume the packed (M, R*C) layout to skip this reshape.
        return out_packed.reshape(m * R, C)[:n]

    def __call__(self, x, *, tile_nodes=2048):
        return {
            "x_semantic": {
                p: self._forward_plane(p, x[p], tile_nodes) for p in self.planes
            }
        }


if __name__ == "__main__":
    planes = ["u", "v", "y"]
    semantic_classes = ["MIP", "HIP", "shower", "michel", "diffuse"]
    node_features = 32
    C = len(semantic_classes)

    key = jax.random.PRNGKey(0)
    key, kdec = jax.random.split(key)
    decoder = SemanticDecoder(node_features, planes, semantic_classes, kdec)

    def reference(x_in):
        ref = {}
        for p in planes:
            w, b = decoder.params[p]
            ref[p] = (
                jnp.einsum("ncf,cf->nc", x_in[p], w,
                           precision=jax.lax.Precision.HIGHEST)
                + b[None, :]
            )
        return ref

    def make_inputs(key, sizes):
        x_in = {}
        for p in planes:
            key, kx = jax.random.split(key)
            x_in[p] = jax.random.normal(kx, (sizes[p], C, node_features), jnp.float32)
        return key, x_in

    # Case 1: equal plane sizes (N=200 -> 25 packed rows -> 4 node blocks of 8,
    # exercising the ragged edge block).
    key, x_eq = make_inputs(key, {p: 200 for p in planes})
    out_eq = decoder(x_eq, tile_nodes=64)
    out_eq = jax.tree_util.tree_map(jax.block_until_ready, out_eq)

    # Case 2: ragged plane sizes, including an empty plane (N == 0 guard).
    key, x_rg = make_inputs(key, {"u": 184, "v": 0, "y": 73})
    out_rg = decoder(x_rg, tile_nodes=64)
    out_rg = jax.tree_util.tree_map(jax.block_until_ready, out_rg)

    ok = True
    for x_in, out in ((x_eq, out_eq), (x_rg, out_rg)):
        ref = reference(x_in)
        for p in planes:
            got = out["x_semantic"][p]
            ok &= got.shape == ref[p].shape
            ok &= bool(jnp.allclose(got, ref[p], atol=1e-5, rtol=1e-5))

    if ok:
        print("KERNEL_OK")
    else:
        raise SystemExit("mismatch vs reference")
</pallas_src>

<mosaic_0001>
module attributes {stable_mosaic.version = 11 : i64} {
  func.func @_semantic_kernel(%arg0: i32, %arg1: memref<8x1280xf32, #tpu.memory_space<vmem>>, %arg2: memref<1280x40xf32, #tpu.memory_space<vmem>>, %arg3: memref<1x40xf32, #tpu.memory_space<vmem>>, %arg4: memref<8x40xf32, #tpu.memory_space<vmem>>) attributes {dimension_semantics = [#tpu.dimension_semantics<parallel>], iteration_bounds = array<i64: 4>, scalar_prefetch = 0 : i64, scratch_operands = 0 : i64, tpu.core_type = #tpu.core_type<tc>, window_params = [{transform_indices = @transform_0, window_bounds = array<i64: 8, 1280>}, {pipeline_mode = #tpu.pipeline_mode<synchronous>, transform_indices = @transform_1, window_bounds = array<i64: 1280, 40>}, {pipeline_mode = #tpu.pipeline_mode<synchronous>, transform_indices = @transform_2, window_bounds = array<i64: 1, 40>}, {transform_indices = @transform_3, window_bounds = array<i64: 8, 40>}]} {
    %c0 = arith.constant 0 : index
    %c0_0 = arith.constant 0 : index
    %0 = vector.load %arg1[%c0, %c0_0] : memref<8x1280xf32, #tpu.memory_space<vmem>>, vector<8x1280xf32>
    %c0_1 = arith.constant 0 : index
    %c0_2 = arith.constant 0 : index
    %1 = vector.load %arg2[%c0_1, %c0_2] : memref<1280x40xf32, #tpu.memory_space<vmem>>, vector<1280x40xf32>
    %cst = arith.constant dense<0.000000e+00> : vector<8x40xf32>
    %2 = tpu.matmul %0, %1, %cst {dimension_numbers = #tpu.dot_dimension_numbers<[1], [0], [0], [1], [0, 0, 1, 1], [], []>, precision = #tpu.contract_precision<fp32>} : vector<8x1280xf32>, vector<1280x40xf32>, vector<8x40xf32> -> vector<8x40xf32>
    %c0_3 = arith.constant 0 : index
    %c0_4 = arith.constant 0 : index
    %3 = vector.load %arg3[%c0_3, %c0_4] : memref<1x40xf32, #tpu.memory_space<vmem>>, vector<1x40xf32>
    %4 = vector.broadcast %3 : vector<1x40xf32> to vector<8x40xf32>
    %5 = arith.addf %2, %4 : vector<8x40xf32>
    %c0_5 = arith.constant 0 : index
    %c0_6 = arith.constant 0 : index
    %6 = vector.load %arg4[%c0_5, %c0_6] : memref<8x40xf32, #tpu.memory_space<vmem>>, vector<8x40xf32>
    tpu.vector_store %arg4[%c0_5, %c0_6], %5 {strides = array<i32>} : memref<8x40xf32, #tpu.memory_space<vmem>>, vector<8x40xf32>,
    return
  }
  func.func @transform_0(%arg0: i32) -> (i32, i32) {
    %c0_i32 = arith.constant 0 : i32
    %c0_i32_0 = arith.constant 0 : i32
    return %arg0, %c0_i32 : i32, i32
  }
  func.func @transform_1(%arg0: i32) -> (i32, i32) {
    %c0_i32 = arith.constant 0 : i32
    %c0_i32_0 = arith.constant 0 : i32
    %c0_i32_1 = arith.constant 0 : i32
    return %c0_i32, %c0_i32_0 : i32, i32
  }
  func.func @transform_2(%arg0: i32) -> (i32, i32) {
    %c0_i32 = arith.constant 0 : i32
    %c0_i32_0 = arith.constant 0 : i32
    %c0_i32_1 = arith.constant 0 : i32
    return %c0_i32, %c0_i32_0 : i32, i32
  }
  func.func @transform_3(%arg0: i32) -> (i32, i32) {
    %c0_i32 = arith.constant 0 : i32
    %c0_i32_0 = arith.constant 0 : i32
    return %arg0, %c0_i32 : i32, i32
  }
}

</mosaic_0001>

<llo_original>
// kernel: tpu_custom_call.1
$region0: #{tpu_custom_call.1}
  #allocation0 [shape = 'u32[]', space=smem, size = 0x4, offset = 0x4, fixed_abs, tag = 'smem constant byte address 0x4 - core index']
  #allocation1 [shape = 'u32[144,128]{1,0:T(1,128)}', space=vmem, size = 0x12000, scoped, tag = 'internal scratch']
  %s0 = inlined_call_operand.vmem [shape: f32[25,1280], index: 0, kind: input, shape index: {}]
  %s1 = inlined_call_operand.vmem [shape: f32[1280,40], index: 1, kind: input, shape index: {}]
  %s2 = inlined_call_operand.vmem [shape: f32[1,40], index: 2, kind: input, shape index: {}]
  %s3 = inlined_call_operand.hbm [shape: f32[25,40], index: 3, kind: output, shape index: {}]
  %s4 = sld [smem:[#allocation0]]
  $region45: #{tpu_custom_call.1} parent=0
    _
  %s6 = ssub.s32 1, %s4
  %s7 = scalar_select 0, %s6, %s4
  $region1: #{tpu_custom_call.1} parent=0
    #allocation2 [shape = 'u8[8192]{0}', space=vmem, size = 0x2000, scoped, tag = 'output window, operand 0']
    #allocation3 [shape = 's32[2]{0}', space=sflag, size = 0x8, scoped, tag = 'scoped memory for tpu_custom_call.1']
    %8 = vsyncpa [#allocation3], 0
    %s9 = scalar_lea.sflag [#allocation3], 1
    %10 = vsyncpa %s9, 0
    loop: start=0, step=1, limit=6
    $region2: #{tpu_custom_call.1} parent=1 // loop_pre_header
      _
    $region3: #{tpu_custom_call.1} parent=1 // loop_header
      %s12 = sphi 0, %s16
      %p13 = scmp.ge.s32.totalorder %s12, 6
      %s22 = sphi 0, %s24
      %s25 = sphi 0, %s22
      %s26 = sphi 0, %s25
      %s42 = sphi 0, %s26
      %s46 = sphi 0, %s46
      %s48 = sphi 0, %s46
      %s49 = sphi 0, %s48
      %s63 = sphi 0, %s49
      %s67 = sphi 0, %s67
      %s69 = sphi 0, %s67
      %s70 = sphi 0, %s69
      %s84 = sphi 0, %s70
      %s90 = sphi 0, %s92
      %s93 = sphi 0, %s90
      %s94 = sphi 0, %s93
      %s110 = sphi 0, %s94
    $region4: #{tpu_custom_call.1} parent=1 // loop_header_branch
      %15 = sbr.rel (%p13) target = $region8
    $region5: #{tpu_custom_call.1} parent=1 // loop_body
      %s17 = ssub.s32 %s12, 1
      %s18 = ssub.s32 %s12, 2
      %s19 = sadd.s32 %s12, 1
      %s20 = ssub.s32 %s12, %s19
      %p21 = scmp.eq.s32.totalorder %s20, 0
      %s23 = sadd.s32 %s22, 1
      %s24 = scalar_select %p21, %s22, %s23
      %p27 = pneg %p21
      %p28 = scmp.eq.s32.totalorder %s12, 3
      %p29 = por %p27, %p28
      %p30 = scmp.ne.s32.totalorder %s22, %s25
      %p31 = scmp.eq.s32.totalorder %s12, 0
      %p32 = por %p30, %p31
      %p33 = scmp.ne.s32.totalorder %s22, %s25
      %p34 = scmp.eq.s32.totalorder %s17, 3
      %p35 = por %p33, %p34
      %p36 = scmp.ne.s32.totalorder %s25, %s26
      %p37 = scmp.eq.s32.totalorder %s17, 0
      %p38 = por %p36, %p37
      %p39 = scmp.ne.s32.totalorder %s25, %s26
      %p40 = scmp.eq.s32.totalorder %s18, 3
      %p41 = por %p39, %p40
      %p43 = scmp.ne.s32.totalorder %s26, %s42
      %p44 = scmp.eq.s32.totalorder %s18, 0
      %p45 = por %p43, %p44
      %s47 = sadd.s32 %s46, 1
      %p50 = scmp.eq.s32.totalorder %s12, 3
      %p51 = scmp.ne.s32.totalorder %s46, %s48
      %p52 = scmp.eq.s32.totalorder %s12, 0
      %p53 = por %p51, %p52
      %p54 = scmp.ne.s32.totalorder %s46, %s48
      %p55 = scmp.eq.s32.totalorder %s17, 3
      %p56 = por %p54, %p55
      %p57 = scmp.ne.s32.totalorder %s48, %s49
      %p58 = scmp.eq.s32.totalorder %s17, 0
      %p59 = por %p57, %p58
      %p60 = scmp.ne.s32.totalorder %s48, %s49
      %p61 = scmp.eq.s32.totalorder %s18, 3
      %p62 = por %p60, %p61
      %p64 = scmp.ne.s32.totalorder %s49, %s63
      %p65 = scmp.eq.s32.totalorder %s18, 0
      %p66 = por %p64, %p65
      %s68 = sadd.s32 %s67, 1
      %p71 = scmp.eq.s32.totalorder %s12, 3
      %p72 = scmp.ne.s32.totalorder %s67, %s69
      %p73 = scmp.eq.s32.totalorder %s12, 0
      %p74 = por %p72, %p73
      %p75 = scmp.ne.s32.totalorder %s67, %s69
      %p76 = scmp.eq.s32.totalorder %s17, 3
      %p77 = por %p75, %p76
      %p78 = scmp.ne.s32.totalorder %s69, %s70
      %p79 = scmp.eq.s32.totalorder %s17, 0
      %p80 = por %p78, %p79
      %p81 = scmp.ne.s32.totalorder %s69, %s70
      %p82 = scmp.eq.s32.totalorder %s18, 3
      %p83 = por %p81, %p82
      %p85 = scmp.ne.s32.totalorder %s70, %s84
      %p86 = scmp.eq.s32.totalorder %s18, 0
      %p87 = por %p85, %p86
      %s88 = ssub.s32 %s12, %s19
      %p89 = scmp.eq.s32.totalorder %s88, 0
      %s91 = sadd.s32 %s90, 1
      %s92 = scalar_select %p89, %s90, %s91
      %p95 = pneg %p89
      %p96 = scmp.eq.s32.totalorder %s12, 3
      %p97 = por %p95, %p96
      %p98 = scmp.ne.s32.totalorder %s90, %s93
      %p99 = scmp.eq.s32.totalorder %s12, 0
      %p100 = por %p98, %p99
      %p101 = scmp.ne.s32.totalorder %s90, %s93
      %p102 = scmp.eq.s32.totalorder %s17, 3
      %p103 = por %p101, %p102
      %p104 = scmp.ne.s32.totalorder %s93, %s94
      %p105 = scmp.eq.s32.totalorder %s17, 0
      %p106 = por %p104, %p105
      %p107 = scmp.ne.s32.totalorder %s93, %s94
      %p108 = scmp.eq.s32.totalorder %s18, 3
      %p109 = por %p107, %p108
      %p111 = scmp.ne.s32.totalorder %s94, %s110
      %p112 = scmp.eq.s32.totalorder %s18, 0
      %p113 = por %p111, %p112
      %p114 = scmp.le.s32.totalorder 1, %s12
      %p115 = scmp.lt.s32.totalorder %s12, 5
      %p116 = pnand %p114, %p115
      %p117 = pneg %p116
      // Predicated region
      $region9: #{tpu_custom_call.1} parent=5 // pred_check
        _
      $region10: #{tpu_custom_call.1} parent=5 // pred_check_branch
        %119 = sbr.rel (%p116) target = $region12
      $region11: #{tpu_custom_call.1} parent=5 // pred_region
        %s120 = ssub.s32 %s12, 1
        // Predicated region
        $region13: #{tpu_custom_call.1} parent=11 // pred_check
          %p121 = pneg %p59
        $region14: #{tpu_custom_call.1} parent=11 // pred_check_branch
          %123 = sbr.rel (%p121) target = $region16
        $region15: #{tpu_custom_call.1} parent=11 // pred_region
          _
        $region16: #{tpu_custom_call.1} parent=11 // pred_fallthru
          _
        // Predicated region
        $region17: #{tpu_custom_call.1} parent=11 // pred_check
          %p124 = pneg %p80
        $region18: #{tpu_custom_call.1} parent=11 // pred_check_branch
          %126 = sbr.rel (%p124) target = $region20
        $region19: #{tpu_custom_call.1} parent=11 // pred_region
          _
        $region20: #{tpu_custom_call.1} parent=11 // pred_fallthru
          _
      $region12: #{tpu_custom_call.1} parent=5 // pred_fallthru
        _
      %p127 = scmp.lt.s32.totalorder %s12, 4
      // Predicated region
      $region21: #{tpu_custom_call.1} parent=5 // pred_check
        %p128 = pneg %p127
      $region22: #{tpu_custom_call.1} parent=5 // pred_check_branch
        %130 = sbr.rel (%p128) target = $region24
      $region23: #{tpu_custom_call.1} parent=5 // pred_region
        // Predicated region
        $region25: #{tpu_custom_call.1} parent=23 // pred_check
          %p131 = pneg %p32
        $region26: #{tpu_custom_call.1} parent=23 // pred_check_branch
          %133 = sbr.rel (%p131) target = $region28
        $region27: #{tpu_custom_call.1} parent=23 // pred_region
          %p134 = scmp.lt.s32.totalorder %s12, 3
          %s135 = scalar_select %p134, %s12, 3
          %s136 = smul.addr %s135, 10
          %s137 = smul.addr %s136, 8
          %s138 = scalar_lea.vmem %s0, %s137
        $region28: #{tpu_custom_call.1} parent=23 // pred_fallthru
          _
      $region24: #{tpu_custom_call.1} parent=5 // pred_fallthru
        _
      %p139 = scmp.le.s32.totalorder 1, %s12
      %p140 = scmp.lt.s32.totalorder %s12, 5
      %p141 = pnand %p139, %p140
      %p142 = pneg %p141
      // Predicated region
      $region29: #{tpu_custom_call.1} parent=5 // pred_check
        _
      $region30: #{tpu_custom_call.1} parent=5 // pred_check_branch
        %144 = sbr.rel (%p141) target = $region32
      $region31: #{tpu_custom_call.1} parent=5 // pred_region
        %s145 = ssub.s32 %s12, 1
        %p146 = scmp.lt.s32.totalorder %s17, 3
        %s147 = scalar_select %p146, %s17, 3
        %s148 = smul.addr %s147, 10
        %s149 = smul.addr %s148, 8
        %s150 = scalar_lea.vmem %s0, %s149
        %p151 = pneg %p38
        %p152 = pneg %p35
        %p153 = pneg %p59
        %p154 = pneg %p56
        %p155 = pneg %p80
        %p156 = pneg %p77
        %p157 = pneg %p106
        %p158 = pneg %p103
        %s159 = sand.u32 %s93, 1
        %s160 = scalar_lea.sflag [#allocation3], %s159
        %s161 = sand.u32 %s93, 1
        %s162 = smul.addr %s161, 8
        %s163 = scalar_lea.vmem [#allocation2], %s162
        %p164 = scmp.lt.s32.totalorder %s17, 3
        %s165 = scalar_select %p164, %s17, 3
        %s166 = smul.addr %s165, 10
        %s167 = smul.addr %s166, 8
        %s168 = scalar_lea.vmem %s0, %s167
        %v169 = vld [vmem:[%s168] sm:$0xff]
        %v170 = vld [vmem:[%s168 + $0x8] sm:$0xff]
        %v171 = vld [vmem:[%s168 + $0x10] sm:$0xff]
        %v172 = vld [vmem:[%s168 + $0x18] sm:$0xff]
        %v173 = vld [vmem:[%s168 + $0x20] sm:$0xff]
        %v174 = vld [vmem:[%s168 + $0x28] sm:$0xff]
        %v175 = vld [vmem:[%s168 + $0x30] sm:$0xff]
        %v176 = vld [vmem:[%s168 + $0x38] sm:$0xff]
        %v177 = vld [vmem:[%s168 + $0x40] sm:$0xff]
        %v178 = vld [vmem:[%s168 + $0x48] sm:$0xff]
        %v179 = vld [vmem:[%s1] sm:$0xff]
        %v180 = vld [vmem:[%s1 + $0x8] sm:$0xff]
        %v181 = vld [vmem:[%s1 + $0x10] sm:$0xff]
        %v182 = vld [vmem:[%s1 + $0x18] sm:$0xff]
        %v183 = vld [vmem:[%s1 + $0x20] sm:$0xff]
        %v184 = vld [vmem:[%s1 + $0x28] sm:$0xff]
        %v185 = vld [vmem:[%s1 + $0x30] sm:$0xff]
        %v186 = vld [vmem:[%s1 + $0x38] sm:$0xff]
        %v187 = vld [vmem:[%s1 + $0x40] sm:$0xff]
        %v188 = vld [vmem:[%s1 + $0x48] sm:$0xff]
        %v189 = vld [vmem:[%s1 + $0x50] sm:$0xff]
        %v190 = vld [vmem:[%s1 + $0x58] sm:$0xff]
        %v191 = vld [vmem:[%s1 + $0x60] sm:$0xff]
        %v192 = vld [vmem:[%s1 + $0x68] sm:$0xff]
        %v193 = vld [vmem:[%s1 + $0x70] sm:$0xff]
        %v194 = vld [vmem:[%s1 + $0x78] sm:$0xff]
        %v195 = vld [vmem:[%s1 + $0x80] sm:$0xff]
        %v196 = vld [vmem:[%s1 + $0x88] sm:$0xff]
        %v197 = vld [vmem:[%s1 + $0x90] sm:$0xff]
        %v198 = vld [vmem:[%s1 + $0x98] sm:$0xff]
        %v199 = vld [vmem:[%s1 + $0xa0] sm:$0xff]
        %v200 = vld [vmem:[%s1 + $0xa8] sm:$0xff]
        %v201 = vld [vmem:[%s1 + $0xb0] sm:$0xff]
        %v202 = vld [vmem:[%s1 + $0xb8] sm:$0xff]
        %v203 = vld [vmem:[%s1 + $0xc0] sm:$0xff]
        %v204 = vld [vmem:[%s1 + $0xc8] sm:$0xff]
        %v205 = vld [vmem:[%s1 + $0xd0] sm:$0xff]
        %v206 = vld [vmem:[%s1 + $0xd8] sm:$0xff]
        %v207 = vld [vmem:[%s1 + $0xe0] sm:$0xff]
        %v208 = vld [vmem:[%s1 + $0xe8] sm:$0xff]
        %v209 = vld [vmem:[%s1 + $0xf0] sm:$0xff]
        %v210 = vld [vmem:[%s1 + $0xf8] sm:$0xff]
        %v211 = vld [vmem:[%s1 + $0x100] sm:$0xff]
        %v212 = vld [vmem:[%s1 + $0x108] sm:$0xff]
        %v213 = vld [vmem:[%s1 + $0x110] sm:$0xff]
        %v214 = vld [vmem:[%s1 + $0x118] sm:$0xff]
        %v215 = vld [vmem:[%s1 + $0x120] sm:$0xff]
        %v216 = vld [vmem:[%s1 + $0x128] sm:$0xff]
        %v217 = vld [vmem:[%s1 + $0x130] sm:$0xff]
        %v218 = vld [vmem:[%s1 + $0x138] sm:$0xff]
        %v219 = vld [vmem:[%s1 + $0x140] sm:$0xff]
        %v220 = vld [vmem:[%s1 + $0x148] sm:$0xff]
        %v221 = vld [vmem:[%s1 + $0x150] sm:$0xff]
        %v222 = vld [vmem:[%s1 + $0x158] sm:$0xff]
        %v223 = vld [vmem:[%s1 + $0x160] sm:$0xff]
        %v224 = vld [vmem:[%s1 + $0x168] sm:$0xff]
        %v225 = vld [vmem:[%s1 + $0x170] sm:$0xff]
        %v226 = vld [vmem:[%s1 + $0x178] sm:$0xff]
        %v227 = vld [vmem:[%s1 + $0x180] sm:$0xff]
        %v228 = vld [vmem:[%s1 + $0x188] sm:$0xff]
        %v229 = vld [vmem:[%s1 + $0x190] sm:$0xff]
        %v230 = vld [vmem:[%s1 + $0x198] sm:$0xff]
        %v231 = vld [vmem:[%s1 + $0x1a0] sm:$0xff]
        %v232 = vld [vmem:[%s1 + $0x1a8] sm:$0xff]
        %v233 = vld [vmem:[%s1 + $0x1b0] sm:$0xff]
        %v234 = vld [vmem:[%s1 + $0x1b8] sm:$0xff]
        %v235 = vld [vmem:[%s1 + $0x1c0] sm:$0xff]
        %v236 = vld [vmem:[%s1 + $0x1c8] sm:$0xff]
        %v237 = vld [vmem:[%s1 + $0x1d0] sm:$0xff]
        %v238 = vld [vmem:[%s1 + $0x1d8] sm:$0xff]
        %v239 = vld [vmem:[%s1 + $0x1e0] sm:$0xff]
        %v240 = vld [vmem:[%s1 + $0x1e8] sm:$0xff]
        %v241 = vld [vmem:[%s1 + $0x1f0] sm:$0xff]
        %v242 = vld [vmem:[%s1 + $0x1f8] sm:$0xff]
        %v243 = vld [vmem:[%s1 + $0x200] sm:$0xff]
        %v244 = vld [vmem:[%s1 + $0x208] sm:$0xff]
        %v245 = vld [vmem:[%s1 + $0x210] sm:$0xff]
        %v246 = vld [vmem:[%s1 + $0x218] sm:$0xff]
        %v247 = vld [vmem:[%s1 + $0x220] sm:$0xff]
        %v248 = vld [vmem:[%s1 + $0x228] sm:$0xff]
        %v249 = vld [vmem:[%s1 + $0x230] sm:$0xff]
        %v250 = vld [vmem:[%s1 + $0x238] sm:$0xff]
        %v251 = vld [vmem:[%s1 + $0x240] sm:$0xff]
        %v252 = vld [vmem:[%s1 + $0x248] sm:$0xff]
        %v253 = vld [vmem:[%s1 + $0x250] sm:$0xff]
        %v254 = vld [vmem:[%s1 + $0x258] sm:$0xff]
        %v255 = vld [vmem:[%s1 + $0x260] sm:$0xff]
        %v256 = vld [vmem:[%s1 + $0x268] sm:$0xff]
        %v257 = vld [vmem:[%s1 + $0x270] sm:$0xff]
        %v258 = vld [vmem:[%s1 + $0x278] sm:$0xff]
        %v259 = vld [vmem:[%s1 + $0x280] sm:$0xff]
        %v260 = vld [vmem:[%s1 + $0x288] sm:$0xff]
        %v261 = vld [vmem:[%s1 + $0x290] sm:$0xff]
        %v262 = vld [vmem:[%s1 + $0x298] sm:$0xff]
        %v263 = vld [vmem:[%s1 + $0x2a0] sm:$0xff]
        %v264 = vld [vmem:[%s1 + $0x2a8] sm:$0xff]
        %v265 = vld [vmem:[%s1 + $0x2b0] sm:$0xff]
        %v266 = vld [vmem:[%s1 + $0x2b8] sm:$0xff]
        %v267 = vld [vmem:[%s1 + $0x2c0] sm:$0xff]
        %v268 = vld [vmem:[%s1 + $0x2c8] sm:$0xff]
        %v269 = vld [vmem:[%s1 + $0x2d0] sm:$0xff]
        %v270 = vld [vmem:[%s1 + $0x2d8] sm:$0xff]
        %v271 = vld [vmem:[%s1 + $0x2e0] sm:$0xff]
        %v272 = vld [vmem:[%s1 + $0x2e8] sm:$0xff]
        %v273 = vld [vmem:[%s1 + $0x2f0] sm:$0xff]
        %v274 = vld [vmem:[%s1 + $0x2f8] sm:$0xff]
        %v275 = vld [vmem:[%s1 + $0x300] sm:$0xff]
        %v276 = vld [vmem:[%s1 + $0x308] sm:$0xff]
        %v277 = vld [vmem:[%s1 + $0x310] sm:$0xff]
        %v278 = vld [vmem:[%s1 + $0x318] sm:$0xff]
        %v279 = vld [vmem:[%s1 + $0x320] sm:$0xff]
        %v280 = vld [vmem:[%s1 + $0x328] sm:$0xff]
        %v281 = vld [vmem:[%s1 + $0x330] sm:$0xff]
        %v282 = vld [vmem:[%s1 + $0x338] sm:$0xff]
        %v283 = vld [vmem:[%s1 + $0x340] sm:$0xff]
        %v284 = vld [vmem:[%s1 + $0x348] sm:$0xff]
        %v285 = vld [vmem:[%s1 + $0x350] sm:$0xff]
        %v286 = vld [vmem:[%s1 + $0x358] sm:$0xff]
        %v287 = vld [vmem:[%s1 + $0x360] sm:$0xff]
        %v288 = vld [vmem:[%s1 + $0x368] sm:$0xff]
        %v289 = vld [vmem:[%s1 + $0x370] sm:$0xff]
        %v290 = vld [vmem:[%s1 + $0x378] sm:$0xff]
        %v291 = vld [vmem:[%s1 + $0x380] sm:$0xff]
        %v292 = vld [vmem:[%s1 + $0x388] sm:$0xff]
        %v293 = vld [vmem:[%s1 + $0x390] sm:$0xff]
        %v294 = vld [vmem:[%s1 + $0x398] sm:$0xff]
        %v295 = vld [vmem:[%s1 + $0x3a0] sm:$0xff]
        %v296 = vld [vmem:[%s1 + $0x3a8] sm:$0xff]
        %v297 = vld [vmem:[%s1 + $0x3b0] sm:$0xff]
        %v298 = vld [vmem:[%s1 + $0x3b8] sm:$0xff]
        %v299 = vld [vmem:[%s1 + $0x3c0] sm:$0xff]
        %v300 = vld [vmem:[%s1 + $0x3c8] sm:$0xff]
        %v301 = vld [vmem:[%s1 + $0x3d0] sm:$0xff]
        %v302 = vld [vmem:[%s1 + $0x3d8] sm:$0xff]
        %v303 = vld [vmem:[%s1 + $0x3e0] sm:$0xff]
        %v304 = vld [vmem:[%s1 + $0x3e8] sm:$0xff]
        %v305 = vld [vmem:[%s1 + $0x3f0] sm:$0xff]
        %v306 = vld [vmem:[%s1 + $0x3f8] sm:$0xff]
        %v307 = vld [vmem:[%s1 + $0x400] sm:$0xff]
        %v308 = vld [vmem:[%s1 + $0x408] sm:$0xff]
        %v309 = vld [vmem:[%s1 + $0x410] sm:$0xff]
        %v310 = vld [vmem:[%s1 + $0x418] sm:$0xff]
        %v311 = vld [vmem:[%s1 + $0x420] sm:$0xff]
        %v312 = vld [vmem:[%s1 + $0x428] sm:$0xff]
        %v313 = vld [vmem:[%s1 + $0x430] sm:$0xff]
        %v314 = vld [vmem:[%s1 + $0x438] sm:$0xff]
        %v315 = vld [vmem:[%s1 + $0x440] sm:$0xff]
        %v316 = vld [vmem:[%s1 + $0x448] sm:$0xff]
        %v317 = vld [vmem:[%s1 + $0x450] sm:$0xff]
        %v318 = vld [vmem:[%s1 + $0x458] sm:$0xff]
        %v319 = vld [vmem:[%s1 + $0x460] sm:$0xff]
        %v320 = vld [vmem:[%s1 + $0x468] sm:$0xff]
        %v321 = vld [vmem:[%s1 + $0x470] sm:$0xff]
        %v322 = vld [vmem:[%s1 + $0x478] sm:$0xff]
        %v323 = vld [vmem:[%s1 + $0x480] sm:$0xff]
        %v324 = vld [vmem:[%s1 + $0x488] sm:$0xff]
        %v325 = vld [vmem:[%s1 + $0x490] sm:$0xff]
        %v326 = vld [vmem:[%s1 + $0x498] sm:$0xff]
        %v327 = vld [vmem:[%s1 + $0x4a0] sm:$0xff]
        %v328 = vld [vmem:[%s1 + $0x4a8] sm:$0xff]
        %v329 = vld [vmem:[%s1 + $0x4b0] sm:$0xff]
        %v330 = vld [vmem:[%s1 + $0x4b8] sm:$0xff]
        %v331 = vld [vmem:[%s1 + $0x4c0] sm:$0xff]
        %v332 = vld [vmem:[%s1 + $0x4c8] sm:$0xff]
        %v333 = vld [vmem:[%s1 + $0x4d0] sm:$0xff]
        %v334 = vld [vmem:[%s1 + $0x4d8] sm:$0xff]
        %v335 = vld [vmem:[%s1 + $0x4e0] sm:$0xff]
        %v336 = vld [vmem:[%s1 + $0x4e8] sm:$0xff]
        %v337 = vld [vmem:[%s1 + $0x4f0] sm:$0xff]
        %v338 = vld [vmem:[%s1 + $0x4f8] sm:$0xff]
        %v339 = vld [vmem:[%s2] sm:$0x1]
        %v341 = vlaneseq
        %v342 = vshrl.u32 %v341, 7
        %v343 = vsub.s32 0, %v342
        %v344 = vrot.slane %v339, %v343
        %346 = vmatprep.subr.mxu0 0.0
        %v347 = vand.u32 %v179, 4294901760
        %348 = vmatpush1.msra.mxu0 %v347
        %349 = vmatprep.subr.mxu0 0.0
        %v350 = vand.u32 %v180, 4294901760
        %351 = vmatpush1.msra.mxu0 %v350
        %352 = vmatprep.subr.mxu0 0.0
        %v353 = vand.u32 %v181, 4294901760
        %354 = vmatpush1.msra.mxu0 %v353
        %355 = vmatprep.subr.mxu0 0.0
        %v356 = vand.u32 %v182, 4294901760
        %357 = vmatpush1.msra.mxu0 %v356
        %358 = vmatprep.subr.mxu0 0.0
        %v359 = vand.u32 %v183, 4294901760
        %360 = vmatpush1.msra.mxu0 %v359
        %361 = vmatprep.subr.mxu0 0.0
        %v362 = vand.u32 %v184, 4294901760
        %363 = vmatpush1.msra.mxu0 %v362
        %364 = vmatprep.subr.mxu0 0.0
        %v365 = vand.u32 %v185, 4294901760
        %366 = vmatpush1.msra.mxu0 %v365
        %367 = vmatprep.subr.mxu0 0.0
        %v368 = vand.u32 %v186, 4294901760
        %369 = vmatpush1.msra.mxu0 %v368
        %370 = vmatprep.subr.mxu0 0.0
        %v371 = vand.u32 %v187, 4294901760
        %372 = vmatpush1.msra.mxu0 %v371
        %373 = vmatprep.subr.mxu0 0.0
        %v374 = vand.u32 %v188, 4294901760
        %375 = vmatpush1.msra.mxu0 %v374
        %376 = vmatprep.subr.mxu0 0.0
        %v377 = vand.u32 %v189, 4294901760
        %378 = vmatpush1.msra.mxu0 %v377
        %379 = vmatprep.subr.mxu0 0.0
        %v380 = vand.u32 %v190, 4294901760
        %381 = vmatpush1.msra.mxu0 %v380
        %382 = vmatprep.subr.mxu0 0.0
        %v383 = vand.u32 %v191, 4294901760
        %384 = vmatpush1.msra.mxu0 %v383
        %385 = vmatprep.subr.mxu0 0.0
        %v386 = vand.u32 %v192, 4294901760
        %387 = vmatpush1.msra.mxu0 %v386
        %388 = vmatprep.subr.mxu0 0.0
        %v389 = vand.u32 %v193, 4294901760
        %390 = vmatpush1.msra.mxu0 %v389
        %391 = vmatprep.subr.mxu0 0.0
        %v392 = vand.u32 %v194, 4294901760
        %393 = vmatpush1.msra.mxu0 %v392
        %394 = vmatprep.subr.mxu0 0.0
        %v395 = vand.u32 %v195, 4294901760
        %396 = vmatpush1.msra.mxu0 %v395
        %397 = vmatprep.subr.mxu0 0.0
        %v398 = vand.u32 %v196, 4294901760
        %399 = vmatpush1.msra.mxu0 %v398
        %400 = vmatprep.subr.mxu0 0.0
        %v401 = vand.u32 %v197, 4294901760
        %402 = vmatpush1.msra.mxu0 %v401
        %403 = vmatprep.subr.mxu0 0.0
        %v404 = vand.u32 %v198, 4294901760
        %405 = vmatpush1.msra.mxu0 %v404
        %406 = vmatprep.subr.mxu0 0.0
        %v407 = vand.u32 %v199, 4294901760
        %408 = vmatpush1.msra.mxu0 %v407
        %409 = vmatprep.subr.mxu0 0.0
        %v410 = vand.u32 %v200, 4294901760
        %411 = vmatpush1.msra.mxu0 %v410
        %412 = vmatprep.subr.mxu0 0.0
        %v413 = vand.u32 %v201, 4294901760
        %414 = vmatpush1.msra.mxu0 %v413
        %415 = vmatprep.subr.mxu0 0.0
        %v416 = vand.u32 %v202, 4294901760
        %417 = vmatpush1.msra.mxu0 %v416
        %418 = vmatprep.subr.mxu0 0.0
        %v419 = vand.u32 %v203, 4294901760
        %420 = vmatpush1.msra.mxu0 %v419
        %421 = vmatprep.subr.mxu0 0.0
        %v422 = vand.u32 %v204, 4294901760
        %423 = vmatpush1.msra.mxu0 %v422
        %424 = vmatprep.subr.mxu0 0.0
        %v425 = vand.u32 %v205, 4294901760
        %426 = vmatpush1.msra.mxu0 %v425
        %427 = vmatprep.subr.mxu0 0.0
        %v428 = vand.u32 %v206, 4294901760
        %429 = vmatpush1.msra.mxu0 %v428
        %430 = vmatprep.subr.mxu0 0.0
        %v431 = vand.u32 %v207, 4294901760
        %432 = vmatpush1.msra.mxu0 %v431
        %433 = vmatprep.subr.mxu0 0.0
        %v434 = vand.u32 %v208, 4294901760
        %435 = vmatpush1.msra.mxu0 %v434
        %436 = vmatprep.subr.mxu0 0.0
        %v437 = vand.u32 %v209, 4294901760
        %438 = vmatpush1.msra.mxu0 %v437
        %439 = vmatprep.subr.mxu0 0.0
        %v440 = vand.u32 %v210, 4294901760
        %441 = vmatpush1.msra.mxu0 %v440
        %v442 = vand.u32 %v170, 4294901760
        %v443 = vsub.f32 %v170, %v442
        %v444 = vand.u32 %v443, 4294901760
        %v445 = vsub.f32 %v443, %v444
        %v446 = vand.u32 %v445, 4294901760
        %447 = vmatprep.mubr.f32.mxu0 %v446
        %v448 = vand.u32 %v169, 4294901760
        %v449 = vsub.f32 %v169, %v448
        %v450 = vand.u32 %v449, 4294901760
        %v451 = vsub.f32 %v449, %v450
        %v452 = vand.u32 %v451, 4294901760
        %453 = vmatmul.mubr.f32.gmra.mrb[0].mxu0 %v452
        %v454 = vpop.f32.mrb[0].mxu0
        %v455 = vadd.f32 %v344, %v454
        %v456 = vpop.f32.mrb[0].mxu0
        %457 = vdwg.mxu0
        %458 = vmatprep.subr.mxu0 0.0
        %v459 = vand.u32 %v179, 4294901760
        %v460 = vsub.f32 %v179, %v459
        %v461 = vand.u32 %v460, 4294901760
        %v462 = vsub.f32 %v460, %v461
        %v463 = vand.u32 %v462, 4294901760
        %464 = vmatpush1.msra.mxu0 %v463
        %465 = vmatprep.subr.mxu0 0.0
        %v466 = vand.u32 %v180, 4294901760
        %v467 = vsub.f32 %v180, %v466
        %v468 = vand.u32 %v467, 4294901760
        %v469 = vsub.f32 %v467, %v468
        %v470 = vand.u32 %v469, 4294901760
        %471 = vmatpush1.msra.mxu0 %v470
        %472 = vmatprep.subr.mxu0 0.0
        %v473 = vand.u32 %v181, 4294901760
        %v474 = vsub.f32 %v181, %v473
        %v475 = vand.u32 %v474, 4294901760
        %v476 = vsub.f32 %v474, %v475
        %v477 = vand.u32 %v476, 4294901760
        %478 = vmatpush1.msra.mxu0 %v477
        %479 = vmatprep.subr.mxu0 0.0
        %v480 = vand.u32 %v182, 4294901760
        %v481 = vsub.f32 %v182, %v480
        %v482 = vand.u32 %v481, 4294901760
        %v483 = vsub.f32 %v481, %v482
        %v484 = vand.u32 %v483, 4294901760
        %485 = vmatpush1.msra.mxu0 %v484
        %486 = vmatprep.subr.mxu0 0.0
        %v487 = vand.u32 %v183, 4294901760
        %v488 = vsub.f32 %v183, %v487
        %v489 = vand.u32 %v488, 4294901760
        %v490 = vsub.f32 %v488, %v489
        %v491 = vand.u32 %v490, 4294901760
        %492 = vmatpush1.msra.mxu0 %v491
        %493 = vmatprep.subr.mxu0 0.0
        %v494 = vand.u32 %v184, 4294901760
        %v495 = vsub.f32 %v184, %v494
        %v496 = vand.u32 %v495, 4294901760
        %v497 = vsub.f32 %v495, %v496
        %v498 = vand.u32 %v497, 4294901760
        %499 = vmatpush1.msra.mxu0 %v498
        %500 = vmatprep.subr.mxu0 0.0
        %v501 = vand.u32 %v185, 4294901760
        %v502 = vsub.f32 %v185, %v501
        %v503 = vand.u32 %v502, 4294901760
        %v504 = vsub.f32 %v502, %v503
        %v505 = vand.u32 %v504, 4294901760
        %506 = vmatpush1.msra.mxu0 %v505
        %507 = vmatprep.subr.mxu0 0.0
        %v508 = vand.u32 %v186, 4294901760
        %v509 = vsub.f32 %v186, %v508
        %v510 = vand.u32 %v509, 4294901760
        %v511 = vsub.f32 %v509, %v510
        %v512 = vand.u32 %v511, 4294901760
        %513 = vmatpush1.msra.mxu0 %v512
        %514 = vmatprep.subr.mxu0 0.0
        %v515 = vand.u32 %v187, 4294901760
        %v516 = vsub.f32 %v187, %v515
        %v517 = vand.u32 %v516, 4294901760
        %v518 = vsub.f32 %v516, %v517
        %v519 = vand.u32 %v518, 4294901760
        %520 = vmatpush1.msra.mxu0 %v519
        %521 = vmatprep.subr.mxu0 0.0
        %v522 = vand.u32 %v188, 4294901760
        %v523 = vsub.f32 %v188, %v522
        %v524 = vand.u32 %v523, 4294901760
        %v525 = vsub.f32 %v523, %v524
        %v526 = vand.u32 %v525, 4294901760
        %527 = vmatpush1.msra.mxu0 %v526
        %528 = vmatprep.subr.mxu0 0.0
        %v529 = vand.u32 %v189, 4294901760
        %v530 = vsub.f32 %v189, %v529
        %v531 = vand.u32 %v530, 4294901760
        %v532 = vsub.f32 %v530, %v531
        %v533 = vand.u32 %v532, 4294901760
        %534 = vmatpush1.msra.mxu0 %v533
        %535 = vmatprep.subr.mxu0 0.0
        %v536 = vand.u32 %v190, 4294901760
        %v537 = vsub.f32 %v190, %v536
        %v538 = vand.u32 %v537, 4294901760
        %v539 = vsub.f32 %v537, %v538
        %v540 = vand.u32 %v539, 4294901760
        %541 = vmatpush1.msra.mxu0 %v540
        %542 = vmatprep.subr.mxu0 0.0
        %v543 = vand.u32 %v191, 4294901760
        %v544 = vsub.f32 %v191, %v543
        %v545 = vand.u32 %v544, 4294901760
        %v546 = vsub.f32 %v544, %v545
        %v547 = vand.u32 %v546, 4294901760
        %548 = vmatpush1.msra.mxu0 %v547
        %549 = vmatprep.subr.mxu0 0.0
        %v550 = vand.u32 %v192, 4294901760
        %v551 = vsub.f32 %v192, %v550
        %v552 = vand.u32 %v551, 4294901760
        %v553 = vsub.f32 %v551, %v552
        %v554 = vand.u32 %v553, 4294901760
        %555 = vmatpush1.msra.mxu0 %v554
        %556 = vmatprep.subr.mxu0 0.0
        %v557 = vand.u32 %v193, 4294901760
        %v558 = vsub.f32 %v193, %v557
        %v559 = vand.u32 %v558, 4294901760
        %v560 = vsub.f32 %v558, %v559
        %v561 = vand.u32 %v560, 4294901760
        %562 = vmatpush1.msra.mxu0 %v561
        %563 = vmatprep.subr.mxu0 0.0
        %v564 = vand.u32 %v194, 4294901760
        %v565 = vsub.f32 %v194, %v564
        %v566 = vand.u32 %v565, 4294901760
        %v567 = vsub.f32 %v565, %v566
        %v568 = vand.u32 %v567, 4294901760
        %569 = vmatpush1.msra.mxu0 %v568
        %570 = vmatprep.subr.mxu0 0.0
        %v571 = vand.u32 %v195, 4294901760
        %v572 = vsub.f32 %v195, %v571
        %v573 = vand.u32 %v572, 4294901760
        %v574 = vsub.f32 %v572, %v573
        %v575 = vand.u32 %v574, 4294901760
        %576 = vmatpush1.msra.mxu0 %v575
        %577 = vmatprep.subr.mxu0 0.0
        %v578 = vand.u32 %v196, 4294901760
        %v579 = vsub.f32 %v196, %v578
        %v580 = vand.u32 %v579, 4294901760
        %v581 = vsub.f32 %v579, %v580
        %v582 = vand.u32 %v581, 4294901760
        %583 = vmatpush1.msra.mxu0 %v582
        %584 = vmatprep.subr.mxu0 0.0
        %v585 = vand.u32 %v197, 4294901760
        %v586 = vsub.f32 %v197, %v585
        %v587 = vand.u32 %v586, 4294901760
        %v588 = vsub.f32 %v586, %v587
        %v589 = vand.u32 %v588, 4294901760
        %590 = vmatpush1.msra.mxu0 %v589
        %591 = vmatprep.subr.mxu0 0.0
        %v592 = vand.u32 %v198, 4294901760
        %v593 = vsub.f32 %v198, %v592
        %v594 = vand.u32 %v593, 4294901760
        %v595 = vsub.f32 %v593, %v594
        %v596 = vand.u32 %v595, 4294901760
        %597 = vmatpush1.msra.mxu0 %v596
        %598 = vmatprep.subr.mxu0 0.0
        %v599 = vand.u32 %v199, 4294901760
        %v600 = vsub.f32 %v199, %v599
        %v601 = vand.u32 %v600, 4294901760
        %v602 = vsub.f32 %v600, %v601
        %v603 = vand.u32 %v602, 4294901760
        %604 = vmatpush1.msra.mxu0 %v603
        %605 = vmatprep.subr.mxu0 0.0
        %v606 = vand.u32 %v200, 4294901760
        %v607 = vsub.f32 %v200, %v606
        %v608 = vand.u32 %v607, 4294901760
        %v609 = vsub.f32 %v607, %v608
        %v610 = vand.u32 %v609, 4294901760
        %611 = vmatpush1.msra.mxu0 %v610
        %612 = vmatprep.subr.mxu0 0.0
        %v613 = vand.u32 %v201, 4294901760
        %v614 = vsub.f32 %v201, %v613
        %v615 = vand.u32 %v614, 4294901760
        %v616 = vsub.f32 %v614, %v615
        %v617 = vand.u32 %v616, 4294901760
        %618 = vmatpush1.msra.mxu0 %v617
        %619 = vmatprep.subr.mxu0 0.0
        %v620 = vand.u32 %v202, 4294901760
        %v621 = vsub.f32 %v202, %v620
        %v622 = vand.u32 %v621, 4294901760
        %v623 = vsub.f32 %v621, %v622
        %v624 = vand.u32 %v623, 4294901760
        %625 = vmatpush1.msra.mxu0 %v624
        %626 = vmatprep.subr.mxu0 0.0
        %v627 = vand.u32 %v203, 4294901760
        %v628 = vsub.f32 %v203, %v627
        %v629 = vand.u32 %v628, 4294901760
        %v630 = vsub.f32 %v628, %v629
        %v631 = vand.u32 %v630, 4294901760
        %632 = vmatpush1.msra.mxu0 %v631
        %633 = vmatprep.subr.mxu0 0.0
        %v634 = vand.u32 %v204, 4294901760
        %v635 = vsub.f32 %v204, %v634
        %v636 = vand.u32 %v635, 4294901760
        %v637 = vsub.f32 %v635, %v636
        %v638 = vand.u32 %v637, 4294901760
        %639 = vmatpush1.msra.mxu0 %v638
        %640 = vmatprep.subr.mxu0 0.0
        %v641 = vand.u32 %v205, 4294901760
        %v642 = vsub.f32 %v205, %v641
        %v643 = vand.u32 %v642, 4294901760
        %v644 = vsub.f32 %v642, %v643
        %v645 = vand.u32 %v644, 4294901760
        %646 = vmatpush1.msra.mxu0 %v645
        %647 = vmatprep.subr.mxu0 0.0
        %v648 = vand.u32 %v206, 4294901760
        %v649 = vsub.f32 %v206, %v648
        %v650 = vand.u32 %v649, 4294901760
        %v651 = vsub.f32 %v649, %v650
        %v652 = vand.u32 %v651, 4294901760
        %653 = vmatpush1.msra.mxu0 %v652
        %654 = vmatprep.subr.mxu0 0.0
        %v655 = vand.u32 %v207, 4294901760
        %v656 = vsub.f32 %v207, %v655
        %v657 = vand.u32 %v656, 4294901760
        %v658 = vsub.f32 %v656, %v657
        %v659 = vand.u32 %v658, 4294901760
        %660 = vmatpush1.msra.mxu0 %v659
        %661 = vmatprep.subr.mxu0 0.0
        %v662 = vand.u32 %v208, 4294901760
        %v663 = vsub.f32 %v208, %v662
        %v664 = vand.u32 %v663, 4294901760
        %v665 = vsub.f32 %v663, %v664
        %v666 = vand.u32 %v665, 4294901760
        %667 = vmatpush1.msra.mxu0 %v666
        %668 = vmatprep.subr.mxu0 0.0
        %v669 = vand.u32 %v209, 4294901760
        %v670 = vsub.f32 %v209, %v669
        %v671 = vand.u32 %v670, 4294901760
        %v672 = vsub.f32 %v670, %v671
        %v673 = vand.u32 %v672, 4294901760
        %674 = vmatpush1.msra.mxu0 %v673
        %675 = vmatprep.subr.mxu0 0.0
        %v676 = vand.u32 %v210, 4294901760
        %v677 = vsub.f32 %v210, %v676
        %v678 = vand.u32 %v677, 4294901760
        %v679 = vsub.f32 %v677, %v678
        %v680 = vand.u32 %v679, 4294901760
        %681 = vmatpush1.msra.mxu0 %v680
        %v682 = vand.u32 %v170, 4294901760
        %683 = vmatprep.mubr.f32.mxu0 %v682
        %v684 = vand.u32 %v169, 4294901760
        %685 = vmatmul.mubr.f32.gmra.mrb[0].mxu0 %v684
        %v686 = vpop.f32.mrb[0].mxu0
        %v687 = vadd.f32 %v455, %v686
        %v688 = vpop.f32.mrb[0].mxu0
        %689 = vdwg.mxu0
        %690 = vmatprep.subr.mxu0 0.0
        %v691 = vand.u32 %v179, 4294901760
        %v692 = vsub.f32 %v179, %v691
        %693 = vmatpush1.msra.mxu0 %v692
        %694 = vmatprep.subr.mxu0 0.0
        %v695 = vand.u32 %v180, 4294901760
        %v696 = vsub.f32 %v180, %v695
        %697 = vmatpush1.msra.mxu0 %v696
        %698 = vmatprep.subr.mxu0 0.0
        %v699 = vand.u32 %v181, 4294901760
        %v700 = vsub.f32 %v181, %v699
        %701 = vmatpush1.msra.mxu0 %v700
        %702 = vmatprep.subr.mxu0 0.0
        %v703 = vand.u32 %v182, 4294901760
        %v704 = vsub.f32 %v182, %v703
        %705 = vmatpush1.msra.mxu0 %v704
        %706 = vmatprep.subr.mxu0 0.0
        %v707 = vand.u32 %v183, 4294901760
        %v708 = vsub.f32 %v183, %v707
        %709 = vmatpush1.msra.mxu0 %v708
        %710 = vmatprep.subr.mxu0 0.0
        %v711 = vand.u32 %v184, 4294901760
        %v712 = vsub.f32 %v184, %v711
        %713 = vmatpush1.msra.mxu0 %v712
        %714 = vmatprep.subr.mxu0 0.0
        %v715 = vand.u32 %v185, 4294901760
        %v716 = vsub.f32 %v185, %v715
        %717 = vmatpush1.msra.mxu0 %v716
        %718 = vmatprep.subr.mxu0 0.0
        %v719 = vand.u32 %v186, 4294901760
        %v720 = vsub.f32 %v186, %v719
        %721 = vmatpush1.msra.mxu0 %v720
        %722 = vmatprep.subr.mxu0 0.0
        %v723 = vand.u32 %v187, 4294901760
        %v724 = vsub.f32 %v187, %v723
        %725 = vmatpush1.msra.mxu0 %v724
        %726 = vmatprep.subr.mxu0 0.0
        %v727 = vand.u32 %v188, 4294901760
        %v728 = vsub.f32 %v188, %v727
        %729 = vmatpush1.msra.mxu0 %v728
        %730 = vmatprep.subr.mxu0 0.0
        %v731 = vand.u32 %v189, 4294901760
        %v732 = vsub.f32 %v189, %v731
        %733 = vmatpush1.msra.mxu0 %v732
        %734 = vmatprep.subr.mxu0 0.0
        %v735 = vand.u32 %v190, 4294901760
        %v736 = vsub.f32 %v190, %v735
        %737 = vmatpush1.msra.mxu0 %v736
        %738 = vmatprep.subr.mxu0 0.0
        %v739 = vand.u32 %v191, 4294901760
        %v740 = vsub.f32 %v191, %v739
        %741 = vmatpush1.msra.mxu0 %v740
        %742 = vmatprep.subr.mxu0 0.0
        %v743 = vand.u32 %v192, 4294901760
        %v744 = vsub.f32 %v192, %v743
        %745 = vmatpush1.msra.mxu0 %v744
        %746 = vmatprep.subr.mxu0 0.0
        %v747 = vand.u32 %v193, 4294901760
        %v748 = vsub.f32 %v193, %v747
        %749 = vmatpush1.msra.mxu0 %v748
        %750 = vmatprep.subr.mxu0 0.0
        %v751 = vand.u32 %v194, 4294901760
        %v752 = vsub.f32 %v194, %v751
        %753 = vmatpush1.msra.mxu0 %v752
        %754 = vmatprep.subr.mxu0 0.0
        %v755 = vand.u32 %v195, 4294901760
        %v756 = vsub.f32 %v195, %v755
        %757 = vmatpush1.msra.mxu0 %v756
        %758 = vmatprep.subr.mxu0 0.0
        %v759 = vand.u32 %v196, 4294901760
        %v760 = vsub.f32 %v196, %v759
        %761 = vmatpush1.msra.mxu0 %v760
        %762 = vmatprep.subr.mxu0 0.0
        %v763 = vand.u32 %v197, 4294901760
        %v764 = vsub.f32 %v197, %v763
        %765 = vmatpush1.msra.mxu0 %v764
        %766 = vmatprep.subr.mxu0 0.0
        %v767 = vand.u32 %v198, 4294901760
        %v768 = vsub.f32 %v198, %v767
        %769 = vmatpush1.msra.mxu0 %v768
        %770 = vmatprep.subr.mxu0 0.0
        %v771 = vand.u32 %v199, 4294901760
        %v772 = vsub.f32 %v199, %v771
        %773 = vmatpush1.msra.mxu0 %v772
        %774 = vmatprep.subr.mxu0 0.0
        %v775 = vand.u32 %v200, 4294901760
        %v776 = vsub.f32 %v200, %v775
        %777 = vmatpush1.msra.mxu0 %v776
        %778 = vmatprep.subr.mxu0 0.0
        %v779 = vand.u32 %v201, 4294901760
        %v780 = vsub.f32 %v201, %v779
        %781 = vmatpush1.msra.mxu0 %v780
        %782 = vmatprep.subr.mxu0 0.0
        %v783 = vand.u32 %v202, 4294901760
        %v784 = vsub.f32 %v202, %v783
        %785 = vmatpush1.msra.mxu0 %v784
        %786 = vmatprep.subr.mxu0 0.0
        %v787 = vand.u32 %v203, 4294901760
        %v788 = vsub.f32 %v203, %v787
        %789 = vmatpush1.msra.mxu0 %v788
        %790 = vmatprep.subr.mxu0 0.0
        %v791 = vand.u32 %v204, 4294901760
        %v792 = vsub.f32 %v204, %v791
        %793 = vmatpush1.msra.mxu0 %v792
        %794 = vmatprep.subr.mxu0 0.0
        %v795 = vand.u32 %v205, 4294901760
        %v796 = vsub.f32 %v205, %v795
        %797 = vmatpush1.msra.mxu0 %v796
        %798 = vmatprep.subr.mxu0 0.0
        %v799 = vand.u32 %v206, 4294901760
        %v800 = vsub.f32 %v206, %v799
        %801 = vmatpush1.msra.mxu0 %v800
        %802 = vmatprep.subr.mxu0 0.0
        %v803 = vand.u32 %v207, 4294901760
        %v804 = vsub.f32 %v207, %v803
        %805 = vmatpush1.msra.mxu0 %v804
        %806 = vmatprep.subr.mxu0 0.0
        %v807 = vand.u32 %v208, 4294901760
        %v808 = vsub.f32 %v208, %v807
        %809 = vmatpush1.msra.mxu0 %v808
        %810 = vmatprep.subr.mxu0 0.0
        %v811 = vand.u32 %v209, 4294901760
        %v812 = vsub.f32 %v209, %v811
        %813 = vmatpush1.msra.mxu0 %v812
        %814 = vmatprep.subr.mxu0 0.0
        %v815 = vand.u32 %v210, 4294901760
        %v816 = vsub.f32 %v210, %v815
        %817 = vmatpush1.msra.mxu0 %v816
        %v818 = vand.u32 %v170, 4294901760
        %v819 = vsub.f32 %v170, %v818
        %820 = vmatprep.mubr.f32.mxu0 %v819
        %v821 = vand.u32 %v169, 4294901760
        %v822 = vsub.f32 %v169, %v821
        %823 = vmatmul.mubr.f32.gmra.mrb[0].mxu0 %v822
        %v824 = vpop.f32.mrb[0].mxu0
        %v825 = vadd.f32 %v687, %v824
        %v826 = vpop.f32.mrb[0].mxu0
        %827 = vdwg.mxu0
        %828 = vmatprep.subr.mxu0 0.0
        %v829 = vand.u32 %v179, 4294901760
        %830 = vmatpush1.msra.mxu0 %v829
        %831 = vmatprep.subr.mxu0 0.0
        %v832 = vand.u32 %v180, 4294901760
        %833 = vmatpush1.msra.mxu0 %v832
        %834 = vmatprep.subr.mxu0 0.0
        %v835 = vand.u32 %v181, 4294901760
        %836 = vmatpush1.msra.mxu0 %v835
        %837 = vmatprep.subr.mxu0 0.0
        %v838 = vand.u32 %v182, 4294901760
        %839 = vmatpush1.msra.mxu0 %v838
        %840 = vmatprep.subr.mxu0 0.0
        %v841 = vand.u32 %v183, 4294901760
        %842 = vmatpush1.msra.mxu0 %v841
        %843 = vmatprep.subr.mxu0 0.0
        %v844 = vand.u32 %v184, 4294901760
        %845 = vmatpush1.msra.mxu0 %v844
        %846 = vmatprep.subr.mxu0 0.0
        %v847 = vand.u32 %v185, 4294901760
        %848 = vmatpush1.msra.mxu0 %v847
        %849 = vmatprep.subr.mxu0 0.0
        %v850 = vand.u32 %v186, 4294901760
        %851 = vmatpush1.msra.mxu0 %v850
        %852 = vmatprep.subr.mxu0 0.0
        %v853 = vand.u32 %v187, 4294901760
        %854 = vmatpush1.msra.mxu0 %v853
        %855 = vmatprep.subr.mxu0 0.0
        %v856 = vand.u32 %v188, 4294901760
        %857 = vmatpush1.msra.mxu0 %v856
        %858 = vmatprep.subr.mxu0 0.0
        %v859 = vand.u32 %v189, 4294901760
        %860 = vmatpush1.msra.mxu0 %v859
        %861 = vmatprep.subr.mxu0 0.0
        %v862 = vand.u32 %v190, 4294901760
        %863 = vmatpush1.msra.mxu0 %v862
        %864 = vmatprep.subr.mxu0 0.0
        %v865 = vand.u32 %v191, 4294901760
        %866 = vmatpush1.msra.mxu0 %v865
        %867 = vmatprep.subr.mxu0 0.0
        %v868 = vand.u32 %v192, 4294901760
        %869 = vmatpush1.msra.mxu0 %v868
        %870 = vmatprep.subr.mxu0 0.0
        %v871 = vand.u32 %v193, 4294901760
        %872 = vmatpush1.msra.mxu0 %v871
        %873 = vmatprep.subr.mxu0 0.0
        %v874 = vand.u32 %v194, 4294901760
        %875 = vmatpush1.msra.mxu0 %v874
        %876 = vmatprep.subr.mxu0 0.0
        %v877 = vand.u32 %v195, 4294901760
        %878 = vmatpush1.msra.mxu0 %v877
        %879 = vmatprep.subr.mxu0 0.0
        %v880 = vand.u32 %v196, 4294901760
        %881 = vmatpush1.msra.mxu0 %v880
        %882 = vmatprep.subr.mxu0 0.0
        %v883 = vand.u32 %v197, 4294901760
        %884 = vmatpush1.msra.mxu0 %v883
        %885 = vmatprep.subr.mxu0 0.0
        %v886 = vand.u32 %v198, 4294901760
        %887 = vmatpush1.msra.mxu0 %v886
        %888 = vmatprep.subr.mxu0 0.0
        %v889 = vand.u32 %v199, 4294901760
        %890 = vmatpush1.msra.mxu0 %v889
        %891 = vmatprep.subr.mxu0 0.0
        %v892 = vand.u32 %v200, 4294901760
        %893 = vmatpush1.msra.mxu0 %v892
        %894 = vmatprep.subr.mxu0 0.0
        %v895 = vand.u32 %v201, 4294901760
        %896 = vmatpush1.msra.mxu0 %v895
        %897 = vmatprep.subr.mxu0 0.0
        %v898 = vand.u32 %v202, 4294901760
        %899 = vmatpush1.msra.mxu0 %v898
        %900 = vmatprep.subr.mxu0 0.0
        %v901 = vand.u32 %v203, 4294901760
        %902 = vmatpush1.msra.mxu0 %v901
        %903 = vmatprep.subr.mxu0 0.0
        %v904 = vand.u32 %v204, 4294901760
        %905 = vmatpush1.msra.mxu0 %v904
        %906 = vmatprep.subr.mxu0 0.0
        %v907 = vand.u32 %v205, 4294901760
        %908 = vmatpush1.msra.mxu0 %v907
        %909 = vmatprep.subr.mxu0 0.0
        %v910 = vand.u32 %v206, 4294901760
        %911 = vmatpush1.msra.mxu0 %v910
        %912 = vmatprep.subr.mxu0 0.0
        %v913 = vand.u32 %v207, 4294901760
        %914 = vmatpush1.msra.mxu0 %v913
        %915 = vmatprep.subr.mxu0 0.0
        %v916 = vand.u32 %v208, 4294901760
        %917 = vmatpush1.msra.mxu0 %v916
        %918 = vmatprep.subr.mxu0 0.0
        %v919 = vand.u32 %v209, 4294901760
        %920 = vmatpush1.msra.mxu0 %v919
        %921 = vmatprep.subr.mxu0 0.0
        %v922 = vand.u32 %v210, 4294901760
        %923 = vmatpush1.msra.mxu0 %v922
        %v924 = vand.u32 %v170, 4294901760
        %v925 = vsub.f32 %v170, %v924
        %v926 = vand.u32 %v925, 4294901760
        %927 = vmatprep.mubr.f32.mxu0 %v926
        %v928 = vand.u32 %v169, 4294901760
        %v929 = vsub.f32 %v169, %v928
        %v930 = vand.u32 %v929, 4294901760
        %931 = vmatmul.mubr.f32.gmra.mrb[0].mxu0 %v930
        %v932 = vpop.f32.mrb[0].mxu0
        %v933 = vadd.f32 %v825, %v932
        %v934 = vpop.f32.mrb[0].mxu0
        %935 = vdwg.mxu0
        %936 = vmatprep.subr.mxu0 0.0
        %v937 = vand.u32 %v179, 4294901760
        %v938 = vsub.f32 %v179, %v937
        %v939 = vand.u32 %v938, 4294901760
        %940 = vmatpush1.msra.mxu0 %v939
        %941 = vmatprep.subr.mxu0 0.0
        %v942 = vand.u32 %v180, 4294901760
        %v943 = vsub.f32 %v180, %v942
        %v944 = vand.u32 %v943, 4294901760
        %945 = vmatpush1.msra.mxu0 %v944
        %946 = vmatprep.subr.mxu0 0.0
        %v947 = vand.u32 %v181, 4294901760
        %v948 = vsub.f32 %v181, %v947
        %v949 = vand.u32 %v948, 4294901760
        %950 = vmatpush1.msra.mxu0 %v949
        %951 = vmatprep.subr.mxu0 0.0
        %v952 = vand.u32 %v182, 4294901760
        %v953 = vsub.f32 %v182, %v952
        %v954 = vand.u32 %v953, 4294901760
        %955 = vmatpush1.msra.mxu0 %v954
        %956 = vmatprep.subr.mxu0 0.0
        %v957 = vand.u32 %v183, 4294901760
        %v958 = vsub.f32 %v183, %v957
        %v959 = vand.u32 %v958, 4294901760
        %960 = vmatpush1.msra.mxu0 %v959
        %961 = vmatprep.subr.mxu0 0.0
        %v962 = vand.u32 %v184, 4294901760
        %v963 = vsub.f32 %v184, %v962
        %v964 = vand.u32 %v963, 4294901760
        %965 = vmatpush1.msra.mxu0 %v964
        %966 = vmatprep.subr.mxu0 0.0
        %v967 = vand.u32 %v185, 4294901760
        %v968 = vsub.f32 %v185, %v967
        %v969 = vand.u32 %v968, 4294901760
        %970 = vmatpush1.msra.mxu0 %v969
        %971 = vmatprep.subr.mxu0 0.0
        %v972 = vand.u32 %v186, 4294901760
        %v973 = vsub.f32 %v186, %v972
        %v974 = vand.u32 %v973, 4294901760
        %975 = vmatpush1.msra.mxu0 %v974
        %976 = vmatprep.subr.mxu0 0.0
        %v977 = vand.u32 %v187, 4294901760
        %v978 = vsub.f32 %v187, %v977
        %v979 = vand.u32 %v978, 4294901760
        %980 = vmatpush1.msra.mxu0 %v979
        %981 = vmatprep.subr.mxu0 0.0
        %v982 = vand.u32 %v188, 4294901760
        %v983 = vsub.f32 %v188, %v982
        %v984 = vand.u32 %v983, 4294901760
        %985 = vmatpush1.msra.mxu0 %v984
        %986 = vmatprep.subr.mxu0 0.0
        %v987 = vand.u32 %v189, 4294901760
        %v988 = vsub.f32 %v189, %v987
        %v989 = vand.u32 %v988, 4294901760
        %990 = vmatpush1.msra.mxu0 %v989
        %991 = vmatprep.subr.mxu0 0.0
        %v992 = vand.u32 %v190, 4294901760
        %v993 = vsub.f32 %v190, %v992
        %v994 = vand.u32 %v993, 4294901760
        %995 = vmatpush1.msra.mxu0 %v994
        %996 = vmatprep.subr.mxu0 0.0
        %v997 = vand.u32 %v191, 4294901760
        %v998 = vsub.f32 %v191, %v997
        %v999 = vand.u32 %v998, 4294901760
        %1000 = vmatpush1.msra.mxu0 %v999
        %1001 = vmatprep.subr.mxu0 0.0
        %v1002 = vand.u32 %v192, 4294901760
        %v1003 = vsub.f32 %v192, %v1002
        %v1004 = vand.u32 %v1003, 4294901760
        %1005 = vmatpush1.msra.mxu0 %v1004
        %1006 = vmatprep.subr.mxu0 0.0
        %v1007 = vand.u32 %v193, 4294901760
        %v1008 = vsub.f32 %v193, %v1007
        %v1009 = vand.u32 %v1008, 4294901760
        %1010 = vmatpush1.msra.mxu0 %v1009
        %1011 = vmatprep.subr.mxu0 0.0
        %v1012 = vand.u32 %v194, 4294901760
        %v1013 = vsub.f32 %v194, %v1012
        %v1014 = vand.u32 %v1013, 4294901760
        %1015 = vmatpush1.msra.mxu0 %v1014
        %1016 = vmatprep.subr.mxu0 0.0
        %v1017 = vand.u32 %v195, 4294901760
        %v1018 = vsub.f32 %v195, %v1017
        %v1019 = vand.u32 %v1018, 4294901760
        %1020 = vmatpush1.msra.mxu0 %v1019
        %1021 = vmatprep.subr.mxu0 0.0
        %v1022 = vand.u32 %v196, 4294901760
        %v1023 = vsub.f32 %v196, %v1022
        %v1024 = vand.u32 %v1023, 4294901760
        %1025 = vmatpush1.msra.mxu0 %v1024
        %1026 = vmatprep.subr.mxu0 0.0
        %v1027 = vand.u32 %v197, 4294901760
        %v1028 = vsub.f32 %v197, %v1027
        %v1029 = vand.u32 %v1028, 4294901760
        %1030 = vmatpush1.msra.mxu0 %v1029
        %1031 = vmatprep.subr.mxu0 0.0
        %v1032 = vand.u32 %v198, 4294901760
        %v1033 = vsub.f32 %v198, %v1032
        %v1034 = vand.u32 %v1033, 4294901760
        %1035 = vmatpush1.msra.mxu0 %v1034
        %1036 = vmatprep.subr.mxu0 0.0
        %v1037 = vand.u32 %v199, 4294901760
        %v1038 = vsub.f32 %v199, %v1037
        %v1039 = vand.u32 %v1038, 4294901760
        %1040 = vmatpush1.msra.mxu0 %v1039
        %1041 = vmatprep.subr.mxu0 0.0
        %v1042 = vand.u32 %v200, 4294901760
        %v1043 = vsub.f32 %v200, %v1042
        %v1044 = vand.u32 %v1043, 4294901760
        %1045 = vmatpush1.msra.mxu0 %v1044
        %1046 = vmatprep.subr.mxu0 0.0
        %v1047 = vand.u32 %v201, 4294901760
        %v1048 = vsub.f32 %v201, %v1047
        %v1049 = vand.u32 %v1048, 4294901760
        %1050 = vmatpush1.msra.mxu0 %v1049
        %1051 = vmatprep.subr.mxu0 0.0
        %v1052 = vand.u32 %v202, 4294901760
        %v1053 = vsub.f32 %v202, %v1052
        %v1054 = vand.u32 %v1053, 4294901760
        %1055 = vmatpush1.msra.mxu0 %v1054
        %1056 = vmatprep.subr.mxu0 0.0
        %v1057 = vand.u32 %v203, 4294901760
        %v1058 = vsub.f32 %v203, %v1057
        %v1059 = vand.u32 %v1058, 4294901760
        %1060 = vmatpush1.msra.mxu0 %v1059
        %1061 = vmatprep.subr.mxu0 0.0
        %v1062 = vand.u32 %v204, 4294901760
        %v1063 = vsub.f32 %v204, %v1062
        %v1064 = vand.u32 %v1063, 4294901760
        %1065 = vmatpush1.msra.mxu0 %v1064
        %1066 = vmatprep.subr.mxu0 0.0
        %v1067 = vand.u32 %v205, 4294901760
        %v1068 = vsub.f32 %v205, %v1067
        %v1069 = vand.u32 %v1068, 4294901760
        %1070 = vmatpush1.msra.mxu0 %v1069
        %1071 = vmatprep.subr.mxu0 0.0
        %v1072 = vand.u32 %v206, 4294901760
        %v1073 = vsub.f32 %v206, %v1072
        %v1074 = vand.u32 %v1073, 4294901760
        %1075 = vmatpush1.msra.mxu0 %v1074
        %1076 = vmatprep.subr.mxu0 0.0
        %v1077 = vand.u32 %v207, 4294901760
        %v1078 = vsub.f32 %v207, %v1077
        %v1079 = vand.u32 %v1078, 4294901760
        %1080 = vmatpush1.msra.mxu0 %v1079
        %1081 = vmatprep.subr.mxu0 0.0
        %v1082 = vand.u32 %v208, 4294901760
        %v1083 = vsub.f32 %v208, %v1082
        %v1084 = vand.u32 %v1083, 4294901760
        %1085 = vmatpush1.msra.mxu0 %v1084
        %1086 = vmatprep.subr.mxu0 0.0
        %v1087 = vand.u32 %v209, 4294901760
        %v1088 = vsub.f32 %v209, %v1087
        %v1089 = vand.u32 %v1088, 4294901760
        %1090 = vmatpush1.msra.mxu0 %v1089
        %1091 = vmatprep.subr.mxu0 0.0
        %v1092 = vand.u32 %v210, 4294901760
        %v1093 = vsub.f32 %v210, %v1092
        %v1094 = vand.u32 %v1093, 4294901760
        %1095 = vmatpush1.msra.mxu0 %v1094
        %v1096 = vand.u32 %v170, 4294901760
        %1097 = vmatprep.mubr.f32.mxu0 %v1096
        %v1098 = vand.u32 %v169, 4294901760
        %1099 = vmatmul.mubr.f32.gmra.mrb[0].mxu0 %v1098
        %v1100 = vpop.f32.mrb[0].mxu0
        %v1101 = vadd.f32 %v933, %v1100
        %v1102 = vpop.f32.mrb[0].mxu0
        %1103 = vdwg.mxu0
        %1104 = vmatprep.subr.mxu0 0.0
        %v1105 = vand.u32 %v179, 4294901760
        %1106 = vmatpush1.msra.mxu0 %v1105
        %1107 = vmatprep.subr.mxu0 0.0
        %v1108 = vand.u32 %v180, 4294901760
        %1109 = vmatpush1.msra.mxu0 %v1108
        %1110 = vmatprep.subr.mxu0 0.0
        %v1111 = vand.u32 %v181, 4294901760
        %1112 = vmatpush1.msra.mxu0 %v1111
        %1113 = vmatprep.subr.mxu0 0.0
        %v1114 = vand.u32 %v182, 4294901760
        %1115 = vmatpush1.msra.mxu0 %v1114
        %1116 = vmatprep.subr.mxu0 0.0
        %v1117 = vand.u32 %v183, 4294901760
        %1118 = vmatpush1.msra.mxu0 %v1117
        %1119 = vmatprep.subr.mxu0 0.0
        %v1120 = vand.u32 %v184, 4294901760
        %1121 = vmatpush1.msra.mxu0 %v1120
        %1122 = vmatprep.subr.mxu0 0.0
        %v1123 = vand.u32 %v185, 4294901760
        %1124 = vmatpush1.msra.mxu0 %v1123
        %1125 = vmatprep.subr.mxu0 0.0
        %v1126 = vand.u32 %v186, 4294901760
        %1127 = vmatpush1.msra.mxu0 %v1126
        %1128 = vmatprep.subr.mxu0 0.0
        %v1129 = vand.u32 %v187, 4294901760
        %1130 = vmatpush1.msra.mxu0 %v1129
        %1131 = vmatprep.subr.mxu0 0.0
        %v1132 = vand.u32 %v188, 4294901760
        %1133 = vmatpush1.msra.mxu0 %v1132
        %1134 = vmatprep.subr.mxu0 0.0
        %v1135 = vand.u32 %v189, 4294901760
        %1136 = vmatpush1.msra.mxu0 %v1135
        %1137 = vmatprep.subr.mxu0 0.0
        %v1138 = vand.u32 %v190, 4294901760
        %1139 = vmatpush1.msra.mxu0 %v1138
        %1140 = vmatprep.subr.mxu0 0.0
        %v1141 = vand.u32 %v191, 4294901760
        %1142 = vmatpush1.msra.mxu0 %v1141
        %1143 = vmatprep.subr.mxu0 0.0
        %v1144 = vand.u32 %v192, 4294901760
        %1145 = vmatpush1.msra.mxu0 %v1144
        %1146 = vmatprep.subr.mxu0 0.0
        %v1147 = vand.u32 %v193, 4294901760
        %1148 = vmatpush1.msra.mxu0 %v1147
        %1149 = vmatprep.subr.mxu0 0.0
        %v1150 = vand.u32 %v194, 4294901760
        %1151 = vmatpush1.msra.mxu0 %v1150
        %1152 = vmatprep.subr.mxu0 0.0
        %v1153 = vand.u32 %v195, 4294901760
        %1154 = vmatpush1.msra.mxu0 %v1153
        %1155 = vmatprep.subr.mxu0 0.0
        %v1156 = vand.u32 %v196, 4294901760
        %1157 = vmatpush1.msra.mxu0 %v1156
        %1158 = vmatprep.subr.mxu0 0.0
        %v1159 = vand.u32 %v197, 4294901760
        %1160 = vmatpush1.msra.mxu0 %v1159
        %1161 = vmatprep.subr.mxu0 0.0
        %v1162 = vand.u32 %v198, 4294901760
        %1163 = vmatpush1.msra.mxu0 %v1162
        %1164 = vmatprep.subr.mxu0 0.0
        %v1165 = vand.u32 %v199, 4294901760
        %1166 = vmatpush1.msra.mxu0 %v1165
        %1167 = vmatprep.subr.mxu0 0.0
        %v1168 = vand.u32 %v200, 4294901760
        %1169 = vmatpush1.msra.mxu0 %v1168
        %1170 = vmatprep.subr.mxu0 0.0
        %v1171 = vand.u32 %v201, 4294901760
        %1172 = vmatpush1.msra.mxu0 %v1171
        %1173 = vmatprep.subr.mxu0 0.0
        %v1174 = vand.u32 %v202, 4294901760
        %1175 = vmatpush1.msra.mxu0 %v1174
        %1176 = vmatprep.subr.mxu0 0.0
        %v1177 = vand.u32 %v203, 4294901760
        %1178 = vmatpush1.msra.mxu0 %v1177
        %1179 = vmatprep.subr.mxu0 0.0
        %v1180 = vand.u32 %v204, 4294901760
        %1181 = vmatpush1.msra.mxu0 %v1180
        %1182 = vmatprep.subr.mxu0 0.0
        %v1183 = vand.u32 %v205, 4294901760
        %1184 = vmatpush1.msra.mxu0 %v1183
        %1185 = vmatprep.subr.mxu0 0.0
        %v1186 = vand.u32 %v206, 4294901760
        %1187 = vmatpush1.msra.mxu0 %v1186
        %1188 = vmatprep.subr.mxu0 0.0
        %v1189 = vand.u32 %v207, 4294901760
        %1190 = vmatpush1.msra.mxu0 %v1189
        %1191 = vmatprep.subr.mxu0 0.0
        %v1192 = vand.u32 %v208, 4294901760
        %1193 = vmatpush1.msra.mxu0 %v1192
        %1194 = vmatprep.subr.mxu0 0.0
        %v1195 = vand.u32 %v209, 4294901760
        %1196 = vmatpush1.msra.mxu0 %v1195
        %1197 = vmatprep.subr.mxu0 0.0
        %v1198 = vand.u32 %v210, 4294901760
        %1199 = vmatpush1.msra.mxu0 %v1198
        %v1200 = vand.u32 %v170, 4294901760
        %1201 = vmatprep.mubr.f32.mxu0 %v1200
        %v1202 = vand.u32 %v169, 4294901760
        %1203 = vmatmul.mubr.f32.gmra.mrb[0].mxu0 %v1202
        %v1204 = vpop.f32.mrb[0].mxu0
        %v1205 = vadd.f32 %v1101, %v1204
        %v1206 = vpop.f32.mrb[0].mxu0
        %1207 = vdwg.mxu0
        %1208 = vmatprep.subr.mxu0 0.0
        %v1209 = vand.u32 %v211, 4294901760
        %1210 = vmatpush1.msra.mxu0 %v1209
        %1211 = vmatprep.subr.mxu0 0.0
        %v1212 = vand.u32 %v212, 4294901760
        %1213 = vmatpush1.msra.mxu0 %v1212
        %1214 = vmatprep.subr.mxu0 0.0
        %v1215 = vand.u32 %v213, 4294901760
        %1216 = vmatpush1.msra.mxu0 %v1215
        %1217 = vmatprep.subr.mxu0 0.0
        %v1218 = vand.u32 %v214, 4294901760
        %1219 = vmatpush1.msra.mxu0 %v1218
        %1220 = vmatprep.subr.mxu0 0.0
        %v1221 = vand.u32 %v215, 4294901760
        %1222 = vmatpush1.msra.mxu0 %v1221
        %1223 = vmatprep.subr.mxu0 0.0
        %v1224 = vand.u32 %v216, 4294901760
        %1225 = vmatpush1.msra.mxu0 %v1224
        %1226 = vmatprep.subr.mxu0 0.0
        %v1227 = vand.u32 %v217, 4294901760
        %1228 = vmatpush1.msra.mxu0 %v1227
        %1229 = vmatprep.subr.mxu0 0.0
        %v1230 = vand.u32 %v218, 4294901760
        %1231 = vmatpush1.msra.mxu0 %v1230
        %1232 = vmatprep.subr.mxu0 0.0
        %v1233 = vand.u32 %v219, 4294901760
        %1234 = vmatpush1.msra.mxu0 %v1233
        %1235 = vmatprep.subr.mxu0 0.0
        %v1236 = vand.u32 %v220, 4294901760
        %1237 = vmatpush1.msra.mxu0 %v1236
        %1238 = vmatprep.subr.mxu0 0.0
        %v1239 = vand.u32 %v221, 4294901760
        %1240 = vmatpush1.msra.mxu0 %v1239
        %1241 = vmatprep.subr.mxu0 0.0
        %v1242 = vand.u32 %v222, 4294901760
        %1243 = vmatpush1.msra.mxu0 %v1242
        %1244 = vmatprep.subr.mxu0 0.0
        %v1245 = vand.u32 %v223, 4294901760
        %1246 = vmatpush1.msra.mxu0 %v1245
        %1247 = vmatprep.subr.mxu0 0.0
        %v1248 = vand.u32 %v224, 4294901760
        %1249 = vmatpush1.msra.mxu0 %v1248
        %1250 = vmatprep.subr.mxu0 0.0
        %v1251 = vand.u32 %v225, 4294901760
        %1252 = vmatpush1.msra.mxu0 %v1251
        %1253 = vmatprep.subr.mxu0 0.0
        %v1254 = vand.u32 %v226, 4294901760
        %1255 = vmatpush1.msra.mxu0 %v1254
        %1256 = vmatprep.subr.mxu0 0.0
        %v1257 = vand.u32 %v227, 4294901760
        %1258 = vmatpush1.msra.mxu0 %v1257
        %1259 = vmatprep.subr.mxu0 0.0
        %v1260 = vand.u32 %v228, 4294901760
        %1261 = vmatpush1.msra.mxu0 %v1260
        %1262 = vmatprep.subr.mxu0 0.0
        %v1263 = vand.u32 %v229, 4294901760
        %1264 = vmatpush1.msra.mxu0 %v1263
        %1265 = vmatprep.subr.mxu0 0.0
        %v1266 = vand.u32 %v230, 4294901760
        %1267 = vmatpush1.msra.mxu0 %v1266
        %1268 = vmatprep.subr.mxu0 0.0
        %v1269 = vand.u32 %v231, 4294901760
        %1270 = vmatpush1.msra.mxu0 %v1269
        %1271 = vmatprep.subr.mxu0 0.0
        %v1272 = vand.u32 %v232, 4294901760
        %1273 = vmatpush1.msra.mxu0 %v1272
        %1274 = vmatprep.subr.mxu0 0.0
        %v1275 = vand.u32 %v233, 4294901760
        %1276 = vmatpush1.msra.mxu0 %v1275
        %1277 = vmatprep.subr.mxu0 0.0
        %v1278 = vand.u32 %v234, 4294901760
        %1279 = vmatpush1.msra.mxu0 %v1278
        %1280 = vmatprep.subr.mxu0 0.0
        %v1281 = vand.u32 %v235, 4294901760
        %1282 = vmatpush1.msra.mxu0 %v1281
        %1283 = vmatprep.subr.mxu0 0.0
        %v1284 = vand.u32 %v236, 4294901760
        %1285 = vmatpush1.msra.mxu0 %v1284
        %1286 = vmatprep.subr.mxu0 0.0
        %v1287 = vand.u32 %v237, 4294901760
        %1288 = vmatpush1.msra.mxu0 %v1287
        %1289 = vmatprep.subr.mxu0 0.0
        %v1290 = vand.u32 %v238, 4294901760
        %1291 = vmatpush1.msra.mxu0 %v1290
        %1292 = vmatprep.subr.mxu0 0.0
        %v1293 = vand.u32 %v239, 4294901760
        %1294 = vmatpush1.msra.mxu0 %v1293
        %1295 = vmatprep.subr.mxu0 0.0
        %v1296 = vand.u32 %v240, 4294901760
        %1297 = vmatpush1.msra.mxu0 %v1296
        %1298 = vmatprep.subr.mxu0 0.0
        %v1299 = vand.u32 %v241, 4294901760
        %1300 = vmatpush1.msra.mxu0 %v1299
        %1301 = vmatprep.subr.mxu0 0.0
        %v1302 = vand.u32 %v242, 4294901760
        %1303 = vmatpush1.msra.mxu0 %v1302
        %v1304 = vand.u32 %v172, 4294901760
        %v1305 = vsub.f32 %v172, %v1304
        %v1306 = vand.u32 %v1305, 4294901760
        %v1307 = vsub.f32 %v1305, %v1306
        %v1308 = vand.u32 %v1307, 4294901760
        %1309 = vmatprep.mubr.f32.mxu0 %v1308
        %v1310 = vand.u32 %v171, 4294901760
        %v1311 = vsub.f32 %v171, %v1310
        %v1312 = vand.u32 %v1311, 4294901760
        %v1313 = vsub.f32 %v1311, %v1312
        %v1314 = vand.u32 %v1313, 4294901760
        %1315 = vmatmul.mubr.f32.gmra.mrb[0].mxu0 %v1314
        %v1316 = vpop.f32.mrb[0].mxu0
        %v1317 = vadd.f32 %v1205, %v1316
        %v1318 = vpop.f32.mrb[0].mxu0
        %1319 = vdwg.mxu0
        %1320 = vmatprep.subr.mxu0 0.0
        %v1321 = vand.u32 %v211, 4294901760
        %v1322 = vsub.f32 %v211, %v1321
        %v1323 = vand.u32 %v1322, 4294901760
        %v1324 = vsub.f32 %v1322, %v1323
        %v1325 = vand.u32 %v1324, 4294901760
        %1326 = vmatpush1.msra.mxu0 %v1325
        %1327 = vmatprep.subr.mxu0 0.0
        %v1328 = vand.u32 %v212, 4294901760
        %v1329 = vsub.f32 %v212, %v1328
        %v1330 = vand.u32 %v1329, 4294901760
        %v1331 = vsub.f32 %v1329, %v1330
        %v1332 = vand.u32 %v1331, 4294901760
        %1333 = vmatpush1.msra.mxu0 %v1332
        %1334 = vmatprep.subr.mxu0 0.0
        %v1335 = vand.u32 %v213, 4294901760
        %v1336 = vsub.f32 %v213, %v1335
        %v1337 = vand.u32 %v1336, 4294901760
        %v1338 = vsub.f32 %v1336, %v1337
        %v1339 = vand.u32 %v1338, 4294901760
        %1340 = vmatpush1.msra.mxu0 %v1339
        %1341 = vmatprep.subr.mxu0 0.0
        %v1342 = vand.u32 %v214, 4294901760
        %v1343 = vsub.f32 %v214, %v1342
        %v1344 = vand.u32 %v1343, 4294901760
        %v1345 = vsub.f32 %v1343, %v1344
        %v1346 = vand.u32 %v1345, 4294901760
        %1347 = vmatpush1.msra.mxu0 %v1346
        %1348 = vmatprep.subr.mxu0 0.0
        %v1349 = vand.u32 %v215, 4294901760
        %v1350 = vsub.f32 %v215, %v1349
        %v1351 = vand.u32 %v1350, 4294901760
        %v1352 = vsub.f32 %v1350, %v1351
        %v1353 = vand.u32 %v1352, 4294901760
        %1354 = vmatpush1.msra.mxu0 %v1353
        %1355 = vmatprep.subr.mxu0 0.0
        %v1356 = vand.u32 %v216, 4294901760
        %v1357 = vsub.f32 %v216, %v1356
        %v1358 = vand.u32 %v1357, 4294901760
        %v1359 = vsub.f32 %v1357, %v1358
        %v1360 = vand.u32 %v1359, 4294901760
        %1361 = vmatpush1.msra.mxu0 %v1360
        %1362 = vmatprep.subr.mxu0 0.0
        %v1363 = vand.u32 %v217, 4294901760
        %v1364 = vsub.f32 %v217, %v1363
        %v1365 = vand.u32 %v1364, 4294901760
        %v1366 = vsub.f32 %v1364, %v1365
        %v1367 = vand.u32 %v1366, 4294901760
        %1368 = vmatpush1.msra.mxu0 %v1367
        %1369 = vmatprep.subr.mxu0 0.0
        %v1370 = vand.u32 %v218, 4294901760
        %v1371 = vsub.f32 %v218, %v1370
        %v1372 = vand.u32 %v1371, 4294901760
        %v1373 = vsub.f32 %v1371, %v1372
        %v1374 = vand.u32 %v1373, 4294901760
        %1375 = vmatpush1.msra.mxu0 %v1374
        %1376 = vmatprep.subr.mxu0 0.0
        %v1377 = vand.u32 %v219, 4294901760
        %v1378 = vsub.f32 %v219, %v1377
        %v1379 = vand.u32 %v1378, 4294901760
        %v1380 = vsub.f32 %v1378, %v1379
        %v1381 = vand.u32 %v1380, 4294901760
        %1382 = vmatpush1.msra.mxu0 %v1381
        %1383 = vmatprep.subr.mxu0 0.0
        %v1384 = vand.u32 %v220, 4294901760
        %v1385 = vsub.f32 %v220, %v1384
        %v1386 = vand.u32 %v1385, 4294901760
        %v1387 = vsub.f32 %v1385, %v1386
        %v1388 = vand.u32 %v1387, 4294901760
        %1389 = vmatpush1.msra.mxu0 %v1388
        %1390 = vmatprep.subr.mxu0 0.0
        %v1391 = vand.u32 %v221, 4294901760
        %v1392 = vsub.f32 %v221, %v1391
        %v1393 = vand.u32 %v1392, 4294901760
        %v1394 = vsub.f32 %v1392, %v1393
        %v1395 = vand.u32 %v1394, 4294901760
        %1396 = vmatpush1.msra.mxu0 %v1395
        %1397 = vmatprep.subr.mxu0 0.0
        %v1398 = vand.u32 %v222, 4294901760
        %v1399 = vsub.f32 %v222, %v1398
        %v1400 = vand.u32 %v1399, 4294901760
        %v1401 = vsub.f32 %v1399, %v1400
        %v1402 = vand.u32 %v1401, 4294901760
        %1403 = vmatpush1.msra.mxu0 %v1402
        %1404 = vmatprep.subr.mxu0 0.0
        %v1405 = vand.u32 %v223, 4294901760
        %v1406 = vsub.f32 %v223, %v1405
        %v1407 = vand.u32 %v1406, 4294901760
        %v1408 = vsub.f32 %v1406, %v1407
        %v1409 = vand.u32 %v1408, 4294901760
        %1410 = vmatpush1.msra.mxu0 %v1409
        %1411 = vmatprep.subr.mxu0 0.0
        %v1412 = vand.u32 %v224, 4294901760
        %v1413 = vsub.f32 %v224, %v1412
        %v1414 = vand.u32 %v1413, 4294901760
        %v1415 = vsub.f32 %v1413, %v1414
        %v1416 = vand.u32 %v1415, 4294901760
        %1417 = vmatpush1.msra.mxu0 %v1416
        %1418 = vmatprep.subr.mxu0 0.0
        %v1419 = vand.u32 %v225, 4294901760
        %v1420 = vsub.f32 %v225, %v1419
        %v1421 = vand.u32 %v1420, 4294901760
        %v1422 = vsub.f32 %v1420, %v1421
        %v1423 = vand.u32 %v1422, 4294901760
        %1424 = vmatpush1.msra.mxu0 %v1423
        %1425 = vmatprep.subr.mxu0 0.0
        %v1426 = vand.u32 %v226, 4294901760
        %v1427 = vsub.f32 %v226, %v1426
        %v1428 = vand.u32 %v1427, 4294901760
        %v1429 = vsub.f32 %v1427, %v1428
        %v1430 = vand.u32 %v1429, 4294901760
        %1431 = vmatpush1.msra.mxu0 %v1430
        %1432 = vmatprep.subr.mxu0 0.0
        %v1433 = vand.u32 %v227, 4294901760
        %v1434 = vsub.f32 %v227, %v1433
        %v1435 = vand.u32 %v1434, 4294901760
        %v1436 = vsub.f32 %v1434, %v1435
        %v1437 = vand.u32 %v1436, 4294901760
        %1438 = vmatpush1.msra.mxu0 %v1437
        %1439 = vmatprep.subr.mxu0 0.0
        %v1440 = vand.u32 %v228, 4294901760
        %v1441 = vsub.f32 %v228, %v1440
        %v1442 = vand.u32 %v1441, 4294901760
        %v1443 = vsub.f32 %v1441, %v1442
        %v1444 = vand.u32 %v1443, 4294901760
        %1445 = vmatpush1.msra.mxu0 %v1444
        %1446 = vmatprep.subr.mxu0 0.0
        %v1447 = vand.u32 %v229, 4294901760
        %v1448 = vsub.f32 %v229, %v1447
        %v1449 = vand.u32 %v1448, 4294901760
        %v1450 = vsub.f32 %v1448, %v1449
        %v1451 = vand.u32 %v1450, 4294901760
        %1452 = vmatpush1.msra.mxu0 %v1451
        %1453 = vmatprep.subr.mxu0 0.0
        %v1454 = vand.u32 %v230, 4294901760
        %v1455 = vsub.f32 %v230, %v1454
        %v1456 = vand.u32 %v1455, 4294901760
        %v1457 = vsub.f32 %v1455, %v1456
        %v1458 = vand.u32 %v1457, 4294901760
        %1459 = vmatpush1.msra.mxu0 %v1458
        %1460 = vmatprep.subr.mxu0 0.0
        %v1461 = vand.u32 %v231, 4294901760
        %v1462 = vsub.f32 %v231, %v1461
        %v1463 = vand.u32 %v1462, 4294901760
        %v1464 = vsub.f32 %v1462, %v1463
        %v1465 = vand.u32 %v1464, 4294901760
        %1466 = vmatpush1.msra.mxu0 %v1465
        %1467 = vmatprep.subr.mxu0 0.0
        %v1468 = vand.u32 %v232, 4294901760
        %v1469 = vsub.f32 %v232, %v1468
        %v1470 = vand.u32 %v1469, 4294901760
        %v1471 = vsub.f32 %v1469, %v1470
        %v1472 = vand.u32 %v1471, 4294901760
        %1473 = vmatpush1.msra.mxu0 %v1472
        %1474 = vmatprep.subr.mxu0 0.0
        %v1475 = vand.u32 %v233, 4294901760
        %v1476 = vsub.f32 %v233, %v1475
        %v1477 = vand.u32 %v1476, 4294901760
        %v1478 = vsub.f32 %v1476, %v1477
        %v1479 = vand.u32 %v1478, 4294901760
        %1480 = vmatpush1.msra.mxu0 %v1479
        %1481 = vmatprep.subr.mxu0 0.0
        %v1482 = vand.u32 %v234, 4294901760
        %v1483 = vsub.f32 %v234, %v1482
        %v1484 = vand.u32 %v1483, 4294901760
        %v1485 = vsub.f32 %v1483, %v1484
        %v1486 = vand.u32 %v1485, 4294901760
        %1487 = vmatpush1.msra.mxu0 %v1486
        %1488 = vmatprep.subr.mxu0 0.0
        %v1489 = vand.u32 %v235, 4294901760
        %v1490 = vsub.f32 %v235, %v1489
        %v1491 = vand.u32 %v1490, 4294901760
        %v1492 = vsub.f32 %v1490, %v1491
        %v1493 = vand.u32 %v1492, 4294901760
        %1494 = vmatpush1.msra.mxu0 %v1493
        %1495 = vmatprep.subr.mxu0 0.0
        %v1496 = vand.u32 %v236, 4294901760
        %v1497 = vsub.f32 %v236, %v1496
        %v1498 = vand.u32 %v1497, 4294901760
        %v1499 = vsub.f32 %v1497, %v1498
        %v1500 = vand.u32 %v1499, 4294901760
        %1501 = vmatpush1.msra.mxu0 %v1500
        %1502 = vmatprep.subr.mxu0 0.0
        %v1503 = vand.u32 %v237, 4294901760
        %v1504 = vsub.f32 %v237, %v1503
        %v1505 = vand.u32 %v1504, 4294901760
        %v1506 = vsub.f32 %v1504, %v1505
        %v1507 = vand.u32 %v1506, 4294901760
        %1508 = vmatpush1.msra.mxu0 %v1507
        %1509 = vmatprep.subr.mxu0 0.0
        %v1510 = vand.u32 %v238, 4294901760
        %v1511 = vsub.f32 %v238, %v1510
        %v1512 = vand.u32 %v1511, 4294901760
        %v1513 = vsub.f32 %v1511, %v1512
        %v1514 = vand.u32 %v1513, 4294901760
        %1515 = vmatpush1.msra.mxu0 %v1514
        %1516 = vmatprep.subr.mxu0 0.0
        %v1517 = vand.u32 %v239, 4294901760
        %v1518 = vsub.f32 %v239, %v1517
        %v1519 = vand.u32 %v1518, 4294901760
        %v1520 = vsub.f32 %v1518, %v1519
        %v1521 = vand.u32 %v1520, 4294901760
        %1522 = vmatpush1.msra.mxu0 %v1521
        %1523 = vmatprep.subr.mxu0 0.0
        %v1524 = vand.u32 %v240, 4294901760
        %v1525 = vsub.f32 %v240, %v1524
        %v1526 = vand.u32 %v1525, 4294901760
        %v1527 = vsub.f32 %v1525, %v1526
        %v1528 = vand.u32 %v1527, 4294901760
        %1529 = vmatpush1.msra.mxu0 %v1528
        %1530 = vmatprep.subr.mxu0 0.0
        %v1531 = vand.u32 %v241, 4294901760
        %v1532 = vsub.f32 %v241, %v1531
        %v1533 = vand.u32 %v1532, 4294901760
        %v1534 = vsub.f32 %v1532, %v1533
        %v1535 = vand.u32 %v1534, 4294901760
        %1536 = vmatpush1.msra.mxu0 %v1535
        %1537 = vmatprep.subr.mxu0 0.0
        %v1538 = vand.u32 %v242, 4294901760
        %v1539 = vsub.f32 %v242, %v1538
        %v1540 = vand.u32 %v1539, 4294901760
        %v1541 = vsub.f32 %v1539, %v1540
        %v1542 = vand.u32 %v1541, 4294901760
        %1543 = vmatpush1.msra.mxu0 %v1542
        %v1544 = vand.u32 %v172, 4294901760
        %1545 = vmatprep.mubr.f32.mxu0 %v1544
        %v1546 = vand.u32 %v171, 4294901760
        %1547 = vmatmul.mubr.f32.gmra.mrb[0].mxu0 %v1546
        %v1548 = vpop.f32.mrb[0].mxu0
        %v1549 = vadd.f32 %v1317, %v1548
        %v1550 = vpop.f32.mrb[0].mxu0
        %1551 = vdwg.mxu0
        %1552 = vmatprep.subr.mxu0 0.0
        %v1553 = vand.u32 %v211, 4294901760
        %v1554 = vsub.f32 %v211, %v1553
        %1555 = vmatpush1.msra.mxu0 %v1554
        %1556 = vmatprep.subr.mxu0 0.0
        %v1557 = vand.u32 %v212, 4294901760
        %v1558 = vsub.f32 %v212, %v1557
        %1559 = vmatpush1.msra.mxu0 %v1558
        %1560 = vmatprep.subr.mxu0 0.0
        %v1561 = vand.u32 %v213, 4294901760
        %v1562 = vsub.f32 %v213, %v1561
        %1563 = vmatpush1.msra.mxu0 %v1562
        %1564 = vmatprep.subr.mxu0 0.0
        %v1565 = vand.u32 %v214, 4294901760
        %v1566 = vsub.f32 %v214, %v1565
        %1567 = vmatpush1.msra.mxu0 %v1566
        %1568 = vmatprep.subr.mxu0 0.0
        %v1569 = vand.u32 %v215, 4294901760
        %v1570 = vsub.f32 %v215, %v1569
        %1571 = vmatpush1.msra.mxu0 %v1570
        %1572 = vmatprep.subr.mxu0 0.0
        %v1573 = vand.u32 %v216, 4294901760
        %v1574 = vsub.f32 %v216, %v1573
        %1575 = vmatpush1.msra.mxu0 %v1574
        %1576 = vmatprep.subr.mxu0 0.0
        %v1577 = vand.u32 %v217, 4294901760
        %v1578 = vsub.f32 %v217, %v1577
        %1579 = vmatpush1.msra.mxu0 %v1578
        %1580 = vmatprep.subr.mxu0 0.0
        %v1581 = vand.u32 %v218, 4294901760
        %v1582 = vsub.f32 %v218, %v1581
        %1583 = vmatpush1.msra.mxu0 %v1582
        %1584 = vmatprep.subr.mxu0 0.0
        %v1585 = vand.u32 %v219, 4294901760
        %v1586 = vsub.f32 %v219, %v1585
        %1587 = vmatpush1.msra.mxu0 %v1586
        %1588 = vmatprep.subr.mxu0 0.0
        %v1589 = vand.u32 %v220, 4294901760
        %v1590 = vsub.f32 %v220, %v1589
        %1591 = vmatpush1.msra.mxu0 %v1590
        %1592 = vmatprep.subr.mxu0 0.0
        %v1593 = vand.u32 %v221, 4294901760
        %v1594 = vsub.f32 %v221, %v1593
        %1595 = vmatpush1.msra.mxu0 %v1594
        %1596 = vmatprep.subr.mxu0 0.0
        %v1597 = vand.u32 %v222, 4294901760
        %v1598 = vsub.f32 %v222, %v1597
        %1599 = vmatpush1.msra.mxu0 %v1598
        %1600 = vmatprep.subr.mxu0 0.0
        %v1601 = vand.u32 %v223, 4294901760
        %v1602 = vsub.f32 %v223, %v1601
        %1603 = vmatpush1.msra.mxu0 %v1602
        %1604 = vmatprep.subr.mxu0 0.0
        %v1605 = vand.u32 %v224, 4294901760
        %v1606 = vsub.f32 %v224, %v1605
        %1607 = vmatpush1.msra.mxu0 %v1606
        %1608 = vmatprep.subr.mxu0 0.0
        %v1609 = vand.u32 %v225, 4294901760
        %v1610 = vsub.f32 %v225, %v1609
        %1611 = vmatpush1.msra.mxu0 %v1610
        %1612 = vmatprep.subr.mxu0 0.0
        %v1613 = vand.u32 %v226, 4294901760
        %v1614 = vsub.f32 %v226, %v1613
        %1615 = vmatpush1.msra.mxu0 %v1614
        %1616 = vmatprep.subr.mxu0 0.0
        %v1617 = vand.u32 %v227, 4294901760
        %v1618 = vsub.f32 %v227, %v1617
        %1619 = vmatpush1.msra.mxu0 %v1618
        %1620 = vmatprep.subr.mxu0 0.0
        %v1621 = vand.u32 %v228, 4294901760
        %v1622 = vsub.f32 %v228, %v1621
        %1623 = vmatpush1.msra.mxu0 %v1622
        %1624 = vmatprep.subr.mxu0 0.0
        %v1625 = vand.u32 %v229, 4294901760
        %v1626 = vsub.f32 %v229, %v1625
        %1627 = vmatpush1.msra.mxu0 %v1626
        %1628 = vmatprep.subr.mxu0 0.0
        %v1629 = vand.u32 %v230, 4294901760
        %v1630 = vsub.f32 %v230, %v1629
        %1631 = vmatpush1.msra.mxu0 %v1630
        %1632 = vmatprep.subr.mxu0 0.0
        %v1633 = vand.u32 %v231, 4294901760
        %v1634 = vsub.f32 %v231, %v1633
        %1635 = vmatpush1.msra.mxu0 %v1634
        %1636 = vmatprep.subr.mxu0 0.0
        %v1637 = vand.u32 %v232, 4294901760
        %v1638 = vsub.f32 %v232, %v1637
        %1639 = vmatpush1.msra.mxu0 %v1638
        %1640 = vmatprep.subr.mxu0 0.0
        %v1641 = vand.u32 %v233, 4294901760
        %v1642 = vsub.f32 %v233, %v1641
        %1643 = vmatpush1.msra.mxu0 %v1642
        %1644 = vmatprep.subr.mxu0 0.0
        %v1645 = vand.u32 %v234, 4294901760
        %v1646 = vsub.f32 %v234, %v1645
        %1647 = vmatpush1.msra.mxu0 %v1646
        %1648 = vmatprep.subr.mxu0 0.0
        %v1649 = vand.u32 %v235, 4294901760
        %v1650 = vsub.f32 %v235, %v1649
        %1651 = vmatpush1.msra.mxu0 %v1650
        %1652 = vmatprep.subr.mxu0 0.0
        %v1653 = vand.u32 %v236, 4294901760
        %v1654 = vsub.f32 %v236, %v1653
        %1655 = vmatpush1.msra.mxu0 %v1654
        %1656 = vmatprep.subr.mxu0 0.0
        %v1657 = vand.u32 %v237, 4294901760
        %v1658 = vsub.f32 %v237, %v1657
        %1659 = vmatpush1.msra.mxu0 %v1658
        %1660 = vmatprep.subr.mxu0 0.0
        %v1661 = vand.u32 %v238, 4294901760
        %v1662 = vsub.f32 %v238, %v1661
        %1663 = vmatpush1.msra.mxu0 %v1662
        %1664 = vmatprep.subr.mxu0 0.0
        %v1665 = vand.u32 %v239, 4294901760
        %v1666 = vsub.f32 %v239, %v1665
        %1667 = vmatpush1.msra.mxu0 %v1666
        %1668 = vmatprep.subr.mxu0 0.0
        %v1669 = vand.u32 %v240, 4294901760
        %v1670 = vsub.f32 %v240, %v1669
        %1671 = vmatpush1.msra.mxu0 %v1670
        %1672 = vmatprep.subr.mxu0 0.0
        %v1673 = vand.u32 %v241, 4294901760
        %v1674 = vsub.f32 %v241, %v1673
        %1675 = vmatpush1.msra.mxu0 %v1674
        %1676 = vmatprep.subr.mxu0 0.0
        %v1677 = vand.u32 %v242, 4294901760
        %v1678 = vsub.f32 %v242, %v1677
        %1679 = vmatpush1.msra.mxu0 %v1678
        %v1680 = vand.u32 %v172, 4294901760
        %v1681 = vsub.f32 %v172, %v1680
        %1682 = vmatprep.mubr.f32.mxu0 %v1681
        %v1683 = vand.u32 %v171, 4294901760
        %v1684 = vsub.f32 %v171, %v1683
        %1685 = vmatmul.mubr.f32.gmra.mrb[0].mxu0 %v1684
        %v1686 = vpop.f32.mrb[0].mxu0
        %v1687 = vadd.f32 %v1549, %v1686
        %v1688 = vpop.f32.mrb[0].mxu0
        %1689 = vdwg.mxu0
        %1690 = vmatprep.subr.mxu0 0.0
        %v1691 = vand.u32 %v211, 4294901760
        %1692 = vmatpush1.msra.mxu0 %v1691
        %1693 = vmatprep.subr.mxu0 0.0
        %v1694 = vand.u32 %v212, 4294901760
        %1695 = vmatpush1.msra.mxu0 %v1694
        %1696 = vmatprep.subr.mxu0 0.0
        %v1697 = vand.u32 %v213, 4294901760
        %1698 = vmatpush1.msra.mxu0 %v1697
        %1699 = vmatprep.subr.mxu0 0.0
        %v1700 = vand.u32 %v214, 4294901760
        %1701 = vmatpush1.msra.mxu0 %v1700
        %1702 = vmatprep.subr.mxu0 0.0
        %v1703 = vand.u32 %v215, 4294901760
        %1704 = vmatpush1.msra.mxu0 %v1703
        %1705 = vmatprep.subr.mxu0 0.0
        %v1706 = vand.u32 %v216, 4294901760
        %1707 = vmatpush1.msra.mxu0 %v1706
        %1708 = vmatprep.subr.mxu0 0.0
        %v1709 = vand.u32 %v217, 4294901760
        %1710 = vmatpush1.msra.mxu0 %v1709
        %1711 = vmatprep.subr.mxu0 0.0
        %v1712 = vand.u32 %v218, 4294901760
        %1713 = vmatpush1.msra.mxu0 %v1712
        %1714 = vmatprep.subr.mxu0 0.0
        %v1715 = vand.u32 %v219, 4294901760
        %1716 = vmatpush1.msra.mxu0 %v1715
        %1717 = vmatprep.subr.mxu0 0.0
        %v1718 = vand.u32 %v220, 4294901760
        %1719 = vmatpush1.msra.mxu0 %v1718
        %1720 = vmatprep.subr.mxu0 0.0
        %v1721 = vand.u32 %v221, 4294901760
        %1722 = vmatpush1.msra.mxu0 %v1721
        %1723 = vmatprep.subr.mxu0 0.0
        %v1724 = vand.u32 %v222, 4294901760
        %1725 = vmatpush1.msra.mxu0 %v1724
        %1726 = vmatprep.subr.mxu0 0.0
        %v1727 = vand.u32 %v223, 4294901760
        %1728 = vmatpush1.msra.mxu0 %v1727
        %1729 = vmatprep.subr.mxu0 0.0
        %v1730 = vand.u32 %v224, 4294901760
        %1731 = vmatpush1.msra.mxu0 %v1730
        %1732 = vmatprep.subr.mxu0 0.0
        %v1733 = vand.u32 %v225, 4294901760
        %1734 = vmatpush1.msra.mxu0 %v1733
        %1735 = vmatprep.subr.mxu0 0.0
        %v1736 = vand.u32 %v226, 4294901760
        %1737 = vmatpush1.msra.mxu0 %v1736
        %1738 = vmatprep.subr.mxu0 0.0
        %v1739 = vand.u32 %v227, 4294901760
        %1740 = vmatpush1.msra.mxu0 %v1739
        %1741 = vmatprep.subr.mxu0 0.0
        %v1742 = vand.u32 %v228, 4294901760
        %1743 = vmatpush1.msra.mxu0 %v1742
        %1744 = vmatprep.subr.mxu0 0.0
        %v1745 = vand.u32 %v229, 4294901760
        %1746 = vmatpush1.msra.mxu0 %v1745
        %1747 = vmatprep.subr.mxu0 0.0
        %v1748 = vand.u32 %v230, 4294901760
        %1749 = vmatpush1.msra.mxu0 %v1748
        %1750 = vmatprep.subr.mxu0 0.0
        %v1751 = vand.u32 %v231, 4294901760
        %1752 = vmatpush1.msra.mxu0 %v1751
        %1753 = vmatprep.subr.mxu0 0.0
        %v1754 = vand.u32 %v232, 4294901760
        %1755 = vmatpush1.msra.mxu0 %v1754
        %1756 = vmatprep.subr.mxu0 0.0
        %v1757 = vand.u32 %v233, 4294901760
        %1758 = vmatpush1.msra.mxu0 %v1757
        %1759 = vmatprep.subr.mxu0 0.0
        %v1760 = vand.u32 %v234, 4294901760
        %1761 = vmatpush1.msra.mxu0 %v1760
        %1762 = vmatprep.subr.mxu0 0.0
        %v1763 = vand.u32 %v235, 4294901760
        %1764 = vmatpush1.msra.mxu0 %v1763
        %1765 = vmatprep.subr.mxu0 0.0
        %v1766 = vand.u32 %v236, 4294901760
        %1767 = vmatpush1.msra.mxu0 %v1766
        %1768 = vmatprep.subr.mxu0 0.0
        %v1769 = vand.u32 %v237, 4294901760
        %1770 = vmatpush1.msra.mxu0 %v1769
        %1771 = vmatprep.subr.mxu0 0.0
        %v1772 = vand.u32 %v238, 4294901760
        %1773 = vmatpush1.msra.mxu0 %v1772
        %1774 = vmatprep.subr.mxu0 0.0
        %v1775 = vand.u32 %v239, 4294901760
        %1776 = vmatpush1.msra.mxu0 %v1775
        %1777 = vmatprep.subr.mxu0 0.0
        %v1778 = vand.u32 %v240, 4294901760
        %1779 = vmatpush1.msra.mxu0 %v1778
        %1780 = vmatprep.subr.mxu0 0.0
        %v1781 = vand.u32 %v241, 4294901760
        %1782 = vmatpush1.msra.mxu0 %v1781
        %1783 = vmatprep.subr.mxu0 0.0
        %v1784 = vand.u32 %v242, 4294901760
        %1785 = vmatpush1.msra.mxu0 %v1784
        %v1786 = vand.u32 %v172, 4294901760
        %v1787 = vsub.f32 %v172, %v1786
        %v1788 = vand.u32 %v1787, 4294901760
        %1789 = vmatprep.mubr.f32.mxu0 %v1788
        %v1790 = vand.u32 %v171, 4294901760
        %v1791 = vsub.f32 %v171, %v1790
        %v1792 = vand.u32 %v1791, 4294901760
        %1793 = vmatmul.mubr.f32.gmra.mrb[0].mxu0 %v1792
        %v1794 = vpop.f32.mrb[0].mxu0
        %v1795 = vadd.f32 %v1687, %v1794
        %v1796 = vpop.f32.mrb[0].mxu0
        %1797 = vdwg.mxu0
        %1798 = vmatprep.subr.mxu0 0.0
        %v1799 = vand.u32 %v211, 4294901760
        %v1800 = vsub.f32 %v211, %v1799
        %v1801 = vand.u32 %v1800, 4294901760
        %1802 = vmatpush1.msra.mxu0 %v1801
        %1803 = vmatprep.subr.mxu0 0.0
        %v1804 = vand.u32 %v212, 4294901760
        %v1805 = vsub.f32 %v212, %v1804
        %v1806 = vand.u32 %v1805, 4294901760
        %1807 = vmatpush1.msra.mxu0 %v1806
        %1808 = vmatprep.subr.mxu0 0.0
        %v1809 = vand.u32 %v213, 4294901760
        %v1810 = vsub.f32 %v213, %v1809
        %v1811 = vand.u32 %v1810, 4294901760
        %1812 = vmatpush1.msra.mxu0 %v1811
        %1813 = vmatprep.subr.mxu0 0.0
        %v1814 = vand.u32 %v214, 4294901760
        %v1815 = vsub.f32 %v214, %v1814
        %v1816 = vand.u32 %v1815, 4294901760
        %1817 = vmatpush1.msra.mxu0 %v1816
        %1818 = vmatprep.subr.mxu0 0.0
        %v1819 = vand.u32 %v215, 4294901760
        %v1820 = vsub.f32 %v215, %v1819
        %v1821 = vand.u32 %v1820, 4294901760
        %1822 = vmatpush1.msra.mxu0 %v1821
        %1823 = vmatprep.subr.mxu0 0.0
        %v1824 = vand.u32 %v216, 4294901760
        %v1825 = vsub.f32 %v216, %v1824
        %v1826 = vand.u32 %v1825, 4294901760
        %1827 = vmatpush1.msra.mxu0 %v1826
        %1828 = vmatprep.subr.mxu0 0.0
        %v1829 = vand.u32 %v217, 4294901760
        %v1830 = vsub.f32 %v217, %v1829
        %v1831 = vand.u32 %v1830, 4294901760
        %1832 = vmatpush1.msra.mxu0 %v1831
        %1833 = vmatprep.subr.mxu0 0.0
        %v1834 = vand.u32 %v218, 4294901760
        %v1835 = vsub.f32 %v218, %v1834
        %v1836 = vand.u32 %v1835, 4294901760
        %1837 = vmatpush1.msra.mxu0 %v1836
        %1838 = vmatprep.subr.mxu0 0.0
        %v1839 = vand.u32 %v219, 4294901760
        %v1840 = vsub.f32 %v219, %v1839
        %v1841 = vand.u32 %v1840, 4294901760
        %1842 = vmatpush1.msra.mxu0 %v1841
        %1843 = vmatprep.subr.mxu0 0.0
        %v1844 = vand.u32 %v220, 4294901760
        %v1845 = vsub.f32 %v220, %v1844
        %v1846 = vand.u32 %v1845, 4294901760
        %1847 = vmatpush1.msra.mxu0 %v1846
        %1848 = vmatprep.subr.mxu0 0.0
        %v1849 = vand.u32 %v221, 4294901760
        %v1850 = vsub.f32 %v221, %v1849
        %v1851 = vand.u32 %v1850, 4294901760
        %1852 = vmatpush1.msra.mxu0 %v1851
        %1853 = vmatprep.subr.mxu0 0.0
        %v1854 = vand.u32 %v222, 4294901760
        %v1855 = vsub.f32 %v222, %v1854
        %v1856 = vand.u32 %v1855, 4294901760
        %1857 = vmatpush1.msra.mxu0 %v1856
        %1858 = vmatprep.subr.mxu0 0.0
        %v1859 = vand.u32 %v223, 4294901760
        %v1860 = vsub.f32 %v223, %v1859
        %v1861 = vand.u32 %v1860, 4294901760
        %1862 = vmatpush1.msra.mxu0 %v1861
        %1863 = vmatprep.subr.mxu0 0.0
        %v1864 = vand.u32 %v224, 4294901760
        %v1865 = vsub.f32 %v224, %v1864
        %v1866 = vand.u32 %v1865, 4294901760
        %1867 = vmatpush1.msra.mxu0 %v1866
        %1868 = vmatprep.subr.mxu0 0.0
        %v1869 = vand.u32 %v225, 4294901760
        %v1870 = vsub.f32 %v225, %v1869
        %v1871 = vand.u32 %v1870, 4294901760
        %1872 = vmatpush1.msra.mxu0 %v1871
        %1873 = vmatprep.subr.mxu0 0.0
        %v1874 = vand.u32 %v226, 4294901760
        %v1875 = vsub.f32 %v226, %v1874
        %v1876 = vand.u32 %v1875, 4294901760
        %1877 = vmatpush1.msra.mxu0 %v1876
        %1878 = vmatprep.subr.mxu0 0.0
        %v1879 = vand.u32 %v227, 4294901760
        %v1880 = vsub.f32 %v227, %v1879
        %v1881 = vand.u32 %v1880, 4294901760
        %1882 = vmatpush1.msra.mxu0 %v1881
        %1883 = vmatprep.subr.mxu0 0.0
        %v1884 = vand.u32 %v228, 4294901760
        %v1885 = vsub.f32 %v228, %v1884
        %v1886 = vand.u32 %v1885, 4294901760
        %1887 = vmatpush1.msra.mxu0 %v1886
        %1888 = vmatprep.subr.mxu0 0.0
        %v1889 = vand.u32 %v229, 4294901760
        %v1890 = vsub.f32 %v229, %v1889
        %v1891 = vand.u32 %v1890, 4294901760
        %1892 = vmatpush1.msra.mxu0 %v1891
        %1893 = vmatprep.subr.mxu0 0.0
        %v1894 = vand.u32 %v230, 4294901760
        %v1895 = vsub.f32 %v230, %v1894
        %v1896 = vand.u32 %v1895, 4294901760
        %1897 = vmatpush1.msra.mxu0 %v1896
        %1898 = vmatprep.subr.mxu0 0.0
        %v1899 = vand.u32 %v231, 4294901760
        %v1900 = vsub.f32 %v231, %v1899
        %v1901 = vand.u32 %v1900, 4294901760
        %1902 = vmatpush1.msra.mxu0 %v1901
        %1903 = vmatprep.subr.mxu0 0.0
        %v1904 = vand.u32 %v232, 4294901760
        %v1905 = vsub.f32 %v232, %v1904
        %v1906 = vand.u32 %v1905, 4294901760
        %1907 = vmatpush1.msra.mxu0 %v1906
        %1908 = vmatprep.subr.mxu0 0.0
        %v1909 = vand.u32 %v233, 4294901760
        %v1910 = vsub.f32 %v233, %v1909
        %v1911 = vand.u32 %v1910, 4294901760
        %1912 = vmatpush1.msra.mxu0 %v1911
        %1913 = vmatprep.subr.mxu0 0.0
        %v1914 = vand.u32 %v234, 4294901760
        %v1915 = vsub.f32 %v234, %v1914
        %v1916 = vand.u32 %v1915, 4294901760
        %1917 = vmatpush1.msra.mxu0 %v1916
        %1918 = vmatprep.subr.mxu0 0.0
        %v1919 = vand.u32 %v235, 4294901760
        %v1920 = vsub.f32 %v235, %v1919
        %v1921 = vand.u32 %v1920, 4294901760
        %1922 = vmatpush1.msra.mxu0 %v1921
        %1923 = vmatprep.subr.mxu0 0.0
        %v1924 = vand.u32 %v236, 4294901760
        %v1925 = vsub.f32 %v236, %v1924
        %v1926 = vand.u32 %v1925, 4294901760
        %1927 = vmatpush1.msra.mxu0 %v1926
        %1928 = vmatprep.subr.mxu0 0.0
        %v1929 = vand.u32 %v237, 4294901760
        %v1930 = vsub.f32 %v237, %v1929
        %v1931 = vand.u32 %v1930, 4294901760
        %1932 = vmatpush1.msra.mxu0 %v1931
        %1933 = vmatprep.subr.mxu0 0.0
        %v1934 = vand.u32 %v238, 4294901760
        %v1935 = vsub.f32 %v238, %v1934
        %v1936 = vand.u32 %v1935, 4294901760
        %1937 = vmatpush1.msra.mxu0 %v1936
        %1938 = vmatprep.subr.mxu0 0.0
        %v1939 = vand.u32 %v239, 4294901760
        %v1940 = vsub.f32 %v239, %v1939
        %v1941 = vand.u32 %v1940, 4294901760
        %1942 = vmatpush1.msra.mxu0 %v1941
        %1943 = vmatprep.subr.mxu0 0.0
        %v1944 = vand.u32 %v240, 4294901760
        %v1945 = vsub.f32 %v240, %v1944
        %v1946 = vand.u32 %v1945, 4294901760
        %1947 = vmatpush1.msra.mxu0 %v1946
        %1948 = vmatprep.subr.mxu0 0.0
        %v1949 = vand.u32 %v241, 4294901760
        %v1950 = vsub.f32 %v241, %v1949
        %v1951 = vand.u32 %v1950, 4294901760
        %1952 = vmatpush1.msra.mxu0 %v1951
        %1953 = vmatprep.subr.mxu0 0.0
        %v1954 = vand.u32 %v242, 4294901760
        %v1955 = vsub.f32 %v242, %v1954
        %v1956 = vand.u32 %v1955, 4294901760
        %1957 = vmatpush1.msra.mxu0 %v1956
        %v1958 = vand.u32 %v172, 4294901760
        %1959 = vmatprep.mubr.f32.mxu0 %v1958
        %v1960 = vand.u32 %v171, 4294901760
        %1961 = vmatmul.mubr.f32.gmra.mrb[0].mxu0 %v1960
        %v1962 = vpop.f32.mrb[0].mxu0
        %v1963 = vadd.f32 %v1795, %v1962
        %v1964 = vpop.f32.mrb[0].mxu0
        %1965 = vdwg.mxu0
        %1966 = vmatprep.subr.mxu0 0.0
        %v1967 = vand.u32 %v211, 4294901760
        %1968 = vmatpush1.msra.mxu0 %v1967
        %1969 = vmatprep.subr.mxu0 0.0
        %v1970 = vand.u32 %v212, 4294901760
        %1971 = vmatpush1.msra.mxu0 %v1970
        %1972 = vmatprep.subr.mxu0 0.0
        %v1973 = vand.u32 %v213, 4294901760
        %1974 = vmatpush1.msra.mxu0 %v1973
        %1975 = vmatprep.subr.mxu0 0.0
        %v1976 = vand.u32 %v214, 4294901760
        %1977 = vmatpush1.msra.mxu0 %v1976
        %1978 = vmatprep.subr.mxu0 0.0
        %v1979 = vand.u32 %v215, 4294901760
        %1980 = vmatpush1.msra.mxu0 %v1979
        %1981 = vmatprep.subr.mxu0 0.0
        %v1982 = vand.u32 %v216, 4294901760
        %1983 = vmatpush1.msra.mxu0 %v1982
        %1984 = vmatprep.subr.mxu0 0.0
        %v1985 = vand.u32 %v217, 4294901760
        %1986 = vmatpush1.msra.mxu0 %v1985
        %1987 = vmatprep.subr.mxu0 0.0
        %v1988 = vand.u32 %v218, 4294901760
        %1989 = vmatpush1.msra.mxu0 %v1988
        %1990 = vmatprep.subr.mxu0 0.0
        %v1991 = vand.u32 %v219, 4294901760
        %1992 = vmatpush1.msra.mxu0 %v1991
        %1993 = vmatprep.subr.mxu0 0.0
        %v1994 = vand.u32 %v220, 4294901760
        %1995 = vmatpush1.msra.mxu0 %v1994
        %1996 = vmatprep.subr.mxu0 0.0
        %v1997 = vand.u32 %v221, 4294901760
        %1998 = vmatpush1.msra.mxu0 %v1997
        %1999 = vmatprep.subr.mxu0 0.0
        %v2000 = vand.u32 %v222, 4294901760
        %2001 = vmatpush1.msra.mxu0 %v2000
        %2002 = vmatprep.subr.mxu0 0.0
        %v2003 = vand.u32 %v223, 4294901760
        %2004 = vmatpush1.msra.mxu0 %v2003
        %2005 = vmatprep.subr.mxu0 0.0
        %v2006 = vand.u32 %v224, 4294901760
        %2007 = vmatpush1.msra.mxu0 %v2006
        %2008 = vmatprep.subr.mxu0 0.0
        %v2009 = vand.u32 %v225, 4294901760
        %2010 = vmatpush1.msra.mxu0 %v2009
        %2011 = vmatprep.subr.mxu0 0.0
        %v2012 = vand.u32 %v226, 4294901760
        %2013 = vmatpush1.msra.mxu0 %v2012
        %2014 = vmatprep.subr.mxu0 0.0
        %v2015 = vand.u32 %v227, 4294901760
        %2016 = vmatpush1.msra.mxu0 %v2015
        %2017 = vmatprep.subr.mxu0 0.0
        %v2018 = vand.u32 %v228, 4294901760
        %2019 = vmatpush1.msra.mxu0 %v2018
        %2020 = vmatprep.subr.mxu0 0.0
        %v2021 = vand.u32 %v229, 4294901760
        %2022 = vmatpush1.msra.mxu0 %v2021
        %2023 = vmatprep.subr.mxu0 0.0
        %v2024 = vand.u32 %v230, 4294901760
        %2025 = vmatpush1.msra.mxu0 %v2024
        %2026 = vmatprep.subr.mxu0 0.0
        %v2027 = vand.u32 %v231, 4294901760
        %2028 = vmatpush1.msra.mxu0 %v2027
        %2029 = vmatprep.subr.mxu0 0.0
        %v2030 = vand.u32 %v232, 4294901760
        %2031 = vmatpush1.msra.mxu0 %v2030
        %2032 = vmatprep.subr.mxu0 0.0
        %v2033 = vand.u32 %v233, 4294901760
        %2034 = vmatpush1.msra.mxu0 %v2033
        %2035 = vmatprep.subr.mxu0 0.0
        %v2036 = vand.u32 %v234, 4294901760
        %2037 = vmatpush1.msra.mxu0 %v2036
        %2038 = vmatprep.subr.mxu0 0.0
        %v2039 = vand.u32 %v235, 4294901760
        %2040 = vmatpush1.msra.mxu0 %v2039
        %2041 = vmatprep.subr.mxu0 0.0
        %v2042 = vand.u32 %v236, 4294901760
        %2043 = vmatpush1.msra.mxu0 %v2042
        %2044 = vmatprep.subr.mxu0 0.0
        %v2045 = vand.u32 %v237, 4294901760
        %2046 = vmatpush1.msra.mxu0 %v2045
        %2047 = vmatprep.subr.mxu0 0.0
        %v2048 = vand.u32 %v238, 4294901760
        %2049 = vmatpush1.msra.mxu0 %v2048
        %2050 = vmatprep.subr.mxu0 0.0
        %v2051 = vand.u32 %v239, 4294901760
        %2052 = vmatpush1.msra.mxu0 %v2051
        %2053 = vmatprep.subr.mxu0 0.0
        %v2054 = vand.u32 %v240, 4294901760
        %2055 = vmatpush1.msra.mxu0 %v2054
        %2056 = vmatprep.subr.mxu0 0.0
        %v2057 = vand.u32 %v241, 4294901760
        %2058 = vmatpush1.msra.mxu0 %v2057
        %2059 = vmatprep.subr.mxu0 0.0
        %v2060 = vand.u32 %v242, 4294901760
        %2061 = vmatpush1.msra.mxu0 %v2060
        %v2062 = vand.u32 %v172, 4294901760
        %2063 = vmatprep.mubr.f32.mxu0 %v2062
        %v2064 = vand.u32 %v171, 4294901760
        %2065 = vmatmul.mubr.f32.gmra.mrb[0].mxu0 %v2064
        %v2066 = vpop.f32.mrb[0].mxu0
        %v2067 = vadd.f32 %v1963, %v2066
        %v2068 = vpop.f32.mrb[0].mxu0
        %2069 = vdwg.mxu0
        %2070 = vmatprep.subr.mxu0 0.0
        %v2071 = vand.u32 %v243, 4294901760
        %2072 = vmatpush1.msra.mxu0 %v2071
        %2073 = vmatprep.subr.mxu0 0.0
        %v2074 = vand.u32 %v244, 4294901760
        %2075 = vmatpush1.msra.mxu0 %v2074
        %2076 = vmatprep.subr.mxu0 0.0
        %v2077 = vand.u32 %v245, 4294901760
        %2078 = vmatpush1.msra.mxu0 %v2077
        %2079 = vmatprep.subr.mxu0 0.0
        %v2080 = vand.u32 %v246, 4294901760
        %2081 = vmatpush1.msra.mxu0 %v2080
        %2082 = vmatprep.subr.mxu0 0.0
        %v2083 = vand.u32 %v247, 4294901760
        %2084 = vmatpush1.msra.mxu0 %v2083
        %2085 = vmatprep.subr.mxu0 0.0
        %v2086 = vand.u32 %v248, 4294901760
        %2087 = vmatpush1.msra.mxu0 %v2086
        %2088 = vmatprep.subr.mxu0 0.0
        %v2089 = vand.u32 %v249, 4294901760
        %2090 = vmatpush1.msra.mxu0 %v2089
        %2091 = vmatprep.subr.mxu0 0.0
        %v2092 = vand.u32 %v250, 4294901760
        %2093 = vmatpush1.msra.mxu0 %v2092
        %2094 = vmatprep.subr.mxu0 0.0
        %v2095 = vand.u32 %v251, 4294901760
        %2096 = vmatpush1.msra.mxu0 %v2095
        %2097 = vmatprep.subr.mxu0 0.0
        %v2098 = vand.u32 %v252, 4294901760
        %2099 = vmatpush1.msra.mxu0 %v2098
        %2100 = vmatprep.subr.mxu0 0.0
        %v2101 = vand.u32 %v253, 4294901760
        %2102 = vmatpush1.msra.mxu0 %v2101
        %2103 = vmatprep.subr.mxu0 0.0
        %v2104 = vand.u32 %v254, 4294901760
        %2105 = vmatpush1.msra.mxu0 %v2104
        %2106 = vmatprep.subr.mxu0 0.0
        %v2107 = vand.u32 %v255, 4294901760
        %2108 = vmatpush1.msra.mxu0 %v2107
        %2109 = vmatprep.subr.mxu0 0.0
        %v2110 = vand.u32 %v256, 4294901760
        %2111 = vmatpush1.msra.mxu0 %v2110
        %2112 = vmatprep.subr.mxu0 0.0
        %v2113 = vand.u32 %v257, 4294901760
        %2114 = vmatpush1.msra.mxu0 %v2113
        %2115 = vmatprep.subr.mxu0 0.0
        %v2116 = vand.u32 %v258, 4294901760
        %2117 = vmatpush1.msra.mxu0 %v2116
        %2118 = vmatprep.subr.mxu0 0.0
        %v2119 = vand.u32 %v259, 4294901760
        %2120 = vmatpush1.msra.mxu0 %v2119
        %2121 = vmatprep.subr.mxu0 0.0
        %v2122 = vand.u32 %v260, 4294901760
        %2123 = vmatpush1.msra.mxu0 %v2122
        %2124 = vmatprep.subr.mxu0 0.0
        %v2125 = vand.u32 %v261, 4294901760
        %2126 = vmatpush1.msra.mxu0 %v2125
        %2127 = vmatprep.subr.mxu0 0.0
        %v2128 = vand.u32 %v262, 4294901760
        %2129 = vmatpush1.msra.mxu0 %v2128
        %2130 = vmatprep.subr.mxu0 0.0
        %v2131 = vand.u32 %v263, 4294901760
        %2132 = vmatpush1.msra.mxu0 %v2131
        %2133 = vmatprep.subr.mxu0 0.0
        %v2134 = vand.u32 %v264, 4294901760
        %2135 = vmatpush1.msra.mxu0 %v2134
        %2136 = vmatprep.subr.mxu0 0.0
        %v2137 = vand.u32 %v265, 4294901760
        %2138 = vmatpush1.msra.mxu0 %v2137
        %2139 = vmatprep.subr.mxu0 0.0
        %v2140 = vand.u32 %v266, 4294901760
        %2141 = vmatpush1.msra.mxu0 %v2140
        %2142 = vmatprep.subr.mxu0 0.0
        %v2143 = vand.u32 %v267, 4294901760
        %2144 = vmatpush1.msra.mxu0 %v2143
        %2145 = vmatprep.subr.mxu0 0.0
        %v2146 = vand.u32 %v268, 4294901760
        %2147 = vmatpush1.msra.mxu0 %v2146
        %2148 = vmatprep.subr.mxu0 0.0
        %v2149 = vand.u32 %v269, 4294901760
        %2150 = vmatpush1.msra.mxu0 %v2149
        %2151 = vmatprep.subr.mxu0 0.0
        %v2152 = vand.u32 %v270, 4294901760
        %2153 = vmatpush1.msra.mxu0 %v2152
        %2154 = vmatprep.subr.mxu0 0.0
        %v2155 = vand.u32 %v271, 4294901760
        %2156 = vmatpush1.msra.mxu0 %v2155
        %2157 = vmatprep.subr.mxu0 0.0
        %v2158 = vand.u32 %v272, 4294901760
        %2159 = vmatpush1.msra.mxu0 %v2158
        %2160 = vmatprep.subr.mxu0 0.0
        %v2161 = vand.u32 %v273, 4294901760
        %2162 = vmatpush1.msra.mxu0 %v2161
        %2163 = vmatprep.subr.mxu0 0.0
        %v2164 = vand.u32 %v274, 4294901760
        %2165 = vmatpush1.msra.mxu0 %v2164
        %v2166 = vand.u32 %v174, 4294901760
        %v2167 = vsub.f32 %v174, %v2166
        %v2168 = vand.u32 %v2167, 4294901760
        %v2169 = vsub.f32 %v2167, %v2168
        %v2170 = vand.u32 %v2169, 4294901760
        %2171 = vmatprep.mubr.f32.mxu0 %v2170
        %v2172 = vand.u32 %v173, 4294901760
        %v2173 = vsub.f32 %v173, %v2172
        %v2174 = vand.u32 %v2173, 4294901760
        %v2175 = vsub.f32 %v2173, %v2174
        %v2176 = vand.u32 %v2175, 4294901760
        %2177 = vmatmul.mubr.f32.gmra.mrb[0].mxu0 %v2176
        %v2178 = vpop.f32.mrb[0].mxu0
        %v2179 = vadd.f32 %v2067, %v2178
        %v2180 = vpop.f32.mrb[0].mxu0
        %2181 = vdwg.mxu0
        %2182 = vmatprep.subr.mxu0 0.0
        %v2183 = vand.u32 %v243, 4294901760
        %v2184 = vsub.f32 %v243, %v2183
        %v2185 = vand.u32 %v2184, 4294901760
        %v2186 = vsub.f32 %v2184, %v2185
        %v2187 = vand.u32 %v2186, 4294901760
        %2188 = vmatpush1.msra.mxu0 %v2187
        %2189 = vmatprep.subr.mxu0 0.0
        %v2190 = vand.u32 %v244, 4294901760
        %v2191 = vsub.f32 %v244, %v2190
        %v2192 = vand.u32 %v2191, 4294901760
        %v2193 = vsub.f32 %v2191, %v2192
        %v2194 = vand.u32 %v2193, 4294901760
        %2195 = vmatpush1.msra.mxu0 %v2194
        %2196 = vmatprep.subr.mxu0 0.0
        %v2197 = vand.u32 %v245, 4294901760
        %v2198 = vsub.f32 %v245, %v2197
        %v2199 = vand.u32 %v2198, 4294901760
        %v2200 = vsub.f32 %v2198, %v2199
        %v2201 = vand.u32 %v2200, 4294901760
        %2202 = vmatpush1.msra.mxu0 %v2201
        %2203 = vmatprep.subr.mxu0 0.0
        %v2204 = vand.u32 %v246, 4294901760
        %v2205 = vsub.f32 %v246, %v2204
        %v2206 = vand.u32 %v2205, 4294901760
        %v2207 = vsub.f32 %v2205, %v2206
        %v2208 = vand.u32 %v2207, 4294901760
        %2209 = vmatpush1.msra.mxu0 %v2208
        %2210 = vmatprep.subr.mxu0 0.0
        %v2211 = vand.u32 %v247, 4294901760
        %v2212 = vsub.f32 %v247, %v2211
        %v2213 = vand.u32 %v2212, 4294901760
        %v2214 = vsub.f32 %v2212, %v2213
        %v2215 = vand.u32 %v2214, 4294901760
        %2216 = vmatpush1.msra.mxu0 %v2215
        %2217 = vmatprep.subr.mxu0 0.0
        %v2218 = vand.u32 %v248, 4294901760
        %v2219 = vsub.f32 %v248, %v2218
        %v2220 = vand.u32 %v2219, 4294901760
        %v2221 = vsub.f32 %v2219, %v2220
        %v2222 = vand.u32 %v2221, 4294901760
        %2223 = vmatpush1.msra.mxu0 %v2222
        %2224 = vmatprep.subr.mxu0 0.0
        %v2225 = vand.u32 %v249, 4294901760
        %v2226 = vsub.f32 %v249, %v2225
        %v2227 = vand.u32 %v2226, 4294901760
        %v2228 = vsub.f32 %v2226, %v2227
        %v2229 = vand.u32 %v2228, 4294901760
        %2230 = vmatpush1.msra.mxu0 %v2229
        %2231 = vmatprep.subr.mxu0 0.0
        %v2232 = vand.u32 %v250, 4294901760
        %v2233 = vsub.f32 %v250, %v2232
        %v2234 = vand.u32 %v2233, 4294901760
        %v2235 = vsub.f32 %v2233, %v2234
        %v2236 = vand.u32 %v2235, 4294901760
        %2237 = vmatpush1.msra.mxu0 %v2236
        %2238 = vmatprep.subr.mxu0 0.0
        %v2239 = vand.u32 %v251, 4294901760
        %v2240 = vsub.f32 %v251, %v2239
        %v2241 = vand.u32 %v2240, 4294901760
        %v2242 = vsub.f32 %v2240, %v2241
        %v2243 = vand.u32 %v2242, 4294901760
        %2244 = vmatpush1.msra.mxu0 %v2243
        %2245 = vmatprep.subr.mxu0 0.0
        %v2246 = vand.u32 %v252, 4294901760
        %v2247 = vsub.f32 %v252, %v2246
        %v2248 = vand.u32 %v2247, 4294901760
        %v2249 = vsub.f32 %v2247, %v2248
        %v2250 = vand.u32 %v2249, 4294901760
        %2251 = vmatpush1.msra.mxu0 %v2250
        %2252 = vmatprep.subr.mxu0 0.0
        %v2253 = vand.u32 %v253, 4294901760
        %v2254 = vsub.f32 %v253, %v2253
        %v2255 = vand.u32 %v2254, 4294901760
        %v2256 = vsub.f32 %v2254, %v2255
        %v2257 = vand.u32 %v2256, 4294901760
        %2258 = vmatpush1.msra.mxu0 %v2257
        %2259 = vmatprep.subr.mxu0 0.0
        %v2260 = vand.u32 %v254, 4294901760
        %v2261 = vsub.f32 %v254, %v2260
        %v2262 = vand.u32 %v2261, 4294901760
        %v2263 = vsub.f32 %v2261, %v2262
        %v2264 = vand.u32 %v2263, 4294901760
        %2265 = vmatpush1.msra.mxu0 %v2264
        %2266 = vmatprep.subr.mxu0 0.0
        %v2267 = vand.u32 %v255, 4294901760
        %v2268 = vsub.f32 %v255, %v2267
        %v2269 = vand.u32 %v2268, 4294901760
        %v2270 = vsub.f32 %v2268, %v2269
        %v2271 = vand.u32 %v2270, 4294901760
        %2272 = vmatpush1.msra.mxu0 %v2271
        %2273 = vmatprep.subr.mxu0 0.0
        %v2274 = vand.u32 %v256, 4294901760
        %v2275 = vsub.f32 %v256, %v2274
        %v2276 = vand.u32 %v2275, 4294901760
        %v2277 = vsub.f32 %v2275, %v2276
        %v2278 = vand.u32 %v2277, 4294901760
        %2279 = vmatpush1.msra.mxu0 %v2278
        %2280 = vmatprep.subr.mxu0 0.0
        %v2281 = vand.u32 %v257, 4294901760
        %v2282 = vsub.f32 %v257, %v2281
        %v2283 = vand.u32 %v2282, 4294901760
        %v2284 = vsub.f32 %v2282, %v2283
        %v2285 = vand.u32 %v2284, 4294901760
        %2286 = vmatpush1.msra.mxu0 %v2285
        %2287 = vmatprep.subr.mxu0 0.0
        %v2288 = vand.u32 %v258, 4294901760
        %v2289 = vsub.f32 %v258, %v2288
        %v2290 = vand.u32 %v2289, 4294901760
        %v2291 = vsub.f32 %v2289, %v2290
        %v2292 = vand.u32 %v2291, 4294901760
        %2293 = vmatpush1.msra.mxu0 %v2292
        %2294 = vmatprep.subr.mxu0 0.0
        %v2295 = vand.u32 %v259, 4294901760
        %v2296 = vsub.f32 %v259, %v2295
        %v2297 = vand.u32 %v2296, 4294901760
        %v2298 = vsub.f32 %v2296, %v2297
        %v2299 = vand.u32 %v2298, 4294901760
        %2300 = vmatpush1.msra.mxu0 %v2299
        %2301 = vmatprep.subr.mxu0 0.0
        %v2302 = vand.u32 %v260, 4294901760
        %v2303 = vsub.f32 %v260, %v2302
        %v2304 = vand.u32 %v2303, 4294901760
        %v2305 = vsub.f32 %v2303, %v2304
        %v2306 = vand.u32 %v2305, 4294901760
        %2307 = vmatpush1.msra.mxu0 %v2306
        %2308 = vmatprep.subr.mxu0 0.0
        %v2309 = vand.u32 %v261, 4294901760
        %v2310 = vsub.f32 %v261, %v2309
        %v2311 = vand.u32 %v2310, 4294901760
        %v2312 = vsub.f32 %v2310, %v2311
        %v2313 = vand.u32 %v2312, 4294901760
        %2314 = vmatpush1.msra.mxu0 %v2313
        %2315 = vmatprep.subr.mxu0 0.0
        %v2316 = vand.u32 %v262, 4294901760
        %v2317 = vsub.f32 %v262, %v2316
        %v2318 = vand.u32 %v2317, 4294901760
        %v2319 = vsub.f32 %v2317, %v2318
        %v2320 = vand.u32 %v2319, 4294901760
        %2321 = vmatpush1.msra.mxu0 %v2320
        %2322 = vmatprep.subr.mxu0 0.0
        %v2323 = vand.u32 %v263, 4294901760
        %v2324 = vsub.f32 %v263, %v2323
        %v2325 = vand.u32 %v2324, 4294901760
        %v2326 = vsub.f32 %v2324, %v2325
        %v2327 = vand.u32 %v2326, 4294901760
        %2328 = vmatpush1.msra.mxu0 %v2327
        %2329 = vmatprep.subr.mxu0 0.0
        %v2330 = vand.u32 %v264, 4294901760
        %v2331 = vsub.f32 %v264, %v2330
        %v2332 = vand.u32 %v2331, 4294901760
        %v2333 = vsub.f32 %v2331, %v2332
        %v2334 = vand.u32 %v2333, 4294901760
        %2335 = vmatpush1.msra.mxu0 %v2334
        %2336 = vmatprep.subr.mxu0 0.0
        %v2337 = vand.u32 %v265, 4294901760
        %v2338 = vsub.f32 %v265, %v2337
        %v2339 = vand.u32 %v2338, 4294901760
        %v2340 = vsub.f32 %v2338, %v2339
        %v2341 = vand.u32 %v2340, 4294901760
        %2342 = vmatpush1.msra.mxu0 %v2341
        %2343 = vmatprep.subr.mxu0 0.0
        %v2344 = vand.u32 %v266, 4294901760
        %v2345 = vsub.f32 %v266, %v2344
        %v2346 = vand.u32 %v2345, 4294901760
        %v2347 = vsub.f32 %v2345, %v2346
        %v2348 = vand.u32 %v2347, 4294901760
        %2349 = vmatpush1.msra.mxu0 %v2348
        %2350 = vmatprep.subr.mxu0 0.0
        %v2351 = vand.u32 %v267, 4294901760
        %v2352 = vsub.f32 %v267, %v2351
        %v2353 = vand.u32 %v2352, 4294901760
        %v2354 = vsub.f32 %v2352, %v2353
        %v2355 = vand.u32 %v2354, 4294901760
        %2356 = vmatpush1.msra.mxu0 %v2355
        %2357 = vmatprep.subr.mxu0 0.0
        %v2358 = vand.u32 %v268, 4294901760
        %v2359 = vsub.f32 %v268, %v2358
        %v2360 = vand.u32 %v2359, 4294901760
        %v2361 = vsub.f32 %v2359, %v2360
        %v2362 = vand.u32 %v2361, 4294901760
        %2363 = vmatpush1.msra.mxu0 %v2362
        %2364 = vmatprep.subr.mxu0 0.0
        %v2365 = vand.u32 %v269, 4294901760
        %v2366 = vsub.f32 %v269, %v2365
        %v2367 = vand.u32 %v2366, 4294901760
        %v2368 = vsub.f32 %v2366, %v2367
        %v2369 = vand.u32 %v2368, 4294901760
        %2370 = vmatpush1.msra.mxu0 %v2369
        %2371 = vmatprep.subr.mxu0 0.0
        %v2372 = vand.u32 %v270, 4294901760
        %v2373 = vsub.f32 %v270, %v2372
        %v2374 = vand.u32 %v2373, 4294901760
        %v2375 = vsub.f32 %v2373, %v2374
        %v2376 = vand.u32 %v2375, 4294901760
        %2377 = vmatpush1.msra.mxu0 %v2376
        %2378 = vmatprep.subr.mxu0 0.0
        %v2379 = vand.u32 %v271, 4294901760
        %v2380 = vsub.f32 %v271, %v2379
        %v2381 = vand.u32 %v2380, 4294901760
        %v2382 = vsub.f32 %v2380, %v2381
        %v2383 = vand.u32 %v2382, 4294901760
        %2384 = vmatpush1.msra.mxu0 %v2383
        %2385 = vmatprep.subr.mxu0 0.0
        %v2386 = vand.u32 %v272, 4294901760
        %v2387 = vsub.f32 %v272, %v2386
        %v2388 = vand.u32 %v2387, 4294901760
        %v2389 = vsub.f32 %v2387, %v2388
        %v2390 = vand.u32 %v2389, 4294901760
        %2391 = vmatpush1.msra.mxu0 %v2390
        %2392 = vmatprep.subr.mxu0 0.0
        %v2393 = vand.u32 %v273, 4294901760
        %v2394 = vsub.f32 %v273, %v2393
        %v2395 = vand.u32 %v2394, 4294901760
        %v2396 = vsub.f32 %v2394, %v2395
        %v2397 = vand.u32 %v2396, 4294901760
        %2398 = vmatpush1.msra.mxu0 %v2397
        %2399 = vmatprep.subr.mxu0 0.0
        %v2400 = vand.u32 %v274, 4294901760
        %v2401 = vsub.f32 %v274, %v2400
        %v2402 = vand.u32 %v2401, 4294901760
        %v2403 = vsub.f32 %v2401, %v2402
        %v2404 = vand.u32 %v2403, 4294901760
        %2405 = vmatpush1.msra.mxu0 %v2404
        %v2406 = vand.u32 %v174, 4294901760
        %2407 = vmatprep.mubr.f32.mxu0 %v2406
        %v2408 = vand.u32 %v173, 4294901760
        %2409 = vmatmul.mubr.f32.gmra.mrb[0].mxu0 %v2408
        %v2410 = vpop.f32.mrb[0].mxu0
        %v2411 = vadd.f32 %v2179, %v2410
        %v2412 = vpop.f32.mrb[0].mxu0
        %2413 = vdwg.mxu0
        %2414 = vmatprep.subr.mxu0 0.0
        %v2415 = vand.u32 %v243, 4294901760
        %v2416 = vsub.f32 %v243, %v2415
        %2417 = vmatpush1.msra.mxu0 %v2416
        %2418 = vmatprep.subr.mxu0 0.0
        %v2419 = vand.u32 %v244, 4294901760
        %v2420 = vsub.f32 %v244, %v2419
        %2421 = vmatpush1.msra.mxu0 %v2420
        %2422 = vmatprep.subr.mxu0 0.0
        %v2423 = vand.u32 %v245, 4294901760
        %v2424 = vsub.f32 %v245, %v2423
        %2425 = vmatpush1.msra.mxu0 %v2424
        %2426 = vmatprep.subr.mxu0 0.0
        %v2427 = vand.u32 %v246, 4294901760
        %v2428 = vsub.f32 %v246, %v2427
        %2429 = vmatpush1.msra.mxu0 %v2428
        %2430 = vmatprep.subr.mxu0 0.0
        %v2431 = vand.u32 %v247, 4294901760
        %v2432 = vsub.f32 %v247, %v2431
        %2433 = vmatpush1.msra.mxu0 %v2432
        %2434 = vmatprep.subr.mxu0 0.0
        %v2435 = vand.u32 %v248, 4294901760
        %v2436 = vsub.f32 %v248, %v2435
        %2437 = vmatpush1.msra.mxu0 %v2436
        %2438 = vmatprep.subr.mxu0 0.0
        %v2439 = vand.u32 %v249, 4294901760
        %v2440 = vsub.f32 %v249, %v2439
        %2441 = vmatpush1.msra.mxu0 %v2440
        %2442 = vmatprep.subr.mxu0 0.0
        %v2443 = vand.u32 %v250, 4294901760
        %v2444 = vsub.f32 %v250, %v2443
        %2445 = vmatpush1.msra.mxu0 %v2444
        %2446 = vmatprep.subr.mxu0 0.0
        %v2447 = vand.u32 %v251, 4294901760
        %v2448 = vsub.f32 %v251, %v2447
        %2449 = vmatpush1.msra.mxu0 %v2448
        %2450 = vmatprep.subr.mxu0 0.0
        %v2451 = vand.u32 %v252, 4294901760
        %v2452 = vsub.f32 %v252, %v2451
        %2453 = vmatpush1.msra.mxu0 %v2452
        %2454 = vmatprep.subr.mxu0 0.0
        %v2455 = vand.u32 %v253, 4294901760
        %v2456 = vsub.f32 %v253, %v2455
        %2457 = vmatpush1.msra.mxu0 %v2456
        %2458 = vmatprep.subr.mxu0 0.0
        %v2459 = vand.u32 %v254, 4294901760
        %v2460 = vsub.f32 %v254, %v2459
        %2461 = vmatpush1.msra.mxu0 %v2460
        %2462 = vmatprep.subr.mxu0 0.0
        %v2463 = vand.u32 %v255, 4294901760
        %v2464 = vsub.f32 %v255, %v2463
        %2465 = vmatpush1.msra.mxu0 %v2464
        %2466 = vmatprep.subr.mxu0 0.0
        %v2467 = vand.u32 %v256, 4294901760
        %v2468 = vsub.f32 %v256, %v2467
        %2469 = vmatpush1.msra.mxu0 %v2468
        %2470 = vmatprep.subr.mxu0 0.0
        %v2471 = vand.u32 %v257, 4294901760
        %v2472 = vsub.f32 %v257, %v2471
        %2473 = vmatpush1.msra.mxu0 %v2472
        %2474 = vmatprep.subr.mxu0 0.0
        %v2475 = vand.u32 %v258, 4294901760
        %v2476 = vsub.f32 %v258, %v2475
        %2477 = vmatpush1.msra.mxu0 %v2476
        %2478 = vmatprep.subr.mxu0 0.0
        %v2479 = vand.u32 %v259, 4294901760
        %v2480 = vsub.f32 %v259, %v2479
        %2481 = vmatpush1.msra.mxu0 %v2480
        %2482 = vmatprep.subr.mxu0 0.0
        %v2483 = vand.u32 %v260, 4294901760
        %v2484 = vsub.f32 %v260, %v2483
        %2485 = vmatpush1.msra.mxu0 %v2484
        %2486 = vmatprep.subr.mxu0 0.0
        %v2487 = vand.u32 %v261, 4294901760
        %v2488 = vsub.f32 %v261, %v2487
        %2489 = vmatpush1.msra.mxu0 %v2488
        %2490 = vmatprep.subr.mxu0 0.0
        %v2491 = vand.u32 %v262, 4294901760
        %v2492 = vsub.f32 %v262, %v2491
        %2493 = vmatpush1.msra.mxu0 %v2492
        %2494 = vmatprep.subr.mxu0 0.0
        %v2495 = vand.u32 %v263, 4294901760
        %v2496 = vsub.f32 %v263, %v2495
        %2497 = vmatpush1.msra.mxu0 %v2496
        %2498 = vmatprep.subr.mxu0 0.0
        %v2499 = vand.u32 %v264, 4294901760
        %v2500 = vsub.f32 %v264, %v2499
        %2501 = vmatpush1.msra.mxu0 %v2500
        %2502 = vmatprep.subr.mxu0 0.0
        %v2503 = vand.u32 %v265, 4294901760
        %v2504 = vsub.f32 %v265, %v2503
        %2505 = vmatpush1.msra.mxu0 %v2504
        %2506 = vmatprep.subr.mxu0 0.0
        %v2507 = vand.u32 %v266, 4294901760
        %v2508 = vsub.f32 %v266, %v2507
        %2509 = vmatpush1.msra.mxu0 %v2508
        %2510 = vmatprep.subr.mxu0 0.0
        %v2511 = vand.u32 %v267, 4294901760
        %v2512 = vsub.f32 %v267, %v2511
        %2513 = vmatpush1.msra.mxu0 %v2512
        %2514 = vmatprep.subr.mxu0 0.0
        %v2515 = vand.u32 %v268, 4294901760
        %v2516 = vsub.f32 %v268, %v2515
        %2517 = vmatpush1.msra.mxu0 %v2516
        %2518 = vmatprep.subr.mxu0 0.0
        %v2519 = vand.u32 %v269, 4294901760
        %v2520 = vsub.f32 %v269, %v2519
        %2521 = vmatpush1.msra.mxu0 %v2520
        %2522 = vmatprep.subr.mxu0 0.0
        %v2523 = vand.u32 %v270, 4294901760
        %v2524 = vsub.f32 %v270, %v2523
        %2525 = vmatpush1.msra.mxu0 %v2524
        %2526 = vmatprep.subr.mxu0 0.0
        %v2527 = vand.u32 %v271, 4294901760
        %v2528 = vsub.f32 %v271, %v2527
        %2529 = vmatpush1.msra.mxu0 %v2528
        %2530 = vmatprep.subr.mxu0 0.0
        %v2531 = vand.u32 %v272, 4294901760
        %v2532 = vsub.f32 %v272, %v2531
        %2533 = vmatpush1.msra.mxu0 %v2532
        %2534 = vmatprep.subr.mxu0 0.0
        %v2535 = vand.u32 %v273, 4294901760
        %v2536 = vsub.f32 %v273, %v2535
        %2537 = vmatpush1.msra.mxu0 %v2536
        %2538 = vmatprep.subr.mxu0 0.0
        %v2539 = vand.u32 %v274, 4294901760
        %v2540 = vsub.f32 %v274, %v2539
        %2541 = vmatpush1.msra.mxu0 %v2540
        %v2542 = vand.u32 %v174, 4294901760
        %v2543 = vsub.f32 %v174, %v2542
        %2544 = vmatprep.mubr.f32.mxu0 %v2543
        %v2545 = vand.u32 %v173, 4294901760
        %v2546 = vsub.f32 %v173, %v2545
        %2547 = vmatmul.mubr.f32.gmra.mrb[0].mxu0 %v2546
        %v2548 = vpop.f32.mrb[0].mxu0
        %v2549 = vadd.f32 %v2411, %v2548
        %v2550 = vpop.f32.mrb[0].mxu0
        %2551 = vdwg.mxu0
        %2552 = vmatprep.subr.mxu0 0.0
        %v2553 = vand.u32 %v243, 4294901760
        %2554 = vmatpush1.msra.mxu0 %v2553
        %2555 = vmatprep.subr.mxu0 0.0
        %v2556 = vand.u32 %v244, 4294901760
        %2557 = vmatpush1.msra.mxu0 %v2556
        %2558 = vmatprep.subr.mxu0 0.0
        %v2559 = vand.u32 %v245, 4294901760
        %2560 = vmatpush1.msra.mxu0 %v2559
        %2561 = vmatprep.subr.mxu0 0.0
        %v2562 = vand.u32 %v246, 4294901760
        %2563 = vmatpush1.msra.mxu0 %v2562
        %2564 = vmatprep.subr.mxu0 0.0
        %v2565 = vand.u32 %v247, 4294901760
        %2566 = vmatpush1.msra.mxu0 %v2565
        %2567 = vmatprep.subr.mxu0 0.0
        %v2568 = vand.u32 %v248, 4294901760
        %2569 = vmatpush1.msra.mxu0 %v2568
        %2570 = vmatprep.subr.mxu0 0.0
        %v2571 = vand.u32 %v249, 4294901760
        %2572 = vmatpush1.msra.mxu0 %v2571
        %2573 = vmatprep.subr.mxu0 0.0
        %v2574 = vand.u32 %v250, 4294901760
        %2575 = vmatpush1.msra.mxu0 %v2574
        %2576 = vmatprep.subr.mxu0 0.0
        %v2577 = vand.u32 %v251, 4294901760
        %2578 = vmatpush1.msra.mxu0 %v2577
        %2579 = vmatprep.subr.mxu0 0.0
        %v2580 = vand.u32 %v252, 4294901760
        %2581 = vmatpush1.msra.mxu0 %v2580
        %2582 = vmatprep.subr.mxu0 0.0
        %v2583 = vand.u32 %v253, 4294901760
        %2584 = vmatpush1.msra.mxu0 %v2583
        %2585 = vmatprep.subr.mxu0 0.0
        %v2586 = vand.u32 %v254, 4294901760
        %2587 = vmatpush1.msra.mxu0 %v2586
        %2588 = vmatprep.subr.mxu0 0.0
        %v2589 = vand.u32 %v255, 4294901760
        %2590 = vmatpush1.msra.mxu0 %v2589
        %2591 = vmatprep.subr.mxu0 0.0
        %v2592 = vand.u32 %v256, 4294901760
        %2593 = vmatpush1.msra.mxu0 %v2592
        %2594 = vmatprep.subr.mxu0 0.0
        %v2595 = vand.u32 %v257, 4294901760
        %2596 = vmatpush1.msra.mxu0 %v2595
        %2597 = vmatprep.subr.mxu0 0.0
        %v2598 = vand.u32 %v258, 4294901760
        %2599 = vmatpush1.msra.mxu0 %v2598
        %2600 = vmatprep.subr.mxu0 0.0
        %v2601 = vand.u32 %v259, 4294901760
        %2602 = vmatpush1.msra.mxu0 %v2601
        %2603 = vmatprep.subr.mxu0 0.0
        %v2604 = vand.u32 %v260, 4294901760
        %2605 = vmatpush1.msra.mxu0 %v2604
        %2606 = vmatprep.subr.mxu0 0.0
        %v2607 = vand.u32 %v261, 4294901760
        %2608 = vmatpush1.msra.mxu0 %v2607
        %2609 = vmatprep.subr.mxu0 0.0
        %v2610 = vand.u32 %v262, 4294901760
        %2611 = vmatpush1.msra.mxu0 %v2610
        %2612 = vmatprep.subr.mxu0 0.0
        %v2613 = vand.u32 %v263, 4294901760
        %2614 = vmatpush1.msra.mxu0 %v2613
        %2615 = vmatprep.subr.mxu0 0.0
        %v2616 = vand.u32 %v264, 4294901760
        %2617 = vmatpush1.msra.mxu0 %v2616
        %2618 = vmatprep.subr.mxu0 0.0
        %v2619 = vand.u32 %v265, 4294901760
        %2620 = vmatpush1.msra.mxu0 %v2619
        %2621 = vmatprep.subr.mxu0 0.0
        %v2622 = vand.u32 %v266, 4294901760
        %2623 = vmatpush1.msra.mxu0 %v2622
        %2624 = vmatprep.subr.mxu0 0.0
        %v2625 = vand.u32 %v267, 4294901760
        %2626 = vmatpush1.msra.mxu0 %v2625
        %2627 = vmatprep.subr.mxu0 0.0
        %v2628 = vand.u32 %v268, 4294901760
        %2629 = vmatpush1.msra.mxu0 %v2628
        %2630 = vmatprep.subr.mxu0 0.0
        %v2631 = vand.u32 %v269, 4294901760
        %2632 = vmatpush1.msra.mxu0 %v2631
        %2633 = vmatprep.subr.mxu0 0.0
        %v2634 = vand.u32 %v270, 4294901760
        %2635 = vmatpush1.msra.mxu0 %v2634
        %2636 = vmatprep.subr.mxu0 0.0
        %v2637 = vand.u32 %v271, 4294901760
        %2638 = vmatpush1.msra.mxu0 %v2637
        %2639 = vmatprep.subr.mxu0 0.0
        %v2640 = vand.u32 %v272, 4294901760
        %2641 = vmatpush1.msra.mxu0 %v2640
        %2642 = vmatprep.subr.mxu0 0.0
        %v2643 = vand.u32 %v273, 4294901760
        %2644 = vmatpush1.msra.mxu0 %v2643
        %2645 = vmatprep.subr.mxu0 0.0
        %v2646 = vand.u32 %v274, 4294901760
        %2647 = vmatpush1.msra.mxu0 %v2646
        %v2648 = vand.u32 %v174, 4294901760
        %v2649 = vsub.f32 %v174, %v2648
        %v2650 = vand.u32 %v2649, 4294901760
        %2651 = vmatprep.mubr.f32.mxu0 %v2650
        %v2652 = vand.u32 %v173, 4294901760
        %v2653 = vsub.f32 %v173, %v2652
        %v2654 = vand.u32 %v2653, 4294901760
        %2655 = vmatmul.mubr.f32.gmra.mrb[0].mxu0 %v2654
        %v2656 = vpop.f32.mrb[0].mxu0
        %v2657 = vadd.f32 %v2549, %v2656
        %v2658 = vpop.f32.mrb[0].mxu0
        %2659 = vdwg.mxu0
        %2660 = vmatprep.subr.mxu0 0.0
        %v2661 = vand.u32 %v243, 4294901760
        %v2662 = vsub.f32 %v243, %v2661
        %v2663 = vand.u32 %v2662, 4294901760
        %2664 = vmatpush1.msra.mxu0 %v2663
        %2665 = vmatprep.subr.mxu0 0.0
        %v2666 = vand.u32 %v244, 4294901760
        %v2667 = vsub.f32 %v244, %v2666
        %v2668 = vand.u32 %v2667, 4294901760
        %2669 = vmatpush1.msra.mxu0 %v2668
        %2670 = vmatprep.subr.mxu0 0.0
        %v2671 = vand.u32 %v245, 4294901760
        %v2672 = vsub.f32 %v245, %v2671
        %v2673 = vand.u32 %v2672, 4294901760
        %2674 = vmatpush1.msra.mxu0 %v2673
        %2675 = vmatprep.subr.mxu0 0.0
        %v2676 = vand.u32 %v246, 4294901760
        %v2677 = vsub.f32 %v246, %v2676
        %v2678 = vand.u32 %v2677, 4294901760
        %2679 = vmatpush1.msra.mxu0 %v2678
        %2680 = vmatprep.subr.mxu0 0.0
        %v2681 = vand.u32 %v247, 4294901760
        %v2682 = vsub.f32 %v247, %v2681
        %v2683 = vand.u32 %v2682, 4294901760
        %2684 = vmatpush1.msra.mxu0 %v2683
        %2685 = vmatprep.subr.mxu0 0.0
        %v2686 = vand.u32 %v248, 4294901760
        %v2687 = vsub.f32 %v248, %v2686
        %v2688 = vand.u32 %v2687, 4294901760
        %2689 = vmatpush1.msra.mxu0 %v2688
        %2690 = vmatprep.subr.mxu0 0.0
        %v2691 = vand.u32 %v249, 4294901760
        %v2692 = vsub.f32 %v249, %v2691
        %v2693 = vand.u32 %v2692, 4294901760
        %2694 = vmatpush1.msra.mxu0 %v2693
        %2695 = vmatprep.subr.mxu0 0.0
        %v2696 = vand.u32 %v250, 4294901760
        %v2697 = vsub.f32 %v250, %v2696
        %v2698 = vand.u32 %v2697, 4294901760
        %2699 = vmatpush1.msra.mxu0 %v2698
        %2700 = vmatprep.subr.mxu0 0.0
        %v2701 = vand.u32 %v251, 4294901760
        %v2702 = vsub.f32 %v251, %v2701
        %v2703 = vand.u32 %v2702, 4294901760
        %2704 = vmatpush1.msra.mxu0 %v2703
        %2705 = vmatprep.subr.mxu0 0.0
        %v2706 = vand.u32 %v252, 4294901760
        %v2707 = vsub.f32 %v252, %v2706
        %v2708 = vand.u32 %v2707, 4294901760
        %2709 = vmatpush1.msra.mxu0 %v2708
        %2710 = vmatprep.subr.mxu0 0.0
        %v2711 = vand.u32 %v253, 4294901760
        %v2712 = vsub.f32 %v253, %v2711
        %v2713 = vand.u32 %v2712, 4294901760
        %2714 = vmatpush1.msra.mxu0 %v2713
        %2715 = vmatprep.subr.mxu0 0.0
        %v2716 = vand.u32 %v254, 4294901760
        %v2717 = vsub.f32 %v254, %v2716
        %v2718 = vand.u32 %v2717, 4294901760
        %2719 = vmatpush1.msra.mxu0 %v2718
        %2720 = vmatprep.subr.mxu0 0.0
        %v2721 = vand.u32 %v255, 4294901760
        %v2722 = vsub.f32 %v255, %v2721
        %v2723 = vand.u32 %v2722, 4294901760
        %2724 = vmatpush1.msra.mxu0 %v2723
        %2725 = vmatprep.subr.mxu0 0.0
        %v2726 = vand.u32 %v256, 4294901760
        %v2727 = vsub.f32 %v256, %v2726
        %v2728 = vand.u32 %v2727, 4294901760
        %2729 = vmatpush1.msra.mxu0 %v2728
        %2730 = vmatprep.subr.mxu0 0.0
        %v2731 = vand.u32 %v257, 4294901760
        %v2732 = vsub.f32 %v257, %v2731
        %v2733 = vand.u32 %v2732, 4294901760
        %2734 = vmatpush1.msra.mxu0 %v2733
        %2735 = vmatprep.subr.mxu0 0.0
        %v2736 = vand.u32 %v258, 4294901760
        %v2737 = vsub.f32 %v258, %v2736
        %v2738 = vand.u32 %v2737, 4294901760
        %2739 = vmatpush1.msra.mxu0 %v2738
        %2740 = vmatprep.subr.mxu0 0.0
        %v2741 = vand.u32 %v259, 4294901760
        %v2742 = vsub.f32 %v259, %v2741
        %v2743 = vand.u32 %v2742, 4294901760
        %2744 = vmatpush1.msra.mxu0 %v2743
        %2745 = vmatprep.subr.mxu0 0.0
        %v2746 = vand.u32 %v260, 4294901760
        %v2747 = vsub.f32 %v260, %v2746
        %v2748 = vand.u32 %v2747, 4294901760
        %2749 = vmatpush1.msra.mxu0 %v2748
        %2750 = vmatprep.subr.mxu0 0.0
        %v2751 = vand.u32 %v261, 4294901760
        %v2752 = vsub.f32 %v261, %v2751
        %v2753 = vand.u32 %v2752, 4294901760
        %2754 = vmatpush1.msra.mxu0 %v2753
        %2755 = vmatprep.subr.mxu0 0.0
        %v2756 = vand.u32 %v262, 4294901760
        %v2757 = vsub.f32 %v262, %v2756
        %v2758 = vand.u32 %v2757, 4294901760
        %2759 = vmatpush1.msra.mxu0 %v2758
        %2760 = vmatprep.subr.mxu0 0.0
        %v2761 = vand.u32 %v263, 4294901760
        %v2762 = vsub.f32 %v263, %v2761
        %v2763 = vand.u32 %v2762, 4294901760
        %2764 = vmatpush1.msra.mxu0 %v2763
        %2765 = vmatprep.subr.mxu0 0.0
        %v2766 = vand.u32 %v264, 4294901760
        %v2767 = vsub.f32 %v264, %v2766
        %v2768 = vand.u32 %v2767, 4294901760
        %2769 = vmatpush1.msra.mxu0 %v2768
        %2770 = vmatprep.subr.mxu0 0.0
        %v2771 = vand.u32 %v265, 4294901760
        %v2772 = vsub.f32 %v265, %v2771
        %v2773 = vand.u32 %v2772, 4294901760
        %2774 = vmatpush1.msra.mxu0 %v2773
        %2775 = vmatprep.subr.mxu0 0.0
        %v2776 = vand.u32 %v266, 4294901760
        %v2777 = vsub.f32 %v266, %v2776
        %v2778 = vand.u32 %v2777, 4294901760
        %2779 = vmatpush1.msra.mxu0 %v2778
        %2780 = vmatprep.subr.mxu0 0.0
        %v2781 = vand.u32 %v267, 4294901760
        %v2782 = vsub.f32 %v267, %v2781
        %v2783 = vand.u32 %v2782, 4294901760
        %2784 = vmatpush1.msra.mxu0 %v2783
        %2785 = vmatprep.subr.mxu0 0.0
        %v2786 = vand.u32 %v268, 4294901760
        %v2787 = vsub.f32 %v268, %v2786
        %v2788 = vand.u32 %v2787, 4294901760
        %2789 = vmatpush1.msra.mxu0 %v2788
        %2790 = vmatprep.subr.mxu0 0.0
        %v2791 = vand.u32 %v269, 4294901760
        %v2792 = vsub.f32 %v269, %v2791
        %v2793 = vand.u32 %v2792, 4294901760
        %2794 = vmatpush1.msra.mxu0 %v2793
        %2795 = vmatprep.subr.mxu0 0.0
        %v2796 = vand.u32 %v270, 4294901760
        %v2797 = vsub.f32 %v270, %v2796
        %v2798 = vand.u32 %v2797, 4294901760
        %2799 = vmatpush1.msra.mxu0 %v2798
        %2800 = vmatprep.subr.mxu0 0.0
        %v2801 = vand.u32 %v271, 4294901760
        %v2802 = vsub.f32 %v271, %v2801
        %v2803 = vand.u32 %v2802, 4294901760
        %2804 = vmatpush1.msra.mxu0 %v2803
        %2805 = vmatprep.subr.mxu0 0.0
        %v2806 = vand.u32 %v272, 4294901760
        %v2807 = vsub.f32 %v272, %v2806
        %v2808 = vand.u32 %v2807, 4294901760
        %2809 = vmatpush1.msra.mxu0 %v2808
        %2810 = vmatprep.subr.mxu0 0.0
        %v2811 = vand.u32 %v273, 4294901760
        %v2812 = vsub.f32 %v273, %v2811
        %v2813 = vand.u32 %v2812, 4294901760
        %2814 = vmatpush1.msra.mxu0 %v2813
        %2815 = vmatprep.subr.mxu0 0.0
        %v2816 = vand.u32 %v274, 4294901760
        %v2817 = vsub.f32 %v274, %v2816
        %v2818 = vand.u32 %v2817, 4294901760
        %2819 = vmatpush1.msra.mxu0 %v2818
        %v2820 = vand.u32 %v174, 4294901760
        %2821 = vmatprep.mubr.f32.mxu0 %v2820
        %v2822 = vand.u32 %v173, 4294901760
        %2823 = vmatmul.mubr.f32.gmra.mrb[0].mxu0 %v2822
        %v2824 = vpop.f32.mrb[0].mxu0
        %v2825 = vadd.f32 %v2657, %v2824
        %v2826 = vpop.f32.mrb[0].mxu0
        %2827 = vdwg.mxu0
        %2828 = vmatprep.subr.mxu0 0.0
        %v2829 = vand.u32 %v243, 4294901760
        %2830 = vmatpush1.msra.mxu0 %v2829
        %2831 = vmatprep.subr.mxu0 0.0
        %v2832 = vand.u32 %v244, 4294901760
        %2833 = vmatpush1.msra.mxu0 %v2832
        %2834 = vmatprep.subr.mxu0 0.0
        %v2835 = vand.u32 %v245, 4294901760
        %2836 = vmatpush1.msra.mxu0 %v2835
        %2837 = vmatprep.subr.mxu0 0.0
        %v2838 = vand.u32 %v246, 4294901760
        %2839 = vmatpush1.msra.mxu0 %v2838
        %2840 = vmatprep.subr.mxu0 0.0
        %v2841 = vand.u32 %v247, 4294901760
        %2842 = vmatpush1.msra.mxu0 %v2841
        %2843 = vmatprep.subr.mxu0 0.0
        %v2844 = vand.u32 %v248, 4294901760
        %2845 = vmatpush1.msra.mxu0 %v2844
        %2846 = vmatprep.subr.mxu0 0.0
        %v2847 = vand.u32 %v249, 4294901760
        %2848 = vmatpush1.msra.mxu0 %v2847
        %2849 = vmatprep.subr.mxu0 0.0
        %v2850 = vand.u32 %v250, 4294901760
        %2851 = vmatpush1.msra.mxu0 %v2850
        %2852 = vmatprep.subr.mxu0 0.0
        %v2853 = vand.u32 %v251, 4294901760
        %2854 = vmatpush1.msra.mxu0 %v2853
        %2855 = vmatprep.subr.mxu0 0.0
        %v2856 = vand.u32 %v252, 4294901760
        %2857 = vmatpush1.msra.mxu0 %v2856
        %2858 = vmatprep.subr.mxu0 0.0
        %v2859 = vand.u32 %v253, 4294901760
        %2860 = vmatpush1.msra.mxu0 %v2859
        %2861 = vmatprep.subr.mxu0 0.0
        %v2862 = vand.u32 %v254, 4294901760
        %2863 = vmatpush1.msra.mxu0 %v2862
        %2864 = vmatprep.subr.mxu0 0.0
        %v2865 = vand.u32 %v255, 4294901760
        %2866 = vmatpush1.msra.mxu0 %v2865
        %2867 = vmatprep.subr.mxu0 0.0
        %v2868 = vand.u32 %v256, 4294901760
        %2869 = vmatpush1.msra.mxu0 %v2868
        %2870 = vmatprep.subr.mxu0 0.0
        %v2871 = vand.u32 %v257, 4294901760
        %2872 = vmatpush1.msra.mxu0 %v2871
        %2873 = vmatprep.subr.mxu0 0.0
        %v2874 = vand.u32 %v258, 4294901760
        %2875 = vmatpush1.msra.mxu0 %v2874
        %2876 = vmatprep.subr.mxu0 0.0
        %v2877 = vand.u32 %v259, 4294901760
        %2878 = vmatpush1.msra.mxu0 %v2877
        %2879 = vmatprep.subr.mxu0 0.0
        %v2880 = vand.u32 %v260, 4294901760
        %2881 = vmatpush1.msra.mxu0 %v2880
        %2882 = vmatprep.subr.mxu0 0.0
        %v2883 = vand.u32 %v261, 4294901760
        %2884 = vmatpush1.msra.mxu0 %v2883
        %2885 = vmatprep.subr.mxu0 0.0
        %v2886 = vand.u32 %v262, 4294901760
        %2887 = vmatpush1.msra.mxu0 %v2886
        %2888 = vmatprep.subr.mxu0 0.0
        %v2889 = vand.u32 %v263, 4294901760
        %2890 = vmatpush1.msra.mxu0 %v2889
        %2891 = vmatprep.subr.mxu0 0.0
        %v2892 = vand.u32 %v264, 4294901760
        %2893 = vmatpush1.msra.mxu0 %v2892
        %2894 = vmatprep.subr.mxu0 0.0
        %v2895 = vand.u32 %v265, 4294901760
        %2896 = vmatpush1.msra.mxu0 %v2895
        %2897 = vmatprep.subr.mxu0 0.0
        %v2898 = vand.u32 %v266, 4294901760
        %2899 = vmatpush1.msra.mxu0 %v2898
        %2900 = vmatprep.subr.mxu0 0.0
        %v2901 = vand.u32 %v267, 4294901760
        %2902 = vmatpush1.msra.mxu0 %v2901
        %2903 = vmatprep.subr.mxu0 0.0
        %v2904 = vand.u32 %v268, 4294901760
        %2905 = vmatpush1.msra.mxu0 %v2904
        %2906 = vmatprep.subr.mxu0 0.0
        %v2907 = vand.u32 %v269, 4294901760
        %2908 = vmatpush1.msra.mxu0 %v2907
        %2909 = vmatprep.subr.mxu0 0.0
        %v2910 = vand.u32 %v270, 4294901760
        %2911 = vmatpush1.msra.mxu0 %v2910
        %2912 = vmatprep.subr.mxu0 0.0
        %v2913 = vand.u32 %v271, 4294901760
        %2914 = vmatpush1.msra.mxu0 %v2913
        %2915 = vmatprep.subr.mxu0 0.0
        %v2916 = vand.u32 %v272, 4294901760
        %2917 = vmatpush1.msra.mxu0 %v2916
        %2918 = vmatprep.subr.mxu0 0.0
        %v2919 = vand.u32 %v273, 4294901760
        %2920 = vmatpush1.msra.mxu0 %v2919
        %2921 = vmatprep.subr.mxu0 0.0
        %v2922 = vand.u32 %v274, 4294901760
        %2923 = vmatpush1.msra.mxu0 %v2922
        %v2924 = vand.u32 %v174, 4294901760
        %2925 = vmatprep.mubr.f32.mxu0 %v2924
        %v2926 = vand.u32 %v173, 4294901760
        %2927 = vmatmul.mubr.f32.gmra.mrb[0].mxu0 %v2926
        %v2928 = vpop.f32.mrb[0].mxu0
        %v2929 = vadd.f32 %v2825, %v2928
        %v2930 = vpop.f32.mrb[0].mxu0
        %2931 = vdwg.mxu0
        %2932 = vmatprep.subr.mxu0 0.0
        %v2933 = vand.u32 %v275, 4294901760
        %2934 = vmatpush1.msra.mxu0 %v2933
        %2935 = vmatprep.subr.mxu0 0.0
        %v2936 = vand.u32 %v276, 4294901760
        %2937 = vmatpush1.msra.mxu0 %v2936
        %2938 = vmatprep.subr.mxu0 0.0
        %v2939 = vand.u32 %v277, 4294901760
        %2940 = vmatpush1.msra.mxu0 %v2939
        %2941 = vmatprep.subr.mxu0 0.0
        %v2942 = vand.u32 %v278, 4294901760
        %2943 = vmatpush1.msra.mxu0 %v2942
        %2944 = vmatprep.subr.mxu0 0.0
        %v2945 = vand.u32 %v279, 4294901760
        %2946 = vmatpush1.msra.mxu0 %v2945
        %2947 = vmatprep.subr.mxu0 0.0
        %v2948 = vand.u32 %v280, 4294901760
        %2949 = vmatpush1.msra.mxu0 %v2948
        %2950 = vmatprep.subr.mxu0 0.0
        %v2951 = vand.u32 %v281, 4294901760
        %2952 = vmatpush1.msra.mxu0 %v2951
        %2953 = vmatprep.subr.mxu0 0.0
        %v2954 = vand.u32 %v282, 4294901760
        %2955 = vmatpush1.msra.mxu0 %v2954
        %2956 = vmatprep.subr.mxu0 0.0
        %v2957 = vand.u32 %v283, 4294901760
        %2958 = vmatpush1.msra.mxu0 %v2957
        %2959 = vmatprep.subr.mxu0 0.0
        %v2960 = vand.u32 %v284, 4294901760
        %2961 = vmatpush1.msra.mxu0 %v2960
        %2962 = vmatprep.subr.mxu0 0.0
        %v2963 = vand.u32 %v285, 4294901760
        %2964 = vmatpush1.msra.mxu0 %v2963
        %2965 = vmatprep.subr.mxu0 0.0
        %v2966 = vand.u32 %v286, 4294901760
        %2967 = vmatpush1.msra.mxu0 %v2966
        %2968 = vmatprep.subr.mxu0 0.0
        %v2969 = vand.u32 %v287, 4294901760
        %2970 = vmatpush1.msra.mxu0 %v2969
        %2971 = vmatprep.subr.mxu0 0.0
        %v2972 = vand.u32 %v288, 4294901760
        %2973 = vmatpush1.msra.mxu0 %v2972
        %2974 = vmatprep.subr.mxu0 0.0
        %v2975 = vand.u32 %v289, 4294901760
        %2976 = vmatpush1.msra.mxu0 %v2975
        %2977 = vmatprep.subr.mxu0 0.0
        %v2978 = vand.u32 %v290, 4294901760
        %2979 = vmatpush1.msra.mxu0 %v2978
        %2980 = vmatprep.subr.mxu0 0.0
        %v2981 = vand.u32 %v291, 4294901760
        %2982 = vmatpush1.msra.mxu0 %v2981
        %2983 = vmatprep.subr.mxu0 0.0
        %v2984 = vand.u32 %v292, 4294901760
        %2985 = vmatpush1.msra.mxu0 %v2984
        %2986 = vmatprep.subr.mxu0 0.0
        %v2987 = vand.u32 %v293, 4294901760
        %2988 = vmatpush1.msra.mxu0 %v2987
        %2989 = vmatprep.subr.mxu0 0.0
        %v2990 = vand.u32 %v294, 4294901760
        %2991 = vmatpush1.msra.mxu0 %v2990
        %2992 = vmatprep.subr.mxu0 0.0
        %v2993 = vand.u32 %v295, 4294901760
        %2994 = vmatpush1.msra.mxu0 %v2993
        %2995 = vmatprep.subr.mxu0 0.0
        %v2996 = vand.u32 %v296, 4294901760
        %2997 = vmatpush1.msra.mxu0 %v2996
        %2998 = vmatprep.subr.mxu0 0.0
        %v2999 = vand.u32 %v297, 4294901760
        %3000 = vmatpush1.msra.mxu0 %v2999
        %3001 = vmatprep.subr.mxu0 0.0
        %v3002 = vand.u32 %v298, 4294901760
        %3003 = vmatpush1.msra.mxu0 %v3002
        %3004 = vmatprep.subr.mxu0 0.0
        %v3005 = vand.u32 %v299, 4294901760
        %3006 = vmatpush1.msra.mxu0 %v3005
        %3007 = vmatprep.subr.mxu0 0.0
        %v3008 = vand.u32 %v300, 4294901760
        %3009 = vmatpush1.msra.mxu0 %v3008
        %3010 = vmatprep.subr.mxu0 0.0
        %v3011 = vand.u32 %v301, 4294901760
        %3012 = vmatpush1.msra.mxu0 %v3011
        %3013 = vmatprep.subr.mxu0 0.0
        %v3014 = vand.u32 %v302, 4294901760
        %3015 = vmatpush1.msra.mxu0 %v3014
        %3016 = vmatprep.subr.mxu0 0.0
        %v3017 = vand.u32 %v303, 4294901760
        %3018 = vmatpush1.msra.mxu0 %v3017
        %3019 = vmatprep.subr.mxu0 0.0
        %v3020 = vand.u32 %v304, 4294901760
        %3021 = vmatpush1.msra.mxu0 %v3020
        %3022 = vmatprep.subr.mxu0 0.0
        %v3023 = vand.u32 %v305, 4294901760
        %3024 = vmatpush1.msra.mxu0 %v3023
        %3025 = vmatprep.subr.mxu0 0.0
        %v3026 = vand.u32 %v306, 4294901760
        %3027 = vmatpush1.msra.mxu0 %v3026
        %v3028 = vand.u32 %v176, 4294901760
        %v3029 = vsub.f32 %v176, %v3028
        %v3030 = vand.u32 %v3029, 4294901760
        %v3031 = vsub.f32 %v3029, %v3030
        %v3032 = vand.u32 %v3031, 4294901760
        %3033 = vmatprep.mubr.f32.mxu0 %v3032
        %v3034 = vand.u32 %v175, 4294901760
        %v3035 = vsub.f32 %v175, %v3034
        %v3036 = vand.u32 %v3035, 4294901760
        %v3037 = vsub.f32 %v3035, %v3036
        %v3038 = vand.u32 %v3037, 4294901760
        %3039 = vmatmul.mubr.f32.gmra.mrb[0].mxu0 %v3038
        %v3040 = vpop.f32.mrb[0].mxu0
        %v3041 = vadd.f32 %v2929, %v3040
        %v3042 = vpop.f32.mrb[0].mxu0
        %3043 = vdwg.mxu0
        %3044 = vmatprep.subr.mxu0 0.0
        %v3045 = vand.u32 %v275, 4294901760
        %v3046 = vsub.f32 %v275, %v3045
        %v3047 = vand.u32 %v3046, 4294901760
        %v3048 = vsub.f32 %v3046, %v3047
        %v3049 = vand.u32 %v3048, 4294901760
        %3050 = vmatpush1.msra.mxu0 %v3049
        %3051 = vmatprep.subr.mxu0 0.0
        %v3052 = vand.u32 %v276, 4294901760
        %v3053 = vsub.f32 %v276, %v3052
        %v3054 = vand.u32 %v3053, 4294901760
        %v3055 = vsub.f32 %v3053, %v3054
        %v3056 = vand.u32 %v3055, 4294901760
        %3057 = vmatpush1.msra.mxu0 %v3056
        %3058 = vmatprep.subr.mxu0 0.0
        %v3059 = vand.u32 %v277, 4294901760
        %v3060 = vsub.f32 %v277, %v3059
        %v3061 = vand.u32 %v3060, 4294901760
        %v3062 = vsub.f32 %v3060, %v3061
        %v3063 = vand.u32 %v3062, 4294901760
        %3064 = vmatpush1.msra.mxu0 %v3063
        %3065 = vmatprep.subr.mxu0 0.0
        %v3066 = vand.u32 %v278, 4294901760
        %v3067 = vsub.f32 %v278, %v3066
        %v3068 = vand.u32 %v3067, 4294901760
        %v3069 = vsub.f32 %v3067, %v3068
        %v3070 = vand.u32 %v3069, 4294901760
        %3071 = vmatpush1.msra.mxu0 %v3070
        %3072 = vmatprep.subr.mxu0 0.0
        %v3073 = vand.u32 %v279, 4294901760
        %v3074 = vsub.f32 %v279, %v3073
        %v3075 = vand.u32 %v3074, 4294901760
        %v3076 = vsub.f32 %v3074, %v3075
        %v3077 = vand.u32 %v3076, 4294901760
        %3078 = vmatpush1.msra.mxu0 %v3077
        %3079 = vmatprep.subr.mxu0 0.0
        %v3080 = vand.u32 %v280, 4294901760
        %v3081 = vsub.f32 %v280, %v3080
        %v3082 = vand.u32 %v3081, 4294901760
        %v3083 = vsub.f32 %v3081, %v3082
        %v3084 = vand.u32 %v3083, 4294901760
        %3085 = vmatpush1.msra.mxu0 %v3084
        %3086 = vmatprep.subr.mxu0 0.0
        %v3087 = vand.u32 %v281, 4294901760
        %v3088 = vsub.f32 %v281, %v3087
        %v3089 = vand.u32 %v3088, 4294901760
        %v3090 = vsub.f32 %v3088, %v3089
        %v3091 = vand.u32 %v3090, 4294901760
        %3092 = vmatpush1.msra.mxu0 %v3091
        %3093 = vmatprep.subr.mxu0 0.0
        %v3094 = vand.u32 %v282, 4294901760
        %v3095 = vsub.f32 %v282, %v3094
        %v3096 = vand.u32 %v3095, 4294901760
        %v3097 = vsub.f32 %v3095, %v3096
        %v3098 = vand.u32 %v3097, 4294901760
        %3099 = vmatpush1.msra.mxu0 %v3098
        %3100 = vmatprep.subr.mxu0 0.0
        %v3101 = vand.u32 %v283, 4294901760
        %v3102 = vsub.f32 %v283, %v3101
        %v3103 = vand.u32 %v3102, 4294901760
        %v3104 = vsub.f32 %v3102, %v3103
        %v3105 = vand.u32 %v3104, 4294901760
        %3106 = vmatpush1.msra.mxu0 %v3105
        %3107 = vmatprep.subr.mxu0 0.0
        %v3108 = vand.u32 %v284, 4294901760
        %v3109 = vsub.f32 %v284, %v3108
        %v3110 = vand.u32 %v3109, 4294901760
        %v3111 = vsub.f32 %v3109, %v3110
        %v3112 = vand.u32 %v3111, 4294901760
        %3113 = vmatpush1.msra.mxu0 %v3112
        %3114 = vmatprep.subr.mxu0 0.0
        %v3115 = vand.u32 %v285, 4294901760
        %v3116 = vsub.f32 %v285, %v3115
        %v3117 = vand.u32 %v3116, 4294901760
        %v3118 = vsub.f32 %v3116, %v3117
        %v3119 = vand.u32 %v3118, 4294901760
        %3120 = vmatpush1.msra.mxu0 %v3119
        %3121 = vmatprep.subr.mxu0 0.0
        %v3122 = vand.u32 %v286, 4294901760
        %v3123 = vsub.f32 %v286, %v3122
        %v3124 = vand.u32 %v3123, 4294901760
        %v3125 = vsub.f32 %v3123, %v3124
        %v3126 = vand.u32 %v3125, 4294901760
        %3127 = vmatpush1.msra.mxu0 %v3126
        %3128 = vmatprep.subr.mxu0 0.0
        %v3129 = vand.u32 %v287, 4294901760
        %v3130 = vsub.f32 %v287, %v3129
        %v3131 = vand.u32 %v3130, 4294901760
        %v3132 = vsub.f32 %v3130, %v3131
        %v3133 = vand.u32 %v3132, 4294901760
        %3134 = vmatpush1.msra.mxu0 %v3133
        %3135 = vmatprep.subr.mxu0 0.0
        %v3136 = vand.u32 %v288, 4294901760
        %v3137 = vsub.f32 %v288, %v3136
        %v3138 = vand.u32 %v3137, 4294901760
        %v3139 = vsub.f32 %v3137, %v3138
        %v3140 = vand.u32 %v3139, 4294901760
        %3141 = vmatpush1.msra.mxu0 %v3140
        %3142 = vmatprep.subr.mxu0 0.0
        %v3143 = vand.u32 %v289, 4294901760
        %v3144 = vsub.f32 %v289, %v3143
        %v3145 = vand.u32 %v3144, 4294901760
        %v3146 = vsub.f32 %v3144, %v3145
        %v3147 = vand.u32 %v3146, 4294901760
        %3148 = vmatpush1.msra.mxu0 %v3147
        %3149 = vmatprep.subr.mxu0 0.0
        %v3150 = vand.u32 %v290, 4294901760
        %v3151 = vsub.f32 %v290, %v3150
        %v3152 = vand.u32 %v3151, 4294901760
        %v3153 = vsub.f32 %v3151, %v3152
        %v3154 = vand.u32 %v3153, 4294901760
        %3155 = vmatpush1.msra.mxu0 %v3154
        %3156 = vmatprep.subr.mxu0 0.0
        %v3157 = vand.u32 %v291, 4294901760
        %v3158 = vsub.f32 %v291, %v3157
        %v3159 = vand.u32 %v3158, 4294901760
        %v3160 = vsub.f32 %v3158, %v3159
        %v3161 = vand.u32 %v3160, 4294901760
        %3162 = vmatpush1.msra.mxu0 %v3161
        %3163 = vmatprep.subr.mxu0 0.0
        %v3164 = vand.u32 %v292, 4294901760
        %v3165 = vsub.f32 %v292, %v3164
        %v3166 = vand.u32 %v3165, 4294901760
        %v3167 = vsub.f32 %v3165, %v3166
        %v3168 = vand.u32 %v3167, 4294901760
        %3169 = vmatpush1.msra.mxu0 %v3168
        %3170 = vmatprep.subr.mxu0 0.0
        %v3171 = vand.u32 %v293, 4294901760
        %v3172 = vsub.f32 %v293, %v3171
        %v3173 = vand.u32 %v3172, 4294901760
        %v3174 = vsub.f32 %v3172, %v3173
        %v3175 = vand.u32 %v3174, 4294901760
        %3176 = vmatpush1.msra.mxu0 %v3175
        %3177 = vmatprep.subr.mxu0 0.0
        %v3178 = vand.u32 %v294, 4294901760
        %v3179 = vsub.f32 %v294, %v3178
        %v3180 = vand.u32 %v3179, 4294901760
        %v3181 = vsub.f32 %v3179, %v3180
        %v3182 = vand.u32 %v3181, 4294901760
        %3183 = vmatpush1.msra.mxu0 %v3182
        %3184 = vmatprep.subr.mxu0 0.0
        %v3185 = vand.u32 %v295, 4294901760
        %v3186 = vsub.f32 %v295, %v3185
        %v3187 = vand.u32 %v3186, 4294901760
        %v3188 = vsub.f32 %v3186, %v3187
        %v3189 = vand.u32 %v3188, 4294901760
        %3190 = vmatpush1.msra.mxu0 %v3189
        %3191 = vmatprep.subr.mxu0 0.0
        %v3192 = vand.u32 %v296, 4294901760
        %v3193 = vsub.f32 %v296, %v3192
        %v3194 = vand.u32 %v3193, 4294901760
        %v3195 = vsub.f32 %v3193, %v3194
        %v3196 = vand.u32 %v3195, 4294901760
        %3197 = vmatpush1.msra.mxu0 %v3196
        %3198 = vmatprep.subr.mxu0 0.0
        %v3199 = vand.u32 %v297, 4294901760
        %v3200 = vsub.f32 %v297, %v3199
        %v3201 = vand.u32 %v3200, 4294901760
        %v3202 = vsub.f32 %v3200, %v3201
        %v3203 = vand.u32 %v3202, 4294901760
        %3204 = vmatpush1.msra.mxu0 %v3203
        %3205 = vmatprep.subr.mxu0 0.0
        %v3206 = vand.u32 %v298, 4294901760
        %v3207 = vsub.f32 %v298, %v3206
        %v3208 = vand.u32 %v3207, 4294901760
        %v3209 = vsub.f32 %v3207, %v3208
        %v3210 = vand.u32 %v3209, 4294901760
        %3211 = vmatpush1.msra.mxu0 %v3210
        %3212 = vmatprep.subr.mxu0 0.0
        %v3213 = vand.u32 %v299, 4294901760
        %v3214 = vsub.f32 %v299, %v3213
        %v3215 = vand.u32 %v3214, 4294901760
        %v3216 = vsub.f32 %v3214, %v3215
        %v3217 = vand.u32 %v3216, 4294901760
        %3218 = vmatpush1.msra.mxu0 %v3217
        %3219 = vmatprep.subr.mxu0 0.0
        %v3220 = vand.u32 %v300, 4294901760
        %v3221 = vsub.f32 %v300, %v3220
        %v3222 = vand.u32 %v3221, 4294901760
        %v3223 = vsub.f32 %v3221, %v3222
        %v3224 = vand.u32 %v3223, 4294901760
        %3225 = vmatpush1.msra.mxu0 %v3224
        %3226 = vmatprep.subr.mxu0 0.0
        %v3227 = vand.u32 %v301, 4294901760
        %v3228 = vsub.f32 %v301, %v3227
        %v3229 = vand.u32 %v3228, 4294901760
        %v3230 = vsub.f32 %v3228, %v3229
        %v3231 = vand.u32 %v3230, 4294901760
        %3232 = vmatpush1.msra.mxu0 %v3231
        %3233 = vmatprep.subr.mxu0 0.0
        %v3234 = vand.u32 %v302, 4294901760
        %v3235 = vsub.f32 %v302, %v3234
        %v3236 = vand.u32 %v3235, 4294901760
        %v3237 = vsub.f32 %v3235, %v3236
        %v3238 = vand.u32 %v3237, 4294901760
        %3239 = vmatpush1.msra.mxu0 %v3238
        %3240 = vmatprep.subr.mxu0 0.0
        %v3241 = vand.u32 %v303, 4294901760
        %v3242 = vsub.f32 %v303, %v3241
        %v3243 = vand.u32 %v3242, 4294901760
        %v3244 = vsub.f32 %v3242, %v3243
        %v3245 = vand.u32 %v3244, 4294901760
        %3246 = vmatpush1.msra.mxu0 %v3245
        %3247 = vmatprep.subr.mxu0 0.0
        %v3248 = vand.u32 %v304, 4294901760
        %v3249 = vsub.f32 %v304, %v3248
        %v3250 = vand.u32 %v3249, 4294901760
        %v3251 = vsub.f32 %v3249, %v3250
        %v3252 = vand.u32 %v3251, 4294901760
        %3253 = vmatpush1.msra.mxu0 %v3252
        %3254 = vmatprep.subr.mxu0 0.0
        %v3255 = vand.u32 %v305, 4294901760
        %v3256 = vsub.f32 %v305, %v3255
        %v3257 = vand.u32 %v3256, 4294901760
        %v3258 = vsub.f32 %v3256, %v3257
        %v3259 = vand.u32 %v3258, 4294901760
        %3260 = vmatpush1.msra.mxu0 %v3259
        %3261 = vmatprep.subr.mxu0 0.0
        %v3262 = vand.u32 %v306, 4294901760
        %v3263 = vsub.f32 %v306, %v3262
        %v3264 = vand.u32 %v3263, 4294901760
        %v3265 = vsub.f32 %v3263, %v3264
        %v3266 = vand.u32 %v3265, 4294901760
        %3267 = vmatpush1.msra.mxu0 %v3266
        %v3268 = vand.u32 %v176, 4294901760
        %3269 = vmatprep.mubr.f32.mxu0 %v3268
        %v3270 = vand.u32 %v175, 4294901760
        %3271 = vmatmul.mubr.f32.gmra.mrb[0].mxu0 %v3270
        %v3272 = vpop.f32.mrb[0].mxu0
        %v3273 = vadd.f32 %v3041, %v3272
        %v3274 = vpop.f32.mrb[0].mxu0
        %3275 = vdwg.mxu0
        %3276 = vmatprep.subr.mxu0 0.0
        %v3277 = vand.u32 %v275, 4294901760
        %v3278 = vsub.f32 %v275, %v3277
        %3279 = vmatpush1.msra.mxu0 %v3278
        %3280 = vmatprep.subr.mxu0 0.0
        %v3281 = vand.u32 %v276, 4294901760
        %v3282 = vsub.f32 %v276, %v3281
        %3283 = vmatpush1.msra.mxu0 %v3282
        %3284 = vmatprep.subr.mxu0 0.0
        %v3285 = vand.u32 %v277, 4294901760
        %v3286 = vsub.f32 %v277, %v3285
        %3287 = vmatpush1.msra.mxu0 %v3286
        %3288 = vmatprep.subr.mxu0 0.0
        %v3289 = vand.u32 %v278, 4294901760
        %v3290 = vsub.f32 %v278, %v3289
        %3291 = vmatpush1.msra.mxu0 %v3290
        %3292 = vmatprep.subr.mxu0 0.0
        %v3293 = vand.u32 %v279, 4294901760
        %v3294 = vsub.f32 %v279, %v3293
        %3295 = vmatpush1.msra.mxu0 %v3294
        %3296 = vmatprep.subr.mxu0 0.0
        %v3297 = vand.u32 %v280, 4294901760
        %v3298 = vsub.f32 %v280, %v3297
        %3299 = vmatpush1.msra.mxu0 %v3298
        %3300 = vmatprep.subr.mxu0 0.0
        %v3301 = vand.u32 %v281, 4294901760
        %v3302 = vsub.f32 %v281, %v3301
        %3303 = vmatpush1.msra.mxu0 %v3302
        %3304 = vmatprep.subr.mxu0 0.0
        %v3305 = vand.u32 %v282, 4294901760
        %v3306 = vsub.f32 %v282, %v3305
        %3307 = vmatpush1.msra.mxu0 %v3306
        %3308 = vmatprep.subr.mxu0 0.0
        %v3309 = vand.u32 %v283, 4294901760
        %v3310 = vsub.f32 %v283, %v3309
        %3311 = vmatpush1.msra.mxu0 %v3310
        %3312 = vmatprep.subr.mxu0 0.0
        %v3313 = vand.u32 %v284, 4294901760
        %v3314 = vsub.f32 %v284, %v3313
        %3315 = vmatpush1.msra.mxu0 %v3314
        %3316 = vmatprep.subr.mxu0 0.0
        %v3317 = vand.u32 %v285, 4294901760
        %v3318 = vsub.f32 %v285, %v3317
        %3319 = vmatpush1.msra.mxu0 %v3318
        %3320 = vmatprep.subr.mxu0 0.0
        %v3321 = vand.u32 %v286, 4294901760
        %v3322 = vsub.f32 %v286, %v3321
        %3323 = vmatpush1.msra.mxu0 %v3322
        %3324 = vmatprep.subr.mxu0 0.0
        %v3325 = vand.u32 %v287, 4294901760
        %v3326 = vsub.f32 %v287, %v3325
        %3327 = vmatpush1.msra.mxu0 %v3326
        %3328 = vmatprep.subr.mxu0 0.0
        %v3329 = vand.u32 %v288, 4294901760
        %v3330 = vsub.f32 %v288, %v3329
        %3331 = vmatpush1.msra.mxu0 %v3330
        %3332 = vmatprep.subr.mxu0 0.0
        %v3333 = vand.u32 %v289, 4294901760
        %v3334 = vsub.f32 %v289, %v3333
        %3335 = vmatpush1.msra.mxu0 %v3334
        %3336 = vmatprep.subr.mxu0 0.0
        %v3337 = vand.u32 %v290, 4294901760
        %v3338 = vsub.f32 %v290, %v3337
        %3339 = vmatpush1.msra.mxu0 %v3338
        %3340 = vmatprep.subr.mxu0 0.0
        %v3341 = vand.u32 %v291, 4294901760
        %v3342 = vsub.f32 %v291, %v3341
        %3343 = vmatpush1.msra.mxu0 %v3342
        %3344 = vmatprep.subr.mxu0 0.0
        %v3345 = vand.u32 %v292, 4294901760
        %v3346 = vsub.f32 %v292, %v3345
        %3347 = vmatpush1.msra.mxu0 %v3346
        %3348 = vmatprep.subr.mxu0 0.0
        %v3349 = vand.u32 %v293, 4294901760
        %v3350 = vsub.f32 %v293, %v3349
        %3351 = vmatpush1.msra.mxu0 %v3350
        %3352 = vmatprep.subr.mxu0 0.0
        %v3353 = vand.u32 %v294, 4294901760
        %v3354 = vsub.f32 %v294, %v3353
        %3355 = vmatpush1.msra.mxu0 %v3354
        %3356 = vmatprep.subr.mxu0 0.0
        %v3357 = vand.u32 %v295, 4294901760
        %v3358 = vsub.f32 %v295, %v3357
        %3359 = vmatpush1.msra.mxu0 %v3358
        %3360 = vmatprep.subr.mxu0 0.0
        %v3361 = vand.u32 %v296, 4294901760
        %v3362 = vsub.f32 %v296, %v3361
        %3363 = vmatpush1.msra.mxu0 %v3362
        %3364 = vmatprep.subr.mxu0 0.0
        %v3365 = vand.u32 %v297, 4294901760
        %v3366 = vsub.f32 %v297, %v3365
        %3367 = vmatpush1.msra.mxu0 %v3366
        %3368 = vmatprep.subr.mxu0 0.0
        %v3369 = vand.u32 %v298, 4294901760
        %v3370 = vsub.f32 %v298, %v3369
        %3371 = vmatpush1.msra.mxu0 %v3370
        %3372 = vmatprep.subr.mxu0 0.0
        %v3373 = vand.u32 %v299, 4294901760
        %v3374 = vsub.f32 %v299, %v3373
        %3375 = vmatpush1.msra.mxu0 %v3374
        %3376 = vmatprep.subr.mxu0 0.0
        %v3377 = vand.u32 %v300, 4294901760
        %v3378 = vsub.f32 %v300, %v3377
        %3379 = vmatpush1.msra.mxu0 %v3378
        %3380 = vmatprep.subr.mxu0 0.0
        %v3381 = vand.u32 %v301, 4294901760
        %v3382 = vsub.f32 %v301, %v3381
        %3383 = vmatpush1.msra.mxu0 %v3382
        %3384 = vmatprep.subr.mxu0 0.0
        %v3385 = vand.u32 %v302, 4294901760
        %v3386 = vsub.f32 %v302, %v3385
        %3387 = vmatpush1.msra.mxu0 %v3386
        %3388 = vmatprep.subr.mxu0 0.0
        %v3389 = vand.u32 %v303, 4294901760
        %v3390 = vsub.f32 %v303, %v3389
        %3391 = vmatpush1.msra.mxu0 %v3390
        %3392 = vmatprep.subr.mxu0 0.0
        %v3393 = vand.u32 %v304, 4294901760
        %v3394 = vsub.f32 %v304, %v3393
        %3395 = vmatpush1.msra.mxu0 %v3394
        %3396 = vmatprep.subr.mxu0 0.0
        %v3397 = vand.u32 %v305, 4294901760
        %v3398 = vsub.f32 %v305, %v3397
        %3399 = vmatpush1.msra.mxu0 %v3398
        %3400 = vmatprep.subr.mxu0 0.0
        %v3401 = vand.u32 %v306, 4294901760
        %v3402 = vsub.f32 %v306, %v3401
        %3403 = vmatpush1.msra.mxu0 %v3402
        %v3404 = vand.u32 %v176, 4294901760
        %v3405 = vsub.f32 %v176, %v3404
        %3406 = vmatprep.mubr.f32.mxu0 %v3405
        %v3407 = vand.u32 %v175, 4294901760
        %v3408 = vsub.f32 %v175, %v3407
        %3409 = vmatmul.mubr.f32.gmra.mrb[0].mxu0 %v3408
        %v3410 = vpop.f32.mrb[0].mxu0
        %v3411 = vadd.f32 %v3273, %v3410
        %v3412 = vpop.f32.mrb[0].mxu0
        %3413 = vdwg.mxu0
        %3414 = vmatprep.subr.mxu0 0.0
        %v3415 = vand.u32 %v275, 4294901760
        %3416 = vmatpush1.msra.mxu0 %v3415
        %3417 = vmatprep.subr.mxu0 0.0
        %v3418 = vand.u32 %v276, 4294901760
        %3419 = vmatpush1.msra.mxu0 %v3418
        %3420 = vmatprep.subr.mxu0 0.0
        %v3421 = vand.u32 %v277, 4294901760
        %3422 = vmatpush1.msra.mxu0 %v3421
        %3423 = vmatprep.subr.mxu0 0.0
        %v3424 = vand.u32 %v278, 4294901760
        %3425 = vmatpush1.msra.mxu0 %v3424
        %3426 = vmatprep.subr.mxu0 0.0
        %v3427 = vand.u32 %v279, 4294901760
        %3428 = vmatpush1.msra.mxu0 %v3427
        %3429 = vmatprep.subr.mxu0 0.0
        %v3430 = vand.u32 %v280, 4294901760
        %3431 = vmatpush1.msra.mxu0 %v3430
        %3432 = vmatprep.subr.mxu0 0.0
        %v3433 = vand.u32 %v281, 4294901760
        %3434 = vmatpush1.msra.mxu0 %v3433
        %3435 = vmatprep.subr.mxu0 0.0
        %v3436 = vand.u32 %v282, 4294901760
        %3437 = vmatpush1.msra.mxu0 %v3436
        %3438 = vmatprep.subr.mxu0 0.0
        %v3439 = vand.u32 %v283, 4294901760
        %3440 = vmatpush1.msra.mxu0 %v3439
        %3441 = vmatprep.subr.mxu0 0.0
        %v3442 = vand.u32 %v284, 4294901760
        %3443 = vmatpush1.msra.mxu0 %v3442
        %3444 = vmatprep.subr.mxu0 0.0
        %v3445 = vand.u32 %v285, 4294901760
        %3446 = vmatpush1.msra.mxu0 %v3445
        %3447 = vmatprep.subr.mxu0 0.0
        %v3448 = vand.u32 %v286, 4294901760
        %3449 = vmatpush1.msra.mxu0 %v3448
        %3450 = vmatprep.subr.mxu0 0.0
        %v3451 = vand.u32 %v287, 4294901760
        %3452 = vmatpush1.msra.mxu0 %v3451
        %3453 = vmatprep.subr.mxu0 0.0
        %v3454 = vand.u32 %v288, 4294901760
        %3455 = vmatpush1.msra.mxu0 %v3454
        %3456 = vmatprep.subr.mxu0 0.0
        %v3457 = vand.u32 %v289, 4294901760
        %3458 = vmatpush1.msra.mxu0 %v3457
        %3459 = vmatprep.subr.mxu0 0.0
        %v3460 = vand.u32 %v290, 4294901760
        %3461 = vmatpush1.msra.mxu0 %v3460
        %3462 = vmatprep.subr.mxu0 0.0
        %v3463 = vand.u32 %v291, 4294901760
        %3464 = vmatpush1.msra.mxu0 %v3463
        %3465 = vmatprep.subr.mxu0 0.0
        %v3466 = vand.u32 %v292, 4294901760
        %3467 = vmatpush1.msra.mxu0 %v3466
        %3468 = vmatprep.subr.mxu0 0.0
        %v3469 = vand.u32 %v293, 4294901760
        %3470 = vmatpush1.msra.mxu0 %v3469
        %3471 = vmatprep.subr.mxu0 0.0
        %v3472 = vand.u32 %v294, 4294901760
        %3473 = vmatpush1.msra.mxu0 %v3472
        %3474 = vmatprep.subr.mxu0 0.0
        %v3475 = vand.u32 %v295, 4294901760
        %3476 = vmatpush1.msra.mxu0 %v3475
        %3477 = vmatprep.subr.mxu0 0.0
        %v3478 = vand.u32 %v296, 4294901760
        %3479 = vmatpush1.msra.mxu0 %v3478
        %3480 = vmatprep.subr.mxu0 0.0
        %v3481 = vand.u32 %v297, 4294901760
        %3482 = vmatpush1.msra.mxu0 %v3481
        %3483 = vmatprep.subr.mxu0 0.0
        %v3484 = vand.u32 %v298, 4294901760
        %3485 = vmatpush1.msra.mxu0 %v3484
        %3486 = vmatprep.subr.mxu0 0.0
        %v3487 = vand.u32 %v299, 4294901760
        %3488 = vmatpush1.msra.mxu0 %v3487
        %3489 = vmatprep.subr.mxu0 0.0
        %v3490 = vand.u32 %v300, 4294901760
        %3491 = vmatpush1.msra.mxu0 %v3490
        %3492 = vmatprep.subr.mxu0 0.0
        %v3493 = vand.u32 %v301, 4294901760
        %3494 = vmatpush1.msra.mxu0 %v3493
        %3495 = vmatprep.subr.mxu0 0.0
        %v3496 = vand.u32 %v302, 4294901760
        %3497 = vmatpush1.msra.mxu0 %v3496
        %3498 = vmatprep.subr.mxu0 0.0
        %v3499 = vand.u32 %v303, 4294901760
        %3500 = vmatpush1.msra.mxu0 %v3499
        %3501 = vmatprep.subr.mxu0 0.0
        %v3502 = vand.u32 %v304, 4294901760
        %3503 = vmatpush1.msra.mxu0 %v3502
        %3504 = vmatprep.subr.mxu0 0.0
        %v3505 = vand.u32 %v305, 4294901760
        %3506 = vmatpush1.msra.mxu0 %v3505
        %3507 = vmatprep.subr.mxu0 0.0
        %v3508 = vand.u32 %v306, 4294901760
        %3509 = vmatpush1.msra.mxu0 %v3508
        %v3510 = vand.u32 %v176, 4294901760
        %v3511 = vsub.f32 %v176, %v3510
        %v3512 = vand.u32 %v3511, 4294901760
        %3513 = vmatprep.mubr.f32.mxu0 %v3512
        %v3514 = vand.u32 %v175, 4294901760
        %v3515 = vsub.f32 %v175, %v3514
        %v3516 = vand.u32 %v3515, 4294901760
        %3517 = vmatmul.mubr.f32.gmra.mrb[0].mxu0 %v3516
        %v3518 = vpop.f32.mrb[0].mxu0
        %v3519 = vadd.f32 %v3411, %v3518
        %v3520 = vpop.f32.mrb[0].mxu0
        %3521 = vdwg.mxu0
        %3522 = vmatprep.subr.mxu0 0.0
        %v3523 = vand.u32 %v275, 4294901760
        %v3524 = vsub.f32 %v275, %v3523
        %v3525 = vand.u32 %v3524, 4294901760
        %3526 = vmatpush1.msra.mxu0 %v3525
        %3527 = vmatprep.subr.mxu0 0.0
        %v3528 = vand.u32 %v276, 4294901760
        %v3529 = vsub.f32 %v276, %v3528
        %v3530 = vand.u32 %v3529, 4294901760
        %3531 = vmatpush1.msra.mxu0 %v3530
        %3532 = vmatprep.subr.mxu0 0.0
        %v3533 = vand.u32 %v277, 4294901760
        %v3534 = vsub.f32 %v277, %v3533
        %v3535 = vand.u32 %v3534, 4294901760
        %3536 = vmatpush1.msra.mxu0 %v3535
        %3537 = vmatprep.subr.mxu0 0.0
        %v3538 = vand.u32 %v278, 4294901760
        %v3539 = vsub.f32 %v278, %v3538
        %v3540 = vand.u32 %v3539, 4294901760
        %3541 = vmatpush1.msra.mxu0 %v3540
        %3542 = vmatprep.subr.mxu0 0.0
        %v3543 = vand.u32 %v279, 4294901760
        %v3544 = vsub.f32 %v279, %v3543
        %v3545 = vand.u32 %v3544, 4294901760
        %3546 = vmatpush1.msra.mxu0 %v3545
        %3547 = vmatprep.subr.mxu0 0.0
        %v3548 = vand.u32 %v280, 4294901760
        %v3549 = vsub.f32 %v280, %v3548
        %v3550 = vand.u32 %v3549, 4294901760
        %3551 = vmatpush1.msra.mxu0 %v3550
        %3552 = vmatprep.subr.mxu0 0.0
        %v3553 = vand.u32 %v281, 4294901760
        %v3554 = vsub.f32 %v281, %v3553
        %v3555 = vand.u32 %v3554, 4294901760
        %3556 = vmatpush1.msra.mxu0 %v3555
        %3557 = vmatprep.subr.mxu0 0.0
        %v3558 = vand.u32 %v282, 4294901760
        %v3559 = vsub.f32 %v282, %v3558
        %v3560 = vand.u32 %v3559, 4294901760
        %3561 = vmatpush1.msra.mxu0 %v3560
        %3562 = vmatprep.subr.mxu0 0.0
        %v3563 = vand.u32 %v283, 4294901760
        %v3564 = vsub.f32 %v283, %v3563
        %v3565 = vand.u32 %v3564, 4294901760
        %3566 = vmatpush1.msra.mxu0 %v3565
        %3567 = vmatprep.subr.mxu0 0.0
        %v3568 = vand.u32 %v284, 4294901760
        %v3569 = vsub.f32 %v284, %v3568
        %v3570 = vand.u32 %v3569, 4294901760
        %3571 = vmatpush1.msra.mxu0 %v3570
        %3572 = vmatprep.subr.mxu0 0.0
        %v3573 = vand.u32 %v285, 4294901760
        %v3574 = vsub.f32 %v285, %v3573
        %v3575 = vand.u32 %v3574, 4294901760
        %3576 = vmatpush1.msra.mxu0 %v3575
        %3577 = vmatprep.subr.mxu0 0.0
        %v3578 = vand.u32 %v286, 4294901760
        %v3579 = vsub.f32 %v286, %v3578
        %v3580 = vand.u32 %v3579, 4294901760
        %3581 = vmatpush1.msra.mxu0 %v3580
        %3582 = vmatprep.subr.mxu0 0.0
        %v3583 = vand.u32 %v287, 4294901760
        %v3584 = vsub.f32 %v287, %v3583
        %v3585 = vand.u32 %v3584, 4294901760
        %3586 = vmatpush1.msra.mxu0 %v3585
        %3587 = vmatprep.subr.mxu0 0.0
        %v3588 = vand.u32 %v288, 4294901760
        %v3589 = vsub.f32 %v288, %v3588
        %v3590 = vand.u32 %v3589, 4294901760
        %3591 = vmatpush1.msra.mxu0 %v3590
        %3592 = vmatprep.subr.mxu0 0.0
        %v3593 = vand.u32 %v289, 4294901760
        %v3594 = vsub.f32 %v289, %v3593
        %v3595 = vand.u32 %v3594, 4294901760
        %3596 = vmatpush1.msra.mxu0 %v3595
        %3597 = vmatprep.subr.mxu0 0.0
        %v3598 = vand.u32 %v290, 4294901760
        %v3599 = vsub.f32 %v290, %v3598
        %v3600 = vand.u32 %v3599, 4294901760
        %3601 = vmatpush1.msra.mxu0 %v3600
        %3602 = vmatprep.subr.mxu0 0.0
        %v3603 = vand.u32 %v291, 4294901760
        %v3604 = vsub.f32 %v291, %v3603
        %v3605 = vand.u32 %v3604, 4294901760
        %3606 = vmatpush1.msra.mxu0 %v3605
        %3607 = vmatprep.subr.mxu0 0.0
        %v3608 = vand.u32 %v292, 4294901760
        %v3609 = vsub.f32 %v292, %v3608
        %v3610 = vand.u32 %v3609, 4294901760
        %3611 = vmatpush1.msra.mxu0 %v3610
        %3612 = vmatprep.subr.mxu0 0.0
        %v3613 = vand.u32 %v293, 4294901760
        %v3614 = vsub.f32 %v293, %v3613
        %v3615 = vand.u32 %v3614, 4294901760
        %3616 = vmatpush1.msra.mxu0 %v3615
        %3617 = vmatprep.subr.mxu0 0.0
        %v3618 = vand.u32 %v294, 4294901760
        %v3619 = vsub.f32 %v294, %v3618
        %v3620 = vand.u32 %v3619, 4294901760
        %3621 = vmatpush1.msra.mxu0 %v3620
        %3622 = vmatprep.subr.mxu0 0.0
        %v3623 = vand.u32 %v295, 4294901760
        %v3624 = vsub.f32 %v295, %v3623
        %v3625 = vand.u32 %v3624, 4294901760
        %3626 = vmatpush1.msra.mxu0 %v3625
        %3627 = vmatprep.subr.mxu0 0.0
        %v3628 = vand.u32 %v296, 4294901760
        %v3629 = vsub.f32 %v296, %v3628
        %v3630 = vand.u32 %v3629, 4294901760
        %3631 = vmatpush1.msra.mxu0 %v3630
        %3632 = vmatprep.subr.mxu0 0.0
        %v3633 = vand.u32 %v297, 4294901760
        %v3634 = vsub.f32 %v297, %v3633
        %v3635 = vand.u32 %v3634, 4294901760
        %3636 = vmatpush1.msra.mxu0 %v3635
        %3637 = vmatprep.subr.mxu0 0.0
        %v3638 = vand.u32 %v298, 4294901760
        %v3639 = vsub.f32 %v298, %v3638
        %v3640 = vand.u32 %v3639, 4294901760
        %3641 = vmatpush1.msra.mxu0 %v3640
        %3642 = vmatprep.subr.mxu0 0.0
        %v3643 = vand.u32 %v299, 4294901760
        %v3644 = vsub.f32 %v299, %v3643
        %v3645 = vand.u32 %v3644, 4294901760
        %3646 = vmatpush1.msra.mxu0 %v3645
        %3647 = vmatprep.subr.mxu0 0.0
        %v3648 = vand.u32 %v300, 4294901760
        %v3649 = vsub.f32 %v300, %v3648
        %v3650 = vand.u32 %v3649, 4294901760
        %3651 = vmatpush1.msra.mxu0 %v3650
        %3652 = vmatprep.subr.mxu0 0.0
        %v3653 = vand.u32 %v301, 4294901760
        %v3654 = vsub.f32 %v301, %v3653
        %v3655 = vand.u32 %v3654, 4294901760
        %3656 = vmatpush1.msra.mxu0 %v3655
        %3657 = vmatprep.subr.mxu0 0.0
        %v3658 = vand.u32 %v302, 4294901760
        %v3659 = vsub.f32 %v302, %v3658
        %v3660 = vand.u32 %v3659, 4294901760
        %3661 = vmatpush1.msra.mxu0 %v3660
        %3662 = vmatprep.subr.mxu0 0.0
        %v3663 = vand.u32 %v303, 4294901760
        %v3664 = vsub.f32 %v303, %v3663
        %v3665 = vand.u32 %v3664, 4294901760
        %3666 = vmatpush1.msra.mxu0 %v3665
        %3667 = vmatprep.subr.mxu0 0.0
        %v3668 = vand.u32 %v304, 4294901760
        %v3669 = vsub.f32 %v304, %v3668
        %v3670 = vand.u32 %v3669, 4294901760
        %3671 = vmatpush1.msra.mxu0 %v3670
        %3672 = vmatprep.subr.mxu0 0.0
        %v3673 = vand.u32 %v305, 4294901760
        %v3674 = vsub.f32 %v305, %v3673
        %v3675 = vand.u32 %v3674, 4294901760
        %3676 = vmatpush1.msra.mxu0 %v3675
        %3677 = vmatprep.subr.mxu0 0.0
        %v3678 = vand.u32 %v306, 4294901760
        %v3679 = vsub.f32 %v306, %v3678
        %v3680 = vand.u32 %v3679, 4294901760
        %3681 = vmatpush1.msra.mxu0 %v3680
        %v3682 = vand.u32 %v176, 4294901760
        %3683 = vmatprep.mubr.f32.mxu0 %v3682
        %v3684 = vand.u32 %v175, 4294901760
        %3685 = vmatmul.mubr.f32.gmra.mrb[0].mxu0 %v3684
        %v3686 = vpop.f32.mrb[0].mxu0
        %v3687 = vadd.f32 %v3519, %v3686
        %v3688 = vpop.f32.mrb[0].mxu0
        %3689 = vdwg.mxu0
        %3690 = vmatprep.subr.mxu0 0.0
        %v3691 = vand.u32 %v275, 4294901760
        %3692 = vmatpush1.msra.mxu0 %v3691
        %3693 = vmatprep.subr.mxu0 0.0
        %v3694 = vand.u32 %v276, 4294901760
        %3695 = vmatpush1.msra.mxu0 %v3694
        %3696 = vmatprep.subr.mxu0 0.0
        %v3697 = vand.u32 %v277, 4294901760
        %3698 = vmatpush1.msra.mxu0 %v3697
        %3699 = vmatprep.subr.mxu0 0.0
        %v3700 = vand.u32 %v278, 4294901760
        %3701 = vmatpush1.msra.mxu0 %v3700
        %3702 = vmatprep.subr.mxu0 0.0
        %v3703 = vand.u32 %v279, 4294901760
        %3704 = vmatpush1.msra.mxu0 %v3703
        %3705 = vmatprep.subr.mxu0 0.0
        %v3706 = vand.u32 %v280, 4294901760
        %3707 = vmatpush1.msra.mxu0 %v3706
        %3708 = vmatprep.subr.mxu0 0.0
        %v3709 = vand.u32 %v281, 4294901760
        %3710 = vmatpush1.msra.mxu0 %v3709
        %3711 = vmatprep.subr.mxu0 0.0
        %v3712 = vand.u32 %v282, 4294901760
        %3713 = vmatpush1.msra.mxu0 %v3712
        %3714 = vmatprep.subr.mxu0 0.0
        %v3715 = vand.u32 %v283, 4294901760
        %3716 = vmatpush1.msra.mxu0 %v3715
        %3717 = vmatprep.subr.mxu0 0.0
        %v3718 = vand.u32 %v284, 4294901760
        %3719 = vmatpush1.msra.mxu0 %v3718
        %3720 = vmatprep.subr.mxu0 0.0
        %v3721 = vand.u32 %v285, 4294901760
        %3722 = vmatpush1.msra.mxu0 %v3721
        %3723 = vmatprep.subr.mxu0 0.0
        %v3724 = vand.u32 %v286, 4294901760
        %3725 = vmatpush1.msra.mxu0 %v3724
        %3726 = vmatprep.subr.mxu0 0.0
        %v3727 = vand.u32 %v287, 4294901760
        %3728 = vmatpush1.msra.mxu0 %v3727
        %3729 = vmatprep.subr.mxu0 0.0
        %v3730 = vand.u32 %v288, 4294901760
        %3731 = vmatpush1.msra.mxu0 %v3730
        %3732 = vmatprep.subr.mxu0 0.0
        %v3733 = vand.u32 %v289, 4294901760
        %3734 = vmatpush1.msra.mxu0 %v3733
        %3735 = vmatprep.subr.mxu0 0.0
        %v3736 = vand.u32 %v290, 4294901760
        %3737 = vmatpush1.msra.mxu0 %v3736
        %3738 = vmatprep.subr.mxu0 0.0
        %v3739 = vand.u32 %v291, 4294901760
        %3740 = vmatpush1.msra.mxu0 %v3739
        %3741 = vmatprep.subr.mxu0 0.0
        %v3742 = vand.u32 %v292, 4294901760
        %3743 = vmatpush1.msra.mxu0 %v3742
        %3744 = vmatprep.subr.mxu0 0.0
        %v3745 = vand.u32 %v293, 4294901760
        %3746 = vmatpush1.msra.mxu0 %v3745
        %3747 = vmatprep.subr.mxu0 0.0
        %v3748 = vand.u32 %v294, 4294901760
        %3749 = vmatpush1.msra.mxu0 %v3748
        %3750 = vmatprep.subr.mxu0 0.0
        %v3751 = vand.u32 %v295, 4294901760
        %3752 = vmatpush1.msra.mxu0 %v3751
        %3753 = vmatprep.subr.mxu0 0.0
        %v3754 = vand.u32 %v296, 4294901760
        %3755 = vmatpush1.msra.mxu0 %v3754
        %3756 = vmatprep.subr.mxu0 0.0
        %v3757 = vand.u32 %v297, 4294901760
        %3758 = vmatpush1.msra.mxu0 %v3757
        %3759 = vmatprep.subr.mxu0 0.0
        %v3760 = vand.u32 %v298, 4294901760
        %3761 = vmatpush1.msra.mxu0 %v3760
        %3762 = vmatprep.subr.mxu0 0.0
        %v3763 = vand.u32 %v299, 4294901760
        %3764 = vmatpush1.msra.mxu0 %v3763
        %3765 = vmatprep.subr.mxu0 0.0
        %v3766 = vand.u32 %v300, 4294901760
        %3767 = vmatpush1.msra.mxu0 %v3766
        %3768 = vmatprep.subr.mxu0 0.0
        %v3769 = vand.u32 %v301, 4294901760
        %3770 = vmatpush1.msra.mxu0 %v3769
        %3771 = vmatprep.subr.mxu0 0.0
        %v3772 = vand.u32 %v302, 4294901760
        %3773 = vmatpush1.msra.mxu0 %v3772
        %3774 = vmatprep.subr.mxu0 0.0
        %v3775 = vand.u32 %v303, 4294901760
        %3776 = vmatpush1.msra.mxu0 %v3775
        %3777 = vmatprep.subr.mxu0 0.0
        %v3778 = vand.u32 %v304, 4294901760
        %3779 = vmatpush1.msra.mxu0 %v3778
        %3780 = vmatprep.subr.mxu0 0.0
        %v3781 = vand.u32 %v305, 4294901760
        %3782 = vmatpush1.msra.mxu0 %v3781
        %3783 = vmatprep.subr.mxu0 0.0
        %v3784 = vand.u32 %v306, 4294901760
        %3785 = vmatpush1.msra.mxu0 %v3784
        %v3786 = vand.u32 %v176, 4294901760
        %3787 = vmatprep.mubr.f32.mxu0 %v3786
        %v3788 = vand.u32 %v175, 4294901760
        %3789 = vmatmul.mubr.f32.gmra.mrb[0].mxu0 %v3788
        %v3790 = vpop.f32.mrb[0].mxu0
        %v3791 = vadd.f32 %v3687, %v3790
        %v3792 = vpop.f32.mrb[0].mxu0
        %3793 = vdwg.mxu0
        %3794 = vmatprep.subr.mxu0 0.0
        %v3795 = vand.u32 %v307, 4294901760
        %3796 = vmatpush1.msra.mxu0 %v3795
        %3797 = vmatprep.subr.mxu0 0.0
        %v3798 = vand.u32 %v308, 4294901760
        %3799 = vmatpush1.msra.mxu0 %v3798
        %3800 = vmatprep.subr.mxu0 0.0
        %v3801 = vand.u32 %v309, 4294901760
        %3802 = vmatpush1.msra.mxu0 %v3801
        %3803 = vmatprep.subr.mxu0 0.0
        %v3804 = vand.u32 %v310, 4294901760
        %3805 = vmatpush1.msra.mxu0 %v3804
        %3806 = vmatprep.subr.mxu0 0.0
        %v3807 = vand.u32 %v311, 4294901760
        %3808 = vmatpush1.msra.mxu0 %v3807
        %3809 = vmatprep.subr.mxu0 0.0
        %v3810 = vand.u32 %v312, 4294901760
        %3811 = vmatpush1.msra.mxu0 %v3810
        %3812 = vmatprep.subr.mxu0 0.0
        %v3813 = vand.u32 %v313, 4294901760
        %3814 = vmatpush1.msra.mxu0 %v3813
        %3815 = vmatprep.subr.mxu0 0.0
        %v3816 = vand.u32 %v314, 4294901760
        %3817 = vmatpush1.msra.mxu0 %v3816
        %3818 = vmatprep.subr.mxu0 0.0
        %v3819 = vand.u32 %v315, 4294901760
        %3820 = vmatpush1.msra.mxu0 %v3819
        %3821 = vmatprep.subr.mxu0 0.0
        %v3822 = vand.u32 %v316, 4294901760
        %3823 = vmatpush1.msra.mxu0 %v3822
        %3824 = vmatprep.subr.mxu0 0.0
        %v3825 = vand.u32 %v317, 4294901760
        %3826 = vmatpush1.msra.mxu0 %v3825
        %3827 = vmatprep.subr.mxu0 0.0
        %v3828 = vand.u32 %v318, 4294901760
        %3829 = vmatpush1.msra.mxu0 %v3828
        %3830 = vmatprep.subr.mxu0 0.0
        %v3831 = vand.u32 %v319, 4294901760
        %3832 = vmatpush1.msra.mxu0 %v3831
        %3833 = vmatprep.subr.mxu0 0.0
        %v3834 = vand.u32 %v320, 4294901760
        %3835 = vmatpush1.msra.mxu0 %v3834
        %3836 = vmatprep.subr.mxu0 0.0
        %v3837 = vand.u32 %v321, 4294901760
        %3838 = vmatpush1.msra.mxu0 %v3837
        %3839 = vmatprep.subr.mxu0 0.0
        %v3840 = vand.u32 %v322, 4294901760
        %3841 = vmatpush1.msra.mxu0 %v3840
        %3842 = vmatprep.subr.mxu0 0.0
        %v3843 = vand.u32 %v323, 4294901760
        %3844 = vmatpush1.msra.mxu0 %v3843
        %3845 = vmatprep.subr.mxu0 0.0
        %v3846 = vand.u32 %v324, 4294901760
        %3847 = vmatpush1.msra.mxu0 %v3846
        %3848 = vmatprep.subr.mxu0 0.0
        %v3849 = vand.u32 %v325, 4294901760
        %3850 = vmatpush1.msra.mxu0 %v3849
        %3851 = vmatprep.subr.mxu0 0.0
        %v3852 = vand.u32 %v326, 4294901760
        %3853 = vmatpush1.msra.mxu0 %v3852
        %3854 = vmatprep.subr.mxu0 0.0
        %v3855 = vand.u32 %v327, 4294901760
        %3856 = vmatpush1.msra.mxu0 %v3855
        %3857 = vmatprep.subr.mxu0 0.0
        %v3858 = vand.u32 %v328, 4294901760
        %3859 = vmatpush1.msra.mxu0 %v3858
        %3860 = vmatprep.subr.mxu0 0.0
        %v3861 = vand.u32 %v329, 4294901760
        %3862 = vmatpush1.msra.mxu0 %v3861
        %3863 = vmatprep.subr.mxu0 0.0
        %v3864 = vand.u32 %v330, 4294901760
        %3865 = vmatpush1.msra.mxu0 %v3864
        %3866 = vmatprep.subr.mxu0 0.0
        %v3867 = vand.u32 %v331, 4294901760
        %3868 = vmatpush1.msra.mxu0 %v3867
        %3869 = vmatprep.subr.mxu0 0.0
        %v3870 = vand.u32 %v332, 4294901760
        %3871 = vmatpush1.msra.mxu0 %v3870
        %3872 = vmatprep.subr.mxu0 0.0
        %v3873 = vand.u32 %v333, 4294901760
        %3874 = vmatpush1.msra.mxu0 %v3873
        %3875 = vmatprep.subr.mxu0 0.0
        %v3876 = vand.u32 %v334, 4294901760
        %3877 = vmatpush1.msra.mxu0 %v3876
        %3878 = vmatprep.subr.mxu0 0.0
        %v3879 = vand.u32 %v335, 4294901760
        %3880 = vmatpush1.msra.mxu0 %v3879
        %3881 = vmatprep.subr.mxu0 0.0
        %v3882 = vand.u32 %v336, 4294901760
        %3883 = vmatpush1.msra.mxu0 %v3882
        %3884 = vmatprep.subr.mxu0 0.0
        %v3885 = vand.u32 %v337, 4294901760
        %3886 = vmatpush1.msra.mxu0 %v3885
        %3887 = vmatprep.subr.mxu0 0.0
        %v3888 = vand.u32 %v338, 4294901760
        %3889 = vmatpush1.msra.mxu0 %v3888
        %v3890 = vand.u32 %v178, 4294901760
        %v3891 = vsub.f32 %v178, %v3890
        %v3892 = vand.u32 %v3891, 4294901760
        %v3893 = vsub.f32 %v3891, %v3892
        %v3894 = vand.u32 %v3893, 4294901760
        %3895 = vmatprep.mubr.f32.mxu0 %v3894
        %v3896 = vand.u32 %v177, 4294901760
        %v3897 = vsub.f32 %v177, %v3896
        %v3898 = vand.u32 %v3897, 4294901760
        %v3899 = vsub.f32 %v3897, %v3898
        %v3900 = vand.u32 %v3899, 4294901760
        %3901 = vmatmul.mubr.f32.gmra.mrb[0].mxu0 %v3900
        %v3902 = vpop.f32.mrb[0].mxu0
        %v3903 = vadd.f32 %v3791, %v3902
        %v3904 = vpop.f32.mrb[0].mxu0
        %3905 = vdwg.mxu0
        %3906 = vmatprep.subr.mxu0 0.0
        %v3907 = vand.u32 %v307, 4294901760
        %v3908 = vsub.f32 %v307, %v3907
        %v3909 = vand.u32 %v3908, 4294901760
        %v3910 = vsub.f32 %v3908, %v3909
        %v3911 = vand.u32 %v3910, 4294901760
        %3912 = vmatpush1.msra.mxu0 %v3911
        %3913 = vmatprep.subr.mxu0 0.0
        %v3914 = vand.u32 %v308, 4294901760
        %v3915 = vsub.f32 %v308, %v3914
        %v3916 = vand.u32 %v3915, 4294901760
        %v3917 = vsub.f32 %v3915, %v3916
        %v3918 = vand.u32 %v3917, 4294901760
        %3919 = vmatpush1.msra.mxu0 %v3918
        %3920 = vmatprep.subr.mxu0 0.0
        %v3921 = vand.u32 %v309, 4294901760
        %v3922 = vsub.f32 %v309, %v3921
        %v3923 = vand.u32 %v3922, 4294901760
        %v3924 = vsub.f32 %v3922, %v3923
        %v3925 = vand.u32 %v3924, 4294901760
        %3926 = vmatpush1.msra.mxu0 %v3925
        %3927 = vmatprep.subr.mxu0 0.0
        %v3928 = vand.u32 %v310, 4294901760
        %v3929 = vsub.f32 %v310, %v3928
        %v3930 = vand.u32 %v3929, 4294901760
        %v3931 = vsub.f32 %v3929, %v3930
        %v3932 = vand.u32 %v3931, 4294901760
        %3933 = vmatpush1.msra.mxu0 %v3932
        %3934 = vmatprep.subr.mxu0 0.0
        %v3935 = vand.u32 %v311, 4294901760
        %v3936 = vsub.f32 %v311, %v3935
        %v3937 = vand.u32 %v3936, 4294901760
        %v3938 = vsub.f32 %v3936, %v3937
        %v3939 = vand.u32 %v3938, 4294901760
        %3940 = vmatpush1.msra.mxu0 %v3939
        %3941 = vmatprep.subr.mxu0 0.0
        %v3942 = vand.u32 %v312, 4294901760
        %v3943 = vsub.f32 %v312, %v3942
        %v3944 = vand.u32 %v3943, 4294901760
        %v3945 = vsub.f32 %v3943, %v3944
        %v3946 = vand.u32 %v3945, 4294901760
        %3947 = vmatpush1.msra.mxu0 %v3946
        %3948 = vmatprep.subr.mxu0 0.0
        %v3949 = vand.u32 %v313, 4294901760
        %v3950 = vsub.f32 %v313, %v3949
        %v3951 = vand.u32 %v3950, 4294901760
        %v3952 = vsub.f32 %v3950, %v3951
        %v3953 = vand.u32 %v3952, 4294901760
        %3954 = vmatpush1.msra.mxu0 %v3953
        %3955 = vmatprep.subr.mxu0 0.0
        %v3956 = vand.u32 %v314, 4294901760
        %v3957 = vsub.f32 %v314, %v3956
        %v3958 = vand.u32 %v3957, 4294901760
        %v3959 = vsub.f32 %v3957, %v3958
        %v3960 = vand.u32 %v3959, 4294901760
        %3961 = vmatpush1.msra.mxu0 %v3960
        %3962 = vmatprep.subr.mxu0 0.0
        %v3963 = vand.u32 %v315, 4294901760
        %v3964 = vsub.f32 %v315, %v3963
        %v3965 = vand.u32 %v3964, 4294901760
        %v3966 = vsub.f32 %v3964, %v3965
        %v3967 = vand.u32 %v3966, 4294901760
        %3968 = vmatpush1.msra.mxu0 %v3967
        %3969 = vmatprep.subr.mxu0 0.0
        %v3970 = vand.u32 %v316, 4294901760
        %v3971 = vsub.f32 %v316, %v3970
        %v3972 = vand.u32 %v3971, 4294901760
        %v3973 = vsub.f32 %v3971, %v3972
        %v3974 = vand.u32 %v3973, 4294901760
        %3975 = vmatpush1.msra.mxu0 %v3974
        %3976 = vmatprep.subr.mxu0 0.0
        %v3977 = vand.u32 %v317, 4294901760
        %v3978 = vsub.f32 %v317, %v3977
        %v3979 = vand.u32 %v3978, 4294901760
        %v3980 = vsub.f32 %v3978, %v3979
        %v3981 = vand.u32 %v3980, 4294901760
        %3982 = vmatpush1.msra.mxu0 %v3981
        %3983 = vmatprep.subr.mxu0 0.0
        %v3984 = vand.u32 %v318, 4294901760
        %v3985 = vsub.f32 %v318, %v3984
        %v3986 = vand.u32 %v3985, 4294901760
        %v3987 = vsub.f32 %v3985, %v3986
        %v3988 = vand.u32 %v3987, 4294901760
        %3989 = vmatpush1.msra.mxu0 %v3988
        %3990 = vmatprep.subr.mxu0 0.0
        %v3991 = vand.u32 %v319, 4294901760
        %v3992 = vsub.f32 %v319, %v3991
        %v3993 = vand.u32 %v3992, 4294901760
        %v3994 = vsub.f32 %v3992, %v3993
        %v3995 = vand.u32 %v3994, 4294901760
        %3996 = vmatpush1.msra.mxu0 %v3995
        %3997 = vmatprep.subr.mxu0 0.0
        %v3998 = vand.u32 %v320, 4294901760
        %v3999 = vsub.f32 %v320, %v3998
        %v4000 = vand.u32 %v3999, 4294901760
        %v4001 = vsub.f32 %v3999, %v4000
        %v4002 = vand.u32 %v4001, 4294901760
        %4003 = vmatpush1.msra.mxu0 %v4002
        %4004 = vmatprep.subr.mxu0 0.0
        %v4005 = vand.u32 %v321, 4294901760
        %v4006 = vsub.f32 %v321, %v4005
        %v4007 = vand.u32 %v4006, 4294901760
        %v4008 = vsub.f32 %v4006, %v4007
        %v4009 = vand.u32 %v4008, 4294901760
        %4010 = vmatpush1.msra.mxu0 %v4009
        %4011 = vmatprep.subr.mxu0 0.0
        %v4012 = vand.u32 %v322, 4294901760
        %v4013 = vsub.f32 %v322, %v4012
        %v4014 = vand.u32 %v4013, 4294901760
        %v4015 = vsub.f32 %v4013, %v4014
        %v4016 = vand.u32 %v4015, 4294901760
        %4017 = vmatpush1.msra.mxu0 %v4016
        %4018 = vmatprep.subr.mxu0 0.0
        %v4019 = vand.u32 %v323, 4294901760
        %v4020 = vsub.f32 %v323, %v4019
        %v4021 = vand.u32 %v4020, 4294901760
        %v4022 = vsub.f32 %v4020, %v4021
        %v4023 = vand.u32 %v4022, 4294901760
        %4024 = vmatpush1.msra.mxu0 %v4023
        %4025 = vmatprep.subr.mxu0 0.0
        %v4026 = vand.u32 %v324, 4294901760
        %v4027 = vsub.f32 %v324, %v4026
        %v4028 = vand.u32 %v4027, 4294901760
        %v4029 = vsub.f32 %v4027, %v4028
        %v4030 = vand.u32 %v4029, 4294901760
        %4031 = vmatpush1.msra.mxu0 %v4030
        %4032 = vmatprep.subr.mxu0 0.0
        %v4033 = vand.u32 %v325, 4294901760
        %v4034 = vsub.f32 %v325, %v4033
        %v4035 = vand.u32 %v4034, 4294901760
        %v4036 = vsub.f32 %v4034, %v4035
        %v4037 = vand.u32 %v4036, 4294901760
        %4038 = vmatpush1.msra.mxu0 %v4037
        %4039 = vmatprep.subr.mxu0 0.0
        %v4040 = vand.u32 %v326, 4294901760
        %v4041 = vsub.f32 %v326, %v4040
        %v4042 = vand.u32 %v4041, 4294901760
        %v4043 = vsub.f32 %v4041, %v4042
        %v4044 = vand.u32 %v4043, 4294901760
        %4045 = vmatpush1.msra.mxu0 %v4044
        %4046 = vmatprep.subr.mxu0 0.0
        %v4047 = vand.u32 %v327, 4294901760
        %v4048 = vsub.f32 %v327, %v4047
        %v4049 = vand.u32 %v4048, 4294901760
        %v4050 = vsub.f32 %v4048, %v4049
        %v4051 = vand.u32 %v4050, 4294901760
        %4052 = vmatpush1.msra.mxu0 %v4051
        %4053 = vmatprep.subr.mxu0 0.0
        %v4054 = vand.u32 %v328, 4294901760
        %v4055 = vsub.f32 %v328, %v4054
        %v4056 = vand.u32 %v4055, 4294901760
        %v4057 = vsub.f32 %v4055, %v4056
        %v4058 = vand.u32 %v4057, 4294901760
        %4059 = vmatpush1.msra.mxu0 %v4058
        %4060 = vmatprep.subr.mxu0 0.0
        %v4061 = vand.u32 %v329, 4294901760
        %v4062 = vsub.f32 %v329, %v4061
        %v4063 = vand.u32 %v4062, 4294901760
        %v4064 = vsub.f32 %v4062, %v4063
        %v4065 = vand.u32 %v4064, 4294901760
        %4066 = vmatpush1.msra.mxu0 %v4065
        %4067 = vmatprep.subr.mxu0 0.0
        %v4068 = vand.u32 %v330, 4294901760
        %v4069 = vsub.f32 %v330, %v4068
        %v4070 = vand.u32 %v4069, 4294901760
        %v4071 = vsub.f32 %v4069, %v4070
        %v4072 = vand.u32 %v4071, 4294901760
        %4073 = vmatpush1.msra.mxu0 %v4072
        %4074 = vmatprep.subr.mxu0 0.0
        %v4075 = vand.u32 %v331, 4294901760
        %v4076 = vsub.f32 %v331, %v4075
        %v4077 = vand.u32 %v4076, 4294901760
        %v4078 = vsub.f32 %v4076, %v4077
        %v4079 = vand.u32 %v4078, 4294901760
        %4080 = vmatpush1.msra.mxu0 %v4079
        %4081 = vmatprep.subr.mxu0 0.0
        %v4082 = vand.u32 %v332, 4294901760
        %v4083 = vsub.f32 %v332, %v4082
        %v4084 = vand.u32 %v4083, 4294901760
        %v4085 = vsub.f32 %v4083, %v4084
        %v4086 = vand.u32 %v4085, 4294901760
        %4087 = vmatpush1.msra.mxu0 %v4086
        %4088 = vmatprep.subr.mxu0 0.0
        %v4089 = vand.u32 %v333, 4294901760
        %v4090 = vsub.f32 %v333, %v4089
        %v4091 = vand.u32 %v4090, 4294901760
        %v4092 = vsub.f32 %v4090, %v4091
        %v4093 = vand.u32 %v4092, 4294901760
        %4094 = vmatpush1.msra.mxu0 %v4093
        %4095 = vmatprep.subr.mxu0 0.0
        %v4096 = vand.u32 %v334, 4294901760
        %v4097 = vsub.f32 %v334, %v4096
        %v4098 = vand.u32 %v4097, 4294901760
        %v4099 = vsub.f32 %v4097, %v4098
        %v4100 = vand.u32 %v4099, 4294901760
        %4101 = vmatpush1.msra.mxu0 %v4100
        %4102 = vmatprep.subr.mxu0 0.0
        %v4103 = vand.u32 %v335, 4294901760
        %v4104 = vsub.f32 %v335, %v4103
        %v4105 = vand.u32 %v4104, 4294901760
        %v4106 = vsub.f32 %v4104, %v4105
        %v4107 = vand.u32 %v4106, 4294901760
        %4108 = vmatpush1.msra.mxu0 %v4107
        %4109 = vmatprep.subr.mxu0 0.0
        %v4110 = vand.u32 %v336, 4294901760
        %v4111 = vsub.f32 %v336, %v4110
        %v4112 = vand.u32 %v4111, 4294901760
        %v4113 = vsub.f32 %v4111, %v4112
        %v4114 = vand.u32 %v4113, 4294901760
        %4115 = vmatpush1.msra.mxu0 %v4114
        %4116 = vmatprep.subr.mxu0 0.0
        %v4117 = vand.u32 %v337, 4294901760
        %v4118 = vsub.f32 %v337, %v4117
        %v4119 = vand.u32 %v4118, 4294901760
        %v4120 = vsub.f32 %v4118, %v4119
        %v4121 = vand.u32 %v4120, 4294901760
        %4122 = vmatpush1.msra.mxu0 %v4121
        %4123 = vmatprep.subr.mxu0 0.0
        %v4124 = vand.u32 %v338, 4294901760
        %v4125 = vsub.f32 %v338, %v4124
        %v4126 = vand.u32 %v4125, 4294901760
        %v4127 = vsub.f32 %v4125, %v4126
        %v4128 = vand.u32 %v4127, 4294901760
        %4129 = vmatpush1.msra.mxu0 %v4128
        %v4130 = vand.u32 %v178, 4294901760
        %4131 = vmatprep.mubr.f32.mxu0 %v4130
        %v4132 = vand.u32 %v177, 4294901760
        %4133 = vmatmul.mubr.f32.gmra.mrb[0].mxu0 %v4132
        %v4134 = vpop.f32.mrb[0].mxu0
        %v4135 = vadd.f32 %v3903, %v4134
        %v4136 = vpop.f32.mrb[0].mxu0
        %4137 = vdwg.mxu0
        %4138 = vmatprep.subr.mxu0 0.0
        %v4139 = vand.u32 %v307, 4294901760
        %v4140 = vsub.f32 %v307, %v4139
        %4141 = vmatpush1.msra.mxu0 %v4140
        %4142 = vmatprep.subr.mxu0 0.0
        %v4143 = vand.u32 %v308, 4294901760
        %v4144 = vsub.f32 %v308, %v4143
        %4145 = vmatpush1.msra.mxu0 %v4144
        %4146 = vmatprep.subr.mxu0 0.0
        %v4147 = vand.u32 %v309, 4294901760
        %v4148 = vsub.f32 %v309, %v4147
        %4149 = vmatpush1.msra.mxu0 %v4148
        %4150 = vmatprep.subr.mxu0 0.0
        %v4151 = vand.u32 %v310, 4294901760
        %v4152 = vsub.f32 %v310, %v4151
        %4153 = vmatpush1.msra.mxu0 %v4152
        %4154 = vmatprep.subr.mxu0 0.0
        %v4155 = vand.u32 %v311, 4294901760
        %v4156 = vsub.f32 %v311, %v4155
        %4157 = vmatpush1.msra.mxu0 %v4156
        %4158 = vmatprep.subr.mxu0 0.0
        %v4159 = vand.u32 %v312, 4294901760
        %v4160 = vsub.f32 %v312, %v4159
        %4161 = vmatpush1.msra.mxu0 %v4160
        %4162 = vmatprep.subr.mxu0 0.0
        %v4163 = vand.u32 %v313, 4294901760
        %v4164 = vsub.f32 %v313, %v4163
        %4165 = vmatpush1.msra.mxu0 %v4164
        %4166 = vmatprep.subr.mxu0 0.0
        %v4167 = vand.u32 %v314, 4294901760
        %v4168 = vsub.f32 %v314, %v4167
        %4169 = vmatpush1.msra.mxu0 %v4168
        %4170 = vmatprep.subr.mxu0 0.0
        %v4171 = vand.u32 %v315, 4294901760
        %v4172 = vsub.f32 %v315, %v4171
        %4173 = vmatpush1.msra.mxu0 %v4172
        %4174 = vmatprep.subr.mxu0 0.0
        %v4175 = vand.u32 %v316, 4294901760
        %v4176 = vsub.f32 %v316, %v4175
        %4177 = vmatpush1.msra.mxu0 %v4176
        %4178 = vmatprep.subr.mxu0 0.0
        %v4179 = vand.u32 %v317, 4294901760
        %v4180 = vsub.f32 %v317, %v4179
        %4181 = vmatpush1.msra.mxu0 %v4180
        %4182 = vmatprep.subr.mxu0 0.0
        %v4183 = vand.u32 %v318, 4294901760
        %v4184 = vsub.f32 %v318, %v4183
        %4185 = vmatpush1.msra.mxu0 %v4184
        %4186 = vmatprep.subr.mxu0 0.0
        %v4187 = vand.u32 %v319, 4294901760
        %v4188 = vsub.f32 %v319, %v4187
        %4189 = vmatpush1.msra.mxu0 %v4188
        %4190 = vmatprep.subr.mxu0 0.0
        %v4191 = vand.u32 %v320, 4294901760
        %v4192 = vsub.f32 %v320, %v4191
        %4193 = vmatpush1.msra.mxu0 %v4192
        %4194 = vmatprep.subr.mxu0 0.0
        %v4195 = vand.u32 %v321, 4294901760
        %v4196 = vsub.f32 %v321, %v4195
        %4197 = vmatpush1.msra.mxu0 %v4196
        %4198 = vmatprep.subr.mxu0 0.0
        %v4199 = vand.u32 %v322, 4294901760
        %v4200 = vsub.f32 %v322, %v4199
        %4201 = vmatpush1.msra.mxu0 %v4200
        %4202 = vmatprep.subr.mxu0 0.0
        %v4203 = vand.u32 %v323, 4294901760
        %v4204 = vsub.f32 %v323, %v4203
        %4205 = vmatpush1.msra.mxu0 %v4204
        %4206 = vmatprep.subr.mxu0 0.0
        %v4207 = vand.u32 %v324, 4294901760
        %v4208 = vsub.f32 %v324, %v4207
        %4209 = vmatpush1.msra.mxu0 %v4208
        %4210 = vmatprep.subr.mxu0 0.0
        %v4211 = vand.u32 %v325, 4294901760
        %v4212 = vsub.f32 %v325, %v4211
        %4213 = vmatpush1.msra.mxu0 %v4212
        %4214 = vmatprep.subr.mxu0 0.0
        %v4215 = vand.u32 %v326, 4294901760
        %v4216 = vsub.f32 %v326, %v4215
        %4217 = vmatpush1.msra.mxu0 %v4216
        %4218 = vmatprep.subr.mxu0 0.0
        %v4219 = vand.u32 %v327, 4294901760
        %v4220 = vsub.f32 %v327, %v4219
        %4221 = vmatpush1.msra.mxu0 %v4220
        %4222 = vmatprep.subr.mxu0 0.0
        %v4223 = vand.u32 %v328, 4294901760
        %v4224 = vsub.f32 %v328, %v4223
        %4225 = vmatpush1.msra.mxu0 %v4224
        %4226 = vmatprep.subr.mxu0 0.0
        %v4227 = vand.u32 %v329, 4294901760
        %v4228 = vsub.f32 %v329, %v4227
        %4229 = vmatpush1.msra.mxu0 %v4228
        %4230 = vmatprep.subr.mxu0 0.0
        %v4231 = vand.u32 %v330, 4294901760
        %v4232 = vsub.f32 %v330, %v4231
        %4233 = vmatpush1.msra.mxu0 %v4232
        %4234 = vmatprep.subr.mxu0 0.0
        %v4235 = vand.u32 %v331, 4294901760
        %v4236 = vsub.f32 %v331, %v4235
        %4237 = vmatpush1.msra.mxu0 %v4236
        %4238 = vmatprep.subr.mxu0 0.0
        %v4239 = vand.u32 %v332, 4294901760
        %v4240 = vsub.f32 %v332, %v4239
        %4241 = vmatpush1.msra.mxu0 %v4240
        %4242 = vmatprep.subr.mxu0 0.0
        %v4243 = vand.u32 %v333, 4294901760
        %v4244 = vsub.f32 %v333, %v4243
        %4245 = vmatpush1.msra.mxu0 %v4244
        %4246 = vmatprep.subr.mxu0 0.0
        %v4247 = vand.u32 %v334, 4294901760
        %v4248 = vsub.f32 %v334, %v4247
        %4249 = vmatpush1.msra.mxu0 %v4248
        %4250 = vmatprep.subr.mxu0 0.0
        %v4251 = vand.u32 %v335, 4294901760
        %v4252 = vsub.f32 %v335, %v4251
        %4253 = vmatpush1.msra.mxu0 %v4252
        %4254 = vmatprep.subr.mxu0 0.0
        %v4255 = vand.u32 %v336, 4294901760
        %v4256 = vsub.f32 %v336, %v4255
        %4257 = vmatpush1.msra.mxu0 %v4256
        %4258 = vmatprep.subr.mxu0 0.0
        %v4259 = vand.u32 %v337, 4294901760
        %v4260 = vsub.f32 %v337, %v4259
        %4261 = vmatpush1.msra.mxu0 %v4260
        %4262 = vmatprep.subr.mxu0 0.0
        %v4263 = vand.u32 %v338, 4294901760
        %v4264 = vsub.f32 %v338, %v4263
        %4265 = vmatpush1.msra.mxu0 %v4264
        %v4266 = vand.u32 %v178, 4294901760
        %v4267 = vsub.f32 %v178, %v4266
        %4268 = vmatprep.mubr.f32.mxu0 %v4267
        %v4269 = vand.u32 %v177, 4294901760
        %v4270 = vsub.f32 %v177, %v4269
        %4271 = vmatmul.mubr.f32.gmra.mrb[0].mxu0 %v4270
        %v4272 = vpop.f32.mrb[0].mxu0
        %v4273 = vadd.f32 %v4135, %v4272
        %v4274 = vpop.f32.mrb[0].mxu0
        %4275 = vdwg.mxu0
        %4276 = vmatprep.subr.mxu0 0.0
        %v4277 = vand.u32 %v307, 4294901760
        %4278 = vmatpush1.msra.mxu0 %v4277
        %4279 = vmatprep.subr.mxu0 0.0
        %v4280 = vand.u32 %v308, 4294901760
        %4281 = vmatpush1.msra.mxu0 %v4280
        %4282 = vmatprep.subr.mxu0 0.0
        %v4283 = vand.u32 %v309, 4294901760
        %4284 = vmatpush1.msra.mxu0 %v4283
        %4285 = vmatprep.subr.mxu0 0.0
        %v4286 = vand.u32 %v310, 4294901760
        %4287 = vmatpush1.msra.mxu0 %v4286
        %4288 = vmatprep.subr.mxu0 0.0
        %v4289 = vand.u32 %v311, 4294901760
        %4290 = vmatpush1.msra.mxu0 %v4289
        %4291 = vmatprep.subr.mxu0 0.0
        %v4292 = vand.u32 %v312, 4294901760
        %4293 = vmatpush1.msra.mxu0 %v4292
        %4294 = vmatprep.subr.mxu0 0.0
        %v4295 = vand.u32 %v313, 4294901760
        %4296 = vmatpush1.msra.mxu0 %v4295
        %4297 = vmatprep.subr.mxu0 0.0
        %v4298 = vand.u32 %v314, 4294901760
        %4299 = vmatpush1.msra.mxu0 %v4298
        %4300 = vmatprep.subr.mxu0 0.0
        %v4301 = vand.u32 %v315, 4294901760
        %4302 = vmatpush1.msra.mxu0 %v4301
        %4303 = vmatprep.subr.mxu0 0.0
        %v4304 = vand.u32 %v316, 4294901760
        %4305 = vmatpush1.msra.mxu0 %v4304
        %4306 = vmatprep.subr.mxu0 0.0
        %v4307 = vand.u32 %v317, 4294901760
        %4308 = vmatpush1.msra.mxu0 %v4307
        %4309 = vmatprep.subr.mxu0 0.0
        %v4310 = vand.u32 %v318, 4294901760
        %4311 = vmatpush1.msra.mxu0 %v4310
        %4312 = vmatprep.subr.mxu0 0.0
        %v4313 = vand.u32 %v319, 4294901760
        %4314 = vmatpush1.msra.mxu0 %v4313
        %4315 = vmatprep.subr.mxu0 0.0
        %v4316 = vand.u32 %v320, 4294901760
        %4317 = vmatpush1.msra.mxu0 %v4316
        %4318 = vmatprep.subr.mxu0 0.0
        %v4319 = vand.u32 %v321, 4294901760
        %4320 = vmatpush1.msra.mxu0 %v4319
        %4321 = vmatprep.subr.mxu0 0.0
        %v4322 = vand.u32 %v322, 4294901760
        %4323 = vmatpush1.msra.mxu0 %v4322
        %4324 = vmatprep.subr.mxu0 0.0
        %v4325 = vand.u32 %v323, 4294901760
        %4326 = vmatpush1.msra.mxu0 %v4325
        %4327 = vmatprep.subr.mxu0 0.0
        %v4328 = vand.u32 %v324, 4294901760
        %4329 = vmatpush1.msra.mxu0 %v4328
        %4330 = vmatprep.subr.mxu0 0.0
        %v4331 = vand.u32 %v325, 4294901760
        %4332 = vmatpush1.msra.mxu0 %v4331
        %4333 = vmatprep.subr.mxu0 0.0
        %v4334 = vand.u32 %v326, 4294901760
        %4335 = vmatpush1.msra.mxu0 %v4334
        %4336 = vmatprep.subr.mxu0 0.0
        %v4337 = vand.u32 %v327, 4294901760
        %4338 = vmatpush1.msra.mxu0 %v4337
        %4339 = vmatprep.subr.mxu0 0.0
        %v4340 = vand.u32 %v328, 4294901760
        %4341 = vmatpush1.msra.mxu0 %v4340
        %4342 = vmatprep.subr.mxu0 0.0
        %v4343 = vand.u32 %v329, 4294901760
        %4344 = vmatpush1.msra.mxu0 %v4343
        %4345 = vmatprep.subr.mxu0 0.0
        %v4346 = vand.u32 %v330, 4294901760
        %4347 = vmatpush1.msra.mxu0 %v4346
        %4348 = vmatprep.subr.mxu0 0.0
        %v4349 = vand.u32 %v331, 4294901760
        %4350 = vmatpush1.msra.mxu0 %v4349
        %4351 = vmatprep.subr.mxu0 0.0
        %v4352 = vand.u32 %v332, 4294901760
        %4353 = vmatpush1.msra.mxu0 %v4352
        %4354 = vmatprep.subr.mxu0 0.0
        %v4355 = vand.u32 %v333, 4294901760
        %4356 = vmatpush1.msra.mxu0 %v4355
        %4357 = vmatprep.subr.mxu0 0.0
        %v4358 = vand.u32 %v334, 4294901760
        %4359 = vmatpush1.msra.mxu0 %v4358
        %4360 = vmatprep.subr.mxu0 0.0
        %v4361 = vand.u32 %v335, 4294901760
        %4362 = vmatpush1.msra.mxu0 %v4361
        %4363 = vmatprep.subr.mxu0 0.0
        %v4364 = vand.u32 %v336, 4294901760
        %4365 = vmatpush1.msra.mxu0 %v4364
        %4366 = vmatprep.subr.mxu0 0.0
        %v4367 = vand.u32 %v337, 4294901760
        %4368 = vmatpush1.msra.mxu0 %v4367
        %4369 = vmatprep.subr.mxu0 0.0
        %v4370 = vand.u32 %v338, 4294901760
        %4371 = vmatpush1.msra.mxu0 %v4370
        %v4372 = vand.u32 %v178, 4294901760
        %v4373 = vsub.f32 %v178, %v4372
        %v4374 = vand.u32 %v4373, 4294901760
        %4375 = vmatprep.mubr.f32.mxu0 %v4374
        %v4376 = vand.u32 %v177, 4294901760
        %v4377 = vsub.f32 %v177, %v4376
        %v4378 = vand.u32 %v4377, 4294901760
        %4379 = vmatmul.mubr.f32.gmra.mrb[0].mxu0 %v4378
        %v4380 = vpop.f32.mrb[0].mxu0
        %v4381 = vadd.f32 %v4273, %v4380
        %v4382 = vpop.f32.mrb[0].mxu0
        %4383 = vdwg.mxu0
        %4384 = vmatprep.subr.mxu0 0.0
        %v4385 = vand.u32 %v307, 4294901760
        %v4386 = vsub.f32 %v307, %v4385
        %v4387 = vand.u32 %v4386, 4294901760
        %4388 = vmatpush1.msra.mxu0 %v4387
        %4389 = vmatprep.subr.mxu0 0.0
        %v4390 = vand.u32 %v308, 4294901760
        %v4391 = vsub.f32 %v308, %v4390
        %v4392 = vand.u32 %v4391, 4294901760
        %4393 = vmatpush1.msra.mxu0 %v4392
        %4394 = vmatprep.subr.mxu0 0.0
        %v4395 = vand.u32 %v309, 4294901760
        %v4396 = vsub.f32 %v309, %v4395
        %v4397 = vand.u32 %v4396, 4294901760
        %4398 = vmatpush1.msra.mxu0 %v4397
        %4399 = vmatprep.subr.mxu0 0.0
        %v4400 = vand.u32 %v310, 4294901760
        %v4401 = vsub.f32 %v310, %v4400
        %v4402 = vand.u32 %v4401, 4294901760
        %4403 = vmatpush1.msra.mxu0 %v4402
        %4404 = vmatprep.subr.mxu0 0.0
        %v4405 = vand.u32 %v311, 4294901760
        %v4406 = vsub.f32 %v311, %v4405
        %v4407 = vand.u32 %v4406, 4294901760
        %4408 = vmatpush1.msra.mxu0 %v4407
        %4409 = vmatprep.subr.mxu0 0.0
        %v4410 = vand.u32 %v312, 4294901760
        %v4411 = vsub.f32 %v312, %v4410
        %v4412 = vand.u32 %v4411, 4294901760
        %4413 = vmatpush1.msra.mxu0 %v4412
        %4414 = vmatprep.subr.mxu0 0.0
        %v4415 = vand.u32 %v313, 4294901760
        %v4416 = vsub.f32 %v313, %v4415
        %v4417 = vand.u32 %v4416, 4294901760
        %4418 = vmatpush1.msra.mxu0 %v4417
        %4419 = vmatprep.subr.mxu0 0.0
        %v4420 = vand.u32 %v314, 4294901760
        %v4421 = vsub.f32 %v314, %v4420
        %v4422 = vand.u32 %v4421, 4294901760
        %4423 = vmatpush1.msra.mxu0 %v4422
        %4424 = vmatprep.subr.mxu0 0.0
        %v4425 = vand.u32 %v315, 4294901760
        %v4426 = vsub.f32 %v315, %v4425
        %v4427 = vand.u32 %v4426, 4294901760
        %4428 = vmatpush1.msra.mxu0 %v4427
        %4429 = vmatprep.subr.mxu0 0.0
        %v4430 = vand.u32 %v316, 4294901760
        %v4431 = vsub.f32 %v316, %v4430
        %v4432 = vand.u32 %v4431, 4294901760
        %4433 = vmatpush1.msra.mxu0 %v4432
        %4434 = vmatprep.subr.mxu0 0.0
        %v4435 = vand.u32 %v317, 4294901760
        %v4436 = vsub.f32 %v317, %v4435
        %v4437 = vand.u32 %v4436, 4294901760
        %4438 = vmatpush1.msra.mxu0 %v4437
        %4439 = vmatprep.subr.mxu0 0.0
        %v4440 = vand.u32 %v318, 4294901760
        %v4441 = vsub.f32 %v318, %v4440
        %v4442 = vand.u32 %v4441, 4294901760
        %4443 = vmatpush1.msra.mxu0 %v4442
        %4444 = vmatprep.subr.mxu0 0.0
        %v4445 = vand.u32 %v319, 4294901760
        %v4446 = vsub.f32 %v319, %v4445
        %v4447 = vand.u32 %v4446, 4294901760
        %4448 = vmatpush1.msra.mxu0 %v4447
        %4449 = vmatprep.subr.mxu0 0.0
        %v4450 = vand.u32 %v320, 4294901760
        %v4451 = vsub.f32 %v320, %v4450
        %v4452 = vand.u32 %v4451, 4294901760
        %4453 = vmatpush1.msra.mxu0 %v4452
        %4454 = vmatprep.subr.mxu0 0.0
        %v4455 = vand.u32 %v321, 4294901760
        %v4456 = vsub.f32 %v321, %v4455
        %v4457 = vand.u32 %v4456, 4294901760
        %4458 = vmatpush1.msra.mxu0 %v4457
        %4459 = vmatprep.subr.mxu0 0.0
        %v4460 = vand.u32 %v322, 4294901760
        %v4461 = vsub.f32 %v322, %v4460
        %v4462 = vand.u32 %v4461, 4294901760
        %4463 = vmatpush1.msra.mxu0 %v4462
        %4464 = vmatprep.subr.mxu0 0.0
        %v4465 = vand.u32 %v323, 4294901760
        %v4466 = vsub.f32 %v323, %v4465
        %v4467 = vand.u32 %v4466, 4294901760
        %4468 = vmatpush1.msra.mxu0 %v4467
        %4469 = vmatprep.subr.mxu0 0.0
        %v4470 = vand.u32 %v324, 4294901760
        %v4471 = vsub.f32 %v324, %v4470
        %v4472 = vand.u32 %v4471, 4294901760
        %4473 = vmatpush1.msra.mxu0 %v4472
        %4474 = vmatprep.subr.mxu0 0.0
        %v4475 = vand.u32 %v325, 4294901760
        %v4476 = vsub.f32 %v325, %v4475
        %v4477 = vand.u32 %v4476, 4294901760
        %4478 = vmatpush1.msra.mxu0 %v4477
        %4479 = vmatprep.subr.mxu0 0.0
        %v4480 = vand.u32 %v326, 4294901760
        %v4481 = vsub.f32 %v326, %v4480
        %v4482 = vand.u32 %v4481, 4294901760
        %4483 = vmatpush1.msra.mxu0 %v4482
        %4484 = vmatprep.subr.mxu0 0.0
        %v4485 = vand.u32 %v327, 4294901760
        %v4486 = vsub.f32 %v327, %v4485
        %v4487 = vand.u32 %v4486, 4294901760
        %4488 = vmatpush1.msra.mxu0 %v4487
        %4489 = vmatprep.subr.mxu0 0.0
        %v4490 = vand.u32 %v328, 4294901760
        %v4491 = vsub.f32 %v328, %v4490
        %v4492 = vand.u32 %v4491, 4294901760
        %4493 = vmatpush1.msra.mxu0 %v4492
        %4494 = vmatprep.subr.mxu0 0.0
        %v4495 = vand.u32 %v329, 4294901760
        %v4496 = vsub.f32 %v329, %v4495
        %v4497 = vand.u32 %v4496, 4294901760
        %4498 = vmatpush1.msra.mxu0 %v4497
        %4499 = vmatprep.subr.mxu0 0.0
        %v4500 = vand.u32 %v330, 4294901760
        %v4501 = vsub.f32 %v330, %v4500
        %v4502 = vand.u32 %v4501, 4294901760
        %4503 = vmatpush1.msra.mxu0 %v4502
        %4504 = vmatprep.subr.mxu0 0.0
        %v4505 = vand.u32 %v331, 4294901760
        %v4506 = vsub.f32 %v331, %v4505
        %v4507 = vand.u32 %v4506, 4294901760
        %4508 = vmatpush1.msra.mxu0 %v4507
        %4509 = vmatprep.subr.mxu0 0.0
        %v4510 = vand.u32 %v332, 4294901760
        %v4511 = vsub.f32 %v332, %v4510
        %v4512 = vand.u32 %v4511, 4294901760
        %4513 = vmatpush1.msra.mxu0 %v4512
        %4514 = vmatprep.subr.mxu0 0.0
        %v4515 = vand.u32 %v333, 4294901760
        %v4516 = vsub.f32 %v333, %v4515
        %v4517 = vand.u32 %v4516, 4294901760
        %4518 = vmatpush1.msra.mxu0 %v4517
        %4519 = vmatprep.subr.mxu0 0.0
        %v4520 = vand.u32 %v334, 4294901760
        %v4521 = vsub.f32 %v334, %v4520
        %v4522 = vand.u32 %v4521, 4294901760
        %4523 = vmatpush1.msra.mxu0 %v4522
        %4524 = vmatprep.subr.mxu0 0.0
        %v4525 = vand.u32 %v335, 4294901760
        %v4526 = vsub.f32 %v335, %v4525
        %v4527 = vand.u32 %v4526, 4294901760
        %4528 = vmatpush1.msra.mxu0 %v4527
        %4529 = vmatprep.subr.mxu0 0.0
        %v4530 = vand.u32 %v336, 4294901760
        %v4531 = vsub.f32 %v336, %v4530
        %v4532 = vand.u32 %v4531, 4294901760
        %4533 = vmatpush1.msra.mxu0 %v4532
        %4534 = vmatprep.subr.mxu0 0.0
        %v4535 = vand.u32 %v337, 4294901760
        %v4536 = vsub.f32 %v337, %v4535
        %v4537 = vand.u32 %v4536, 4294901760
        %4538 = vmatpush1.msra.mxu0 %v4537
        %4539 = vmatprep.subr.mxu0 0.0
        %v4540 = vand.u32 %v338, 4294901760
        %v4541 = vsub.f32 %v338, %v4540
        %v4542 = vand.u32 %v4541, 4294901760
        %4543 = vmatpush1.msra.mxu0 %v4542
        %v4544 = vand.u32 %v178, 4294901760
        %4545 = vmatprep.mubr.f32.mxu0 %v4544
        %v4546 = vand.u32 %v177, 4294901760
        %4547 = vmatmul.mubr.f32.gmra.mrb[0].mxu0 %v4546
        %v4548 = vpop.f32.mrb[0].mxu0
        %v4549 = vadd.f32 %v4381, %v4548
        %v4550 = vpop.f32.mrb[0].mxu0
        %4551 = vdwg.mxu0
        %4552 = vmatprep.subr.mxu0 0.0
        %v4553 = vand.u32 %v307, 4294901760
        %4554 = vmatpush1.msra.mxu0 %v4553
        %4555 = vmatprep.subr.mxu0 0.0
        %v4556 = vand.u32 %v308, 4294901760
        %4557 = vmatpush1.msra.mxu0 %v4556
        %4558 = vmatprep.subr.mxu0 0.0
        %v4559 = vand.u32 %v309, 4294901760
        %4560 = vmatpush1.msra.mxu0 %v4559
        %4561 = vmatprep.subr.mxu0 0.0
        %v4562 = vand.u32 %v310, 4294901760
        %4563 = vmatpush1.msra.mxu0 %v4562
        %4564 = vmatprep.subr.mxu0 0.0
        %v4565 = vand.u32 %v311, 4294901760
        %4566 = vmatpush1.msra.mxu0 %v4565
        %4567 = vmatprep.subr.mxu0 0.0
        %v4568 = vand.u32 %v312, 4294901760
        %4569 = vmatpush1.msra.mxu0 %v4568
        %4570 = vmatprep.subr.mxu0 0.0
        %v4571 = vand.u32 %v313, 4294901760
        %4572 = vmatpush1.msra.mxu0 %v4571
        %4573 = vmatprep.subr.mxu0 0.0
        %v4574 = vand.u32 %v314, 4294901760
        %4575 = vmatpush1.msra.mxu0 %v4574
        %4576 = vmatprep.subr.mxu0 0.0
        %v4577 = vand.u32 %v315, 4294901760
        %4578 = vmatpush1.msra.mxu0 %v4577
        %4579 = vmatprep.subr.mxu0 0.0
        %v4580 = vand.u32 %v316, 4294901760
        %4581 = vmatpush1.msra.mxu0 %v4580
        %4582 = vmatprep.subr.mxu0 0.0
        %v4583 = vand.u32 %v317, 4294901760
        %4584 = vmatpush1.msra.mxu0 %v4583
        %4585 = vmatprep.subr.mxu0 0.0
        %v4586 = vand.u32 %v318, 4294901760
        %4587 = vmatpush1.msra.mxu0 %v4586
        %4588 = vmatprep.subr.mxu0 0.0
        %v4589 = vand.u32 %v319, 4294901760
        %4590 = vmatpush1.msra.mxu0 %v4589
        %4591 = vmatprep.subr.mxu0 0.0
        %v4592 = vand.u32 %v320, 4294901760
        %4593 = vmatpush1.msra.mxu0 %v4592
        %4594 = vmatprep.subr.mxu0 0.0
        %v4595 = vand.u32 %v321, 4294901760
        %4596 = vmatpush1.msra.mxu0 %v4595
        %4597 = vmatprep.subr.mxu0 0.0
        %v4598 = vand.u32 %v322, 4294901760
        %4599 = vmatpush1.msra.mxu0 %v4598
        %4600 = vmatprep.subr.mxu0 0.0
        %v4601 = vand.u32 %v323, 4294901760
        %4602 = vmatpush1.msra.mxu0 %v4601
        %4603 = vmatprep.subr.mxu0 0.0
        %v4604 = vand.u32 %v324, 4294901760
        %4605 = vmatpush1.msra.mxu0 %v4604
        %4606 = vmatprep.subr.mxu0 0.0
        %v4607 = vand.u32 %v325, 4294901760
        %4608 = vmatpush1.msra.mxu0 %v4607
        %4609 = vmatprep.subr.mxu0 0.0
        %v4610 = vand.u32 %v326, 4294901760
        %4611 = vmatpush1.msra.mxu0 %v4610
        %4612 = vmatprep.subr.mxu0 0.0
        %v4613 = vand.u32 %v327, 4294901760
        %4614 = vmatpush1.msra.mxu0 %v4613
        %4615 = vmatprep.subr.mxu0 0.0
        %v4616 = vand.u32 %v328, 4294901760
        %4617 = vmatpush1.msra.mxu0 %v4616
        %4618 = vmatprep.subr.mxu0 0.0
        %v4619 = vand.u32 %v329, 4294901760
        %4620 = vmatpush1.msra.mxu0 %v4619
        %4621 = vmatprep.subr.mxu0 0.0
        %v4622 = vand.u32 %v330, 4294901760
        %4623 = vmatpush1.msra.mxu0 %v4622
        %4624 = vmatprep.subr.mxu0 0.0
        %v4625 = vand.u32 %v331, 4294901760
        %4626 = vmatpush1.msra.mxu0 %v4625
        %4627 = vmatprep.subr.mxu0 0.0
        %v4628 = vand.u32 %v332, 4294901760
        %4629 = vmatpush1.msra.mxu0 %v4628
        %4630 = vmatprep.subr.mxu0 0.0
        %v4631 = vand.u32 %v333, 4294901760
        %4632 = vmatpush1.msra.mxu0 %v4631
        %4633 = vmatprep.subr.mxu0 0.0
        %v4634 = vand.u32 %v334, 4294901760
        %4635 = vmatpush1.msra.mxu0 %v4634
        %4636 = vmatprep.subr.mxu0 0.0
        %v4637 = vand.u32 %v335, 4294901760
        %4638 = vmatpush1.msra.mxu0 %v4637
        %4639 = vmatprep.subr.mxu0 0.0
        %v4640 = vand.u32 %v336, 4294901760
        %4641 = vmatpush1.msra.mxu0 %v4640
        %4642 = vmatprep.subr.mxu0 0.0
        %v4643 = vand.u32 %v337, 4294901760
        %4644 = vmatpush1.msra.mxu0 %v4643
        %4645 = vmatprep.subr.mxu0 0.0
        %v4646 = vand.u32 %v338, 4294901760
        %4647 = vmatpush1.msra.mxu0 %v4646
        %v4648 = vand.u32 %v178, 4294901760
        %4649 = vmatprep.mubr.f32.mxu0 %v4648
        %v4650 = vand.u32 %v177, 4294901760
        %4651 = vmatmul.mubr.f32.gmra.mrb[0].mxu0 %v4650
        %v4652 = vpop.f32.mrb[0].mxu0
        %v4653 = vadd.f32 %v4549, %v4652
        %v4654 = vpop.f32.mrb[0].mxu0
        %4655 = vdwg.mxu0
        %vm4656 = vcmask 326656
        %4657 = vst.msk [vmem:[%s163] sm:$0xff] %vm4656, %v4653
        %s4658 = sand.u32 %s93, 1
        %s4659 = scalar_lea.sflag [#allocation3], %s4658
        %s4660 = sand.u32 %s93, 1
        %s4661 = smul.addr %s4660, 8
        %s4662 = scalar_lea.vmem [#allocation2], %s4661
        // Predicated region
        $region33: #{tpu_custom_call.1} parent=31 // pred_check
          %p4663 = pneg %p103
        $region34: #{tpu_custom_call.1} parent=31 // pred_check_branch
          %4665 = sbr.rel (%p4663) target = $region36
        $region35: #{tpu_custom_call.1} parent=31 // pred_region
          %s4667 = ssub.s32 128, 128
          %4668 = vsyncadd %s4659, %s4667
          %s4669 = smul.addr %s17, 128
          %s4670 = scalar_lea.hbm %s3, %s4669
          %s4672 = sshll.u32 %s4662, 4
          %s4673 = int_to_ptr.vmem [resolvable:$true] %s4672
          %4675 = dma.vmem_to_hbm [thread:$0]  %s4673, 128, %s4670, %s4659
        $region36: #{tpu_custom_call.1} parent=31 // pred_fallthru
          _
      $region32: #{tpu_custom_call.1} parent=5 // pred_fallthru
        _
      %p4676 = scmp.le.s32.totalorder 2, %s12
      // Predicated region
      $region37: #{tpu_custom_call.1} parent=5 // pred_check
        %p4677 = pneg %p4676
      $region38: #{tpu_custom_call.1} parent=5 // pred_check_branch
        %4679 = sbr.rel (%p4677) target = $region40
      $region39: #{tpu_custom_call.1} parent=5 // pred_region
        %s4680 = ssub.s32 %s12, 2
        // Predicated region
        $region41: #{tpu_custom_call.1} parent=39 // pred_check
          %p4681 = pneg %p109
        $region42: #{tpu_custom_call.1} parent=39 // pred_check_branch
          %4683 = sbr.rel (%p4681) target = $region44
        $region43: #{tpu_custom_call.1} parent=39 // pred_region
          %s4684 = sand.u32 %s94, 1
          %s4685 = scalar_lea.sflag [#allocation3], %s4684
          %s4686 = sand.u32 %s94, 1
          %s4687 = smul.addr %s4686, 8
          %s4688 = scalar_lea.vmem [#allocation2], %s4687
          %4689 = dma.done %s4685, 128
        $region44: #{tpu_custom_call.1} parent=39 // pred_fallthru
          _
      $region40: #{tpu_custom_call.1} parent=5 // pred_fallthru
        _
    $region6: #{tpu_custom_call.1} parent=1 // loop_footer
      %s16 = sadd.s32 1, %s12
    $region7: #{tpu_custom_call.1} parent=1 // loop_footer_branch
      %11 = sbr.rel target = $region3
    $region8: #{tpu_custom_call.1} parent=1 // loop_exit
      _
    %4690 = vsyncpa [#allocation3], 1
    %s4691 = scalar_lea.sflag [#allocation3], 1
    %4692 = vsyncpa %s4691, 1

</llo_original>
